<compile_context>
chip_gen: v7x
topology: tpu7x:2x2x1
jax: 0.10.0
libtpu: 0.0.40
codegen_flags: <defaults>
</compile_context>

<pallas_src>
import functools

import jax
import jax.numpy as jnp
from jax.experimental import pallas as pl
from jax.experimental.pallas import tpu as pltpu

CIN = 320    # Block35 input/output channels
C1 = 96      # fused-1x1 output channels == padded Cin of both 3x3 convs
CA = 80      # merged 3x3 "A" output channels (branch1b:32 ++ branch2b:48)
CC = 64      # 3x3 "C" (branch2c) output channels
_OFF = 8     # sublane-aligned column offset of the conv interior inside the scratch


# -----------------------------------------------------------------------------
# Fused Block35 kernel: one grid step = one image.
#   branch0:   1x1(320->32)+BN+ReLU
#   branch1:   1x1(320->32)+BN+ReLU -> 3x3(32->32,p1)+BN+ReLU
#   branch2:   1x1(320->32)+BN+ReLU -> 3x3(32->48,p1)+BN+ReLU -> 3x3(48->64,p1)+BN+ReLU
#   concat(128) -> 1x1(128->320,bias) -> *scale + residual -> ReLU
# BN and `scale` are pre-folded into the weights/biases; the concat is realised via
# zero-row-padded output weights instead of a lane concat.
# -----------------------------------------------------------------------------
def _block35_kernel(x_ref,
                    w1_ref, b1_ref,        # fused 1x1:   (320,96) bf16, (1,96) f32
                    wA_ref, bA_ref,        # merged 3x3:  (9,96,80) bf16, (1,80) f32
                    wC_ref, bC_ref,        # branch2c 3x3:(9,96,64) bf16, (1,64) f32
                    wo1_ref, wo2_ref, wo3_ref, bo_ref,  # final 1x1 split, bf16 / f32
                    o_ref,
                    pad_ref,               # bf16 halo scratch (H+2, _OFF+W+8, 96)
                    *, H, W):
    M = H * W
    WP = _OFF + W + 8
    x = x_ref[0]                                        # (M, 320) f32 (residual)
    x_bf = x.astype(jnp.bfloat16)

    # ---- zero everything in the scratch that is NOT the interior (cheap, aligned
    # rectangles; keeps correctness under any grid->core split on v7x). ----------
    zrow = jnp.zeros((1, WP, C1), jnp.bfloat16)
    zcol = jnp.zeros((H + 2, _OFF, C1), jnp.bfloat16)
    pad_ref[0:1, :, :] = zrow                           # top halo row
    pad_ref[H + 1:H + 2, :, :] = zrow                   # bottom halo row
    pad_ref[:, 0:_OFF, :] = zcol                        # left halo columns
    pad_ref[:, _OFF + W:_OFF + W + 8, :] = zcol         # right halo columns

    # ---- fused 1x1 convs (branch1a | branch2a | branch0), bf16 x bf16 -> f32 ----
    y96 = jnp.dot(x_bf, w1_ref[...], preferred_element_type=jnp.float32)
    y96 = jnp.maximum(y96 + b1_ref[0], 0.0)             # (M, 96) f32
    y96_bf = y96.astype(jnp.bfloat16)

    def conv3x3_bias_relu(w_ref, b_ref):
        # 9 accumulated K=96 matmuls on sublane-shifted taps of the halo scratch
        # (no im2col lane concat).  Channel selection is done by zero weight rows.
        acc = None
        for dy in range(3):
            for dx in range(3):
                tap = pad_ref[dy:dy + H, _OFF - 1 + dx:_OFF - 1 + dx + W, :]
                tap = tap.reshape(M, C1)                # free: W % 8 == 0
                y = jnp.dot(tap, w_ref[dy * 3 + dx],
                            preferred_element_type=jnp.float32)
                acc = y if acc is None else acc + y
        return jnp.maximum(acc + b_ref[0], 0.0)

    # ---- merged 3x3 "A": branch1b (32->32) ++ branch2b (32->48), block-diagonal -
    pad_ref[1:H + 1, _OFF:_OFF + W, :] = y96_bf.reshape(H, W, C1)
    yA = conv3x3_bias_relu(wA_ref, bA_ref)              # (M, 80): [x1 | x2b]
    yA_bf = yA.astype(jnp.bfloat16)

    # ---- 3x3 "C": branch2c (48->64); input = yA[:, 32:80] via zero weight rows.
    # Channels 80:95 of the scratch keep stale y96 values -> zero rows in wC. ----
    pad_ref[1:H + 1, _OFF:_OFF + W, 0:CA] = yA_bf.reshape(H, W, CA)
    x2 = conv3x3_bias_relu(wC_ref, bC_ref)              # (M, 64)
    x2_bf = x2.astype(jnp.bfloat16)

    # ---- final 1x1 (scale folded) + residual + ReLU, no 128-lane concat:
    # three accumulated matmuls whose weights have zero rows for unused channels. -
    out = jnp.dot(y96_bf, wo1_ref[...], preferred_element_type=jnp.float32)
    out = out + jnp.dot(yA_bf, wo2_ref[...], preferred_element_type=jnp.float32)
    out = out + jnp.dot(x2_bf, wo3_ref[...], preferred_element_type=jnp.float32)
    out = jnp.maximum(out + bo_ref[0] + x, 0.0)
    o_ref[0] = out.astype(o_ref.dtype)


# -----------------------------------------------------------------------------
# Wrapper: NCHW in / NCHW out (matches the PyTorch module interface).
# -----------------------------------------------------------------------------
def block35_forward(x_nchw, kp):
    N, C, H, W = x_nchw.shape
    assert C == CIN
    # Sublane-aligned W keeps every in-kernel (H,W,C) <-> (H*W,C) reshape free.
    # TODO(synk): pad W 35->40 once at the network level for the real feature map.
    assert W % 8 == 0, "pad W to a multiple of 8 before calling the kernel"

    x = jnp.transpose(x_nchw, (0, 2, 3, 1)).reshape(N, H * W, CIN)  # NHWC, flat

    def const_spec(a):
        return pl.BlockSpec(a.shape, lambda n, _z=(0,) * a.ndim: _z)

    names = ["w1", "b1", "wA", "bA", "wC", "bC", "wo1", "wo2", "wo3", "bo"]
    weights = [kp[k] for k in names]

    out = pl.pallas_call(
        functools.partial(_block35_kernel, H=H, W=W),
        out_shape=jax.ShapeDtypeStruct((N, H * W, CIN), jnp.float32),
        grid_spec=pltpu.PrefetchScalarGridSpec(
            num_scalar_prefetch=0,
            grid=(N,),
            in_specs=[pl.BlockSpec((1, H * W, CIN), lambda n: (n, 0, 0))]
                     + [const_spec(w) for w in weights],
            out_specs=pl.BlockSpec((1, H * W, CIN), lambda n: (n, 0, 0)),
            scratch_shapes=[pltpu.VMEM((H + 2, _OFF + W + 8, C1), jnp.bfloat16)],
        ),
        compiler_params=pltpu.CompilerParams(
            # Batch axis is parallel: feeds both TensorCores on v7x when N >= 2.
            dimension_semantics=("parallel",),
            # Headroom for the f32 in/out blocks + bf16 live set (v5e default 16 MiB).
            vmem_limit_bytes=32 * 1024 * 1024,
        ),
    )(x, *weights)
    return jnp.transpose(out.reshape(N, H, W, CIN), (0, 3, 1, 2))   # back to NCHW


# -----------------------------------------------------------------------------
# Parameter construction (deterministic, synthetic) + BN / scale folding
# -----------------------------------------------------------------------------
def _init_basic_conv(key, cin, cout, ksize):
    k = jax.random.split(key, 5)
    if ksize == 1:
        w = 0.05 * jax.random.normal(k[0], (cin, cout), jnp.float32)
    else:
        w = 0.05 * jax.random.normal(k[0], (ksize, ksize, cin, cout), jnp.float32)
    return {
        "w": w,
        "gamma": 1.0 + 0.1 * jax.random.normal(k[1], (cout,), jnp.float32),
        "beta": 0.1 * jax.random.normal(k[2], (cout,), jnp.float32),
        "mean": 0.1 * jax.random.normal(k[3], (cout,), jnp.float32),
        "var": jax.random.uniform(k[4], (cout,), jnp.float32, 0.5, 1.5),
    }


def init_block35_params(key):
    ks = jax.random.split(key, 8)
    return {
        "b0": _init_basic_conv(ks[0], 320, 32, 1),
        "b1a": _init_basic_conv(ks[1], 320, 32, 1),
        "b1b": _init_basic_conv(ks[2], 32, 32, 3),
        "b2a": _init_basic_conv(ks[3], 320, 32, 1),
        "b2b": _init_basic_conv(ks[4], 32, 48, 3),
        "b2c": _init_basic_conv(ks[5], 48, 64, 3),
        "w_out": 0.05 * jax.random.normal(ks[6], (128, 320), jnp.float32),
        "bias_out": 0.1 * jax.random.normal(ks[7], (320,), jnp.float32),
    }


def _fold_bn(p, eps=1e-3):
    s = p["gamma"] / jnp.sqrt(p["var"] + eps)
    b = p["beta"] - p["mean"] * s
    return s, b


def pack_block35_params(params, scale):
    """Fold BN + `scale` into the conv weights, build the merged / zero-row-padded
    weight matrices, and cast matmul operands to bf16.  One-time transform."""
    def fold1x1(p):
        s, b = _fold_bn(p)
        return p["w"] * s[None, :], b                            # (cin,cout), (cout,)

    def fold3x3(p):
        s, b = _fold_bn(p)
        return p["w"] * s[None, None, None, :], b                # (3,3,cin,cout)

    w0, b0 = fold1x1(params["b0"])       # 320->32  (branch0)
    w1a, b1a = fold1x1(params["b1a"])    # 320->32  (branch1a)
    w2a, b2a = fold1x1(params["b2a"])    # 320->32  (branch2a)
    w1b, b1b = fold3x3(params["b1b"])    # 3x3 32->32
    w2b, b2b = fold3x3(params["b2b"])    # 3x3 32->48
    w2c, b2c = fold3x3(params["b2c"])    # 3x3 48->64

    # Fused 1x1, output channel order [x1a | x2a | x0] so the 3x3 inputs occupy a
    # lane-aligned prefix of y96 (no slicing in the kernel).
    w1 = jnp.concatenate([w1a, w2a, w0], axis=1)                 # (320, 96)
    b1 = jnp.concatenate([b1a, b2a, b0])

    # Merged 3x3 "A": block-diagonal over the 96-channel scratch:
    #   in  0:32 (x1a) -> out  0:32 via w1b,  in 32:64 (x2a) -> out 32:80 via w2b,
    #   in 64:96 (x0, unused) -> zero rows.
    wA = jnp.zeros((3, 3, C1, CA), jnp.float32)
    wA = wA.at[:, :, 0:32, 0:32].set(w1b)
    wA = wA.at[:, :, 32:64, 32:CA].set(w2b)
    bA = jnp.concatenate([b1b, b2b])                             # (80,)

    # 3x3 "C" (branch2c): input lives in yA channels 32:80; zero rows elsewhere
    # (rows 80:96 also cover the stale y96 channels left in the scratch).
    wC = jnp.zeros((3, 3, C1, CC), jnp.float32)
    wC = wC.at[:, :, 32:CA, :].set(w2c)
    bC = b2c

    # Final 1x1 (scale folded) split into three zero-row-padded matrices so the
    # kernel skips the 128-lane concat.  w_out rows: 0:32 x0, 32:64 x1, 64:128 x2.
    wo = params["w_out"] * scale                                 # (128, 320)
    wo1 = jnp.zeros((C1, CIN), jnp.float32).at[64:96, :].set(wo[0:32, :])   # * y96
    wo2 = jnp.zeros((CA, CIN), jnp.float32).at[0:32, :].set(wo[32:64, :])   # * yA
    wo3 = wo[64:128, :]                                                     # * x2
    bo = params["bias_out"] * scale

    bf16 = lambda a: a.astype(jnp.bfloat16)
    return {
        "w1": bf16(w1), "b1": b1.reshape(1, C1),
        "wA": bf16(wA.reshape(9, C1, CA)), "bA": bA.reshape(1, CA),
        "wC": bf16(wC.reshape(9, C1, CC)), "bC": bC.reshape(1, CC),
        "wo1": bf16(wo1), "wo2": bf16(wo2), "wo3": bf16(wo3),
        "bo": bo.reshape(1, CIN),
    }


# -----------------------------------------------------------------------------
# Pure-JAX reference (unfolded f32 math) for correctness check
# -----------------------------------------------------------------------------
def block35_reference(x_nchw, params, scale):
    x = jnp.transpose(x_nchw, (0, 2, 3, 1))

    def bcr1(h, p):
        s, b = _fold_bn(p)
        y = jnp.einsum("nhwc,co->nhwo", h, p["w"])
        return jax.nn.relu(y * s + b)

    def bcr3(h, p):
        s, b = _fold_bn(p)
        y = jax.lax.conv_general_dilated(
            h, p["w"], (1, 1), "SAME",
            dimension_numbers=("NHWC", "HWIO", "NHWC"))
        return jax.nn.relu(y * s + b)

    p = params
    x0 = bcr1(x, p["b0"])
    x1 = bcr3(bcr1(x, p["b1a"]), p["b1b"])
    x2 = bcr3(bcr3(bcr1(x, p["b2a"]), p["b2b"]), p["b2c"])
    cat = jnp.concatenate([x0, x1, x2], axis=-1)
    out = jnp.einsum("nhwc,co->nhwo", cat, p["w_out"]) + p["bias_out"]
    out = jax.nn.relu(out * scale + x)
    return jnp.transpose(out, (0, 3, 1, 2))


if __name__ == "__main__":
    key = jax.random.PRNGKey(0)
    k_x, k_p = jax.random.split(key)

    N, C, H, W = 2, 320, 8, 8          # input channels fixed (320) by Block35
    x = jax.random.normal(k_x, (N, C, H, W), jnp.float32)
    params = init_block35_params(k_p)
    scale = 0.17
    kp = pack_block35_params(params, scale)

    fwd = jax.jit(block35_forward)
    out = jax.block_until_ready(fwd(x, kp))
    ref = jax.block_until_ready(block35_reference(x, params, scale))

    assert out.shape == (N, C, H, W)
    max_err = float(jnp.max(jnp.abs(out - ref)))
    # bf16 MXU operands with f32 accumulation -> relax from the f32 1e-3 tolerance.
    assert jnp.allclose(out, ref, atol=5e-2, rtol=5e-2), max_err

    print("KERNEL_OK")
</pallas_src>

<mosaic_0001>
module attributes {stable_mosaic.version = 11 : i64} {
  func.func @_block35_kernel(%arg0: i32, %arg1: memref<1x64x320xf32, #tpu.memory_space<vmem>>, %arg2: memref<320x96xbf16, #tpu.memory_space<vmem>>, %arg3: memref<1x96xf32, #tpu.memory_space<vmem>>, %arg4: memref<9x96x80xbf16, #tpu.memory_space<vmem>>, %arg5: memref<1x80xf32, #tpu.memory_space<vmem>>, %arg6: memref<9x96x64xbf16, #tpu.memory_space<vmem>>, %arg7: memref<1x64xf32, #tpu.memory_space<vmem>>, %arg8: memref<96x320xbf16, #tpu.memory_space<vmem>>, %arg9: memref<80x320xbf16, #tpu.memory_space<vmem>>, %arg10: memref<64x320xbf16, #tpu.memory_space<vmem>>, %arg11: memref<1x320xf32, #tpu.memory_space<vmem>>, %arg12: memref<1x64x320xf32, #tpu.memory_space<vmem>>, %arg13: memref<10x24x96xbf16, #tpu.memory_space<vmem>>) attributes {dimension_semantics = [#tpu.dimension_semantics<parallel>], iteration_bounds = array<i64: 2>, scalar_prefetch = 0 : i64, scratch_operands = 1 : i64, tpu.core_type = #tpu.core_type<tc>, window_params = [{transform_indices = @transform_0, window_bounds = array<i64: 1, 64, 320>}, {pipeline_mode = #tpu.pipeline_mode<synchronous>, transform_indices = @transform_1, window_bounds = array<i64: 320, 96>}, {pipeline_mode = #tpu.pipeline_mode<synchronous>, transform_indices = @transform_2, window_bounds = array<i64: 1, 96>}, {pipeline_mode = #tpu.pipeline_mode<synchronous>, transform_indices = @transform_3, window_bounds = array<i64: 9, 96, 80>}, {pipeline_mode = #tpu.pipeline_mode<synchronous>, transform_indices = @transform_4, window_bounds = array<i64: 1, 80>}, {pipeline_mode = #tpu.pipeline_mode<synchronous>, transform_indices = @transform_5, window_bounds = array<i64: 9, 96, 64>}, {pipeline_mode = #tpu.pipeline_mode<synchronous>, transform_indices = @transform_6, window_bounds = array<i64: 1, 64>}, {pipeline_mode = #tpu.pipeline_mode<synchronous>, transform_indices = @transform_7, window_bounds = array<i64: 96, 320>}, {pipeline_mode = #tpu.pipeline_mode<synchronous>, transform_indices = @transform_8, window_bounds = array<i64: 80, 320>}, {pipeline_mode = #tpu.pipeline_mode<synchronous>, transform_indices = @transform_9, window_bounds = array<i64: 64, 320>}, {pipeline_mode = #tpu.pipeline_mode<synchronous>, transform_indices = @transform_10, window_bounds = array<i64: 1, 320>}, {transform_indices = @transform_11, window_bounds = array<i64: 1, 64, 320>}]} {
    %c0 = arith.constant 0 : index
    %c0_0 = arith.constant 0 : index
    %c0_1 = arith.constant 0 : index
    %0 = vector.load %arg1[%c0, %c0_0, %c0_1] : memref<1x64x320xf32, #tpu.memory_space<vmem>>, vector<1x64x320xf32>
    %1 = vector.shape_cast %0 : vector<1x64x320xf32> to vector<64x320xf32>
    %2 = arith.truncf %1 : vector<64x320xf32> to vector<64x320xbf16>
    %cst = arith.constant 0.000000e+00 : bf16
    %3 = vector.broadcast %cst : bf16 to vector<1x24x96xbf16>
    %cst_2 = arith.constant 0.000000e+00 : bf16
    %4 = vector.broadcast %cst_2 : bf16 to vector<10x8x96xbf16>
    %c0_3 = arith.constant 0 : index
    %c0_4 = arith.constant 0 : index
    %c0_5 = arith.constant 0 : index
    %5 = vector.load %arg13[%c0_3, %c0_4, %c0_5] : memref<10x24x96xbf16, #tpu.memory_space<vmem>>, vector<1x24x96xbf16>
    tpu.vector_store %arg13[%c0_3, %c0_4, %c0_5], %3 {strides = array<i32>} : memref<10x24x96xbf16, #tpu.memory_space<vmem>>, vector<1x24x96xbf16>,
    %c9 = arith.constant 9 : index
    %c0_6 = arith.constant 0 : index
    %c0_7 = arith.constant 0 : index
    %6 = vector.load %arg13[%c9, %c0_6, %c0_7] : memref<10x24x96xbf16, #tpu.memory_space<vmem>>, vector<1x24x96xbf16>
    tpu.vector_store %arg13[%c9, %c0_6, %c0_7], %3 {strides = array<i32>} : memref<10x24x96xbf16, #tpu.memory_space<vmem>>, vector<1x24x96xbf16>,
    %c0_8 = arith.constant 0 : index
    %c0_9 = arith.constant 0 : index
    %c0_10 = arith.constant 0 : index
    %7 = vector.load %arg13[%c0_8, %c0_9, %c0_10] : memref<10x24x96xbf16, #tpu.memory_space<vmem>>, vector<10x8x96xbf16>
    tpu.vector_store %arg13[%c0_8, %c0_9, %c0_10], %4 {strides = array<i32>} : memref<10x24x96xbf16, #tpu.memory_space<vmem>>, vector<10x8x96xbf16>,
    %c0_11 = arith.constant 0 : index
    %c16 = arith.constant 16 : index
    %c0_12 = arith.constant 0 : index
    %8 = vector.load %arg13[%c0_11, %c16, %c0_12] : memref<10x24x96xbf16, #tpu.memory_space<vmem>>, vector<10x8x96xbf16>
    tpu.vector_store %arg13[%c0_11, %c16, %c0_12], %4 {strides = array<i32>} : memref<10x24x96xbf16, #tpu.memory_space<vmem>>, vector<10x8x96xbf16>,
    %c0_13 = arith.constant 0 : index
    %c0_14 = arith.constant 0 : index
    %9 = vector.load %arg2[%c0_13, %c0_14] : memref<320x96xbf16, #tpu.memory_space<vmem>>, vector<320x96xbf16>
    %cst_15 = arith.constant dense<0.000000e+00> : vector<64x96xf32>
    %10 = tpu.matmul %2, %9, %cst_15 {dimension_numbers = #tpu.dot_dimension_numbers<[1], [0], [0], [1], [0, 0, 1, 1], [], []>} : vector<64x320xbf16>, vector<320x96xbf16>, vector<64x96xf32> -> vector<64x96xf32>
    %c0_16 = arith.constant 0 : index
    %c0_17 = arith.constant 0 : index
    %11 = vector.load %arg3[%c0_16, %c0_17] : memref<1x96xf32, #tpu.memory_space<vmem>>, vector<1x96xf32>
    %12 = vector.shape_cast %11 : vector<1x96xf32> to vector<96xf32>
    %13 = vector.shape_cast %12 : vector<96xf32> to vector<1x96xf32>
    %14 = vector.broadcast %13 : vector<1x96xf32> to vector<64x96xf32>
    %15 = arith.addf %10, %14 : vector<64x96xf32>
    %cst_18 = arith.constant 0.000000e+00 : f32
    %16 = vector.broadcast %cst_18 : f32 to vector<64x96xf32>
    %17 = arith.maximumf %15, %16 : vector<64x96xf32>
    %18 = arith.truncf %17 : vector<64x96xf32> to vector<64x96xbf16>
    %19 = vector.shape_cast %18 : vector<64x96xbf16> to vector<8x8x96xbf16>
    %c1 = arith.constant 1 : index
    %c8 = arith.constant 8 : index
    %c0_19 = arith.constant 0 : index
    %20 = vector.load %arg13[%c1, %c8, %c0_19] : memref<10x24x96xbf16, #tpu.memory_space<vmem>>, vector<8x8x96xbf16>
    tpu.vector_store %arg13[%c1, %c8, %c0_19], %19 {strides = array<i32>} : memref<10x24x96xbf16, #tpu.memory_space<vmem>>, vector<8x8x96xbf16>,
    %c0_20 = arith.constant 0 : index
    %c7 = arith.constant 7 : index
    %c0_21 = arith.constant 0 : index
    %21 = vector.load %arg13[%c0_20, %c7, %c0_21] : memref<10x24x96xbf16, #tpu.memory_space<vmem>>, vector<8x8x96xbf16>
    %22 = vector.shape_cast %21 : vector<8x8x96xbf16> to vector<64x96xbf16>
    %c0_22 = arith.constant 0 : index
    %c0_23 = arith.constant 0 : index
    %c0_24 = arith.constant 0 : index
    %23 = vector.load %arg4[%c0_22, %c0_23, %c0_24] : memref<9x96x80xbf16, #tpu.memory_space<vmem>>, vector<1x96x80xbf16>
    %24 = vector.shape_cast %23 : vector<1x96x80xbf16> to vector<96x80xbf16>
    %cst_25 = arith.constant dense<0.000000e+00> : vector<64x80xf32>
    %25 = tpu.matmul %22, %24, %cst_25 {dimension_numbers = #tpu.dot_dimension_numbers<[1], [0], [0], [1], [0, 0, 1, 1], [], []>} : vector<64x96xbf16>, vector<96x80xbf16>, vector<64x80xf32> -> vector<64x80xf32>
    %c0_26 = arith.constant 0 : index
    %c8_27 = arith.constant 8 : index
    %c0_28 = arith.constant 0 : index
    %26 = vector.load %arg13[%c0_26, %c8_27, %c0_28] : memref<10x24x96xbf16, #tpu.memory_space<vmem>>, vector<8x8x96xbf16>
    %27 = vector.shape_cast %26 : vector<8x8x96xbf16> to vector<64x96xbf16>
    %c1_29 = arith.constant 1 : index
    %c0_30 = arith.constant 0 : index
    %c0_31 = arith.constant 0 : index
    %28 = vector.load %arg4[%c1_29, %c0_30, %c0_31] : memref<9x96x80xbf16, #tpu.memory_space<vmem>>, vector<1x96x80xbf16>
    %29 = vector.shape_cast %28 : vector<1x96x80xbf16> to vector<96x80xbf16>
    %cst_32 = arith.constant dense<0.000000e+00> : vector<64x80xf32>
    %30 = tpu.matmul %27, %29, %cst_32 {dimension_numbers = #tpu.dot_dimension_numbers<[1], [0], [0], [1], [0, 0, 1, 1], [], []>} : vector<64x96xbf16>, vector<96x80xbf16>, vector<64x80xf32> -> vector<64x80xf32>
    %31 = arith.addf %25, %30 : vector<64x80xf32>
    %c0_33 = arith.constant 0 : index
    %c9_34 = arith.constant 9 : index
    %c0_35 = arith.constant 0 : index
    %32 = vector.load %arg13[%c0_33, %c9_34, %c0_35] : memref<10x24x96xbf16, #tpu.memory_space<vmem>>, vector<8x8x96xbf16>
    %33 = vector.shape_cast %32 : vector<8x8x96xbf16> to vector<64x96xbf16>
    %c2 = arith.constant 2 : index
    %c0_36 = arith.constant 0 : index
    %c0_37 = arith.constant 0 : index
    %34 = vector.load %arg4[%c2, %c0_36, %c0_37] : memref<9x96x80xbf16, #tpu.memory_space<vmem>>, vector<1x96x80xbf16>
    %35 = vector.shape_cast %34 : vector<1x96x80xbf16> to vector<96x80xbf16>
    %cst_38 = arith.constant dense<0.000000e+00> : vector<64x80xf32>
    %36 = tpu.matmul %33, %35, %cst_38 {dimension_numbers = #tpu.dot_dimension_numbers<[1], [0], [0], [1], [0, 0, 1, 1], [], []>} : vector<64x96xbf16>, vector<96x80xbf16>, vector<64x80xf32> -> vector<64x80xf32>
    %37 = arith.addf %31, %36 : vector<64x80xf32>
    %c1_39 = arith.constant 1 : index
    %c7_40 = arith.constant 7 : index
    %c0_41 = arith.constant 0 : index
    %38 = vector.load %arg13[%c1_39, %c7_40, %c0_41] : memref<10x24x96xbf16, #tpu.memory_space<vmem>>, vector<8x8x96xbf16>
    %39 = vector.shape_cast %38 : vector<8x8x96xbf16> to vector<64x96xbf16>
    %c3 = arith.constant 3 : index
    %c0_42 = arith.constant 0 : index
    %c0_43 = arith.constant 0 : index
    %40 = vector.load %arg4[%c3, %c0_42, %c0_43] : memref<9x96x80xbf16, #tpu.memory_space<vmem>>, vector<1x96x80xbf16>
    %41 = vector.shape_cast %40 : vector<1x96x80xbf16> to vector<96x80xbf16>
    %cst_44 = arith.constant dense<0.000000e+00> : vector<64x80xf32>
    %42 = tpu.matmul %39, %41, %cst_44 {dimension_numbers = #tpu.dot_dimension_numbers<[1], [0], [0], [1], [0, 0, 1, 1], [], []>} : vector<64x96xbf16>, vector<96x80xbf16>, vector<64x80xf32> -> vector<64x80xf32>
    %43 = arith.addf %37, %42 : vector<64x80xf32>
    %c1_45 = arith.constant 1 : index
    %c8_46 = arith.constant 8 : index
    %c0_47 = arith.constant 0 : index
    %44 = vector.load %arg13[%c1_45, %c8_46, %c0_47] : memref<10x24x96xbf16, #tpu.memory_space<vmem>>, vector<8x8x96xbf16>
    %45 = vector.shape_cast %44 : vector<8x8x96xbf16> to vector<64x96xbf16>
    %c4 = arith.constant 4 : index
    %c0_48 = arith.constant 0 : index
    %c0_49 = arith.constant 0 : index
    %46 = vector.load %arg4[%c4, %c0_48, %c0_49] : memref<9x96x80xbf16, #tpu.memory_space<vmem>>, vector<1x96x80xbf16>
    %47 = vector.shape_cast %46 : vector<1x96x80xbf16> to vector<96x80xbf16>
    %cst_50 = arith.constant dense<0.000000e+00> : vector<64x80xf32>
    %48 = tpu.matmul %45, %47, %cst_50 {dimension_numbers = #tpu.dot_dimension_numbers<[1], [0], [0], [1], [0, 0, 1, 1], [], []>} : vector<64x96xbf16>, vector<96x80xbf16>, vector<64x80xf32> -> vector<64x80xf32>
    %49 = arith.addf %43, %48 : vector<64x80xf32>
    %c1_51 = arith.constant 1 : index
    %c9_52 = arith.constant 9 : index
    %c0_53 = arith.constant 0 : index
    %50 = vector.load %arg13[%c1_51, %c9_52, %c0_53] : memref<10x24x96xbf16, #tpu.memory_space<vmem>>, vector<8x8x96xbf16>
    %51 = vector.shape_cast %50 : vector<8x8x96xbf16> to vector<64x96xbf16>
    %c5 = arith.constant 5 : index
    %c0_54 = arith.constant 0 : index
    %c0_55 = arith.constant 0 : index
    %52 = vector.load %arg4[%c5, %c0_54, %c0_55] : memref<9x96x80xbf16, #tpu.memory_space<vmem>>, vector<1x96x80xbf16>
    %53 = vector.shape_cast %52 : vector<1x96x80xbf16> to vector<96x80xbf16>
    %cst_56 = arith.constant dense<0.000000e+00> : vector<64x80xf32>
    %54 = tpu.matmul %51, %53, %cst_56 {dimension_numbers = #tpu.dot_dimension_numbers<[1], [0], [0], [1], [0, 0, 1, 1], [], []>} : vector<64x96xbf16>, vector<96x80xbf16>, vector<64x80xf32> -> vector<64x80xf32>
    %55 = arith.addf %49, %54 : vector<64x80xf32>
    %c2_57 = arith.constant 2 : index
    %c7_58 = arith.constant 7 : index
    %c0_59 = arith.constant 0 : index
    %56 = vector.load %arg13[%c2_57, %c7_58, %c0_59] : memref<10x24x96xbf16, #tpu.memory_space<vmem>>, vector<8x8x96xbf16>
    %57 = vector.shape_cast %56 : vector<8x8x96xbf16> to vector<64x96xbf16>
    %c6 = arith.constant 6 : index
    %c0_60 = arith.constant 0 : index
    %c0_61 = arith.constant 0 : index
    %58 = vector.load %arg4[%c6, %c0_60, %c0_61] : memref<9x96x80xbf16, #tpu.memory_space<vmem>>, vector<1x96x80xbf16>
    %59 = vector.shape_cast %58 : vector<1x96x80xbf16> to vector<96x80xbf16>
    %cst_62 = arith.constant dense<0.000000e+00> : vector<64x80xf32>
    %60 = tpu.matmul %57, %59, %cst_62 {dimension_numbers = #tpu.dot_dimension_numbers<[1], [0], [0], [1], [0, 0, 1, 1], [], []>} : vector<64x96xbf16>, vector<96x80xbf16>, vector<64x80xf32> -> vector<64x80xf32>
    %61 = arith.addf %55, %60 : vector<64x80xf32>
    %c2_63 = arith.constant 2 : index
    %c8_64 = arith.constant 8 : index
    %c0_65 = arith.constant 0 : index
    %62 = vector.load %arg13[%c2_63, %c8_64, %c0_65] : memref<10x24x96xbf16, #tpu.memory_space<vmem>>, vector<8x8x96xbf16>
    %63 = vector.shape_cast %62 : vector<8x8x96xbf16> to vector<64x96xbf16>
    %c7_66 = arith.constant 7 : index
    %c0_67 = arith.constant 0 : index
    %c0_68 = arith.constant 0 : index
    %64 = vector.load %arg4[%c7_66, %c0_67, %c0_68] : memref<9x96x80xbf16, #tpu.memory_space<vmem>>, vector<1x96x80xbf16>
    %65 = vector.shape_cast %64 : vector<1x96x80xbf16> to vector<96x80xbf16>
    %cst_69 = arith.constant dense<0.000000e+00> : vector<64x80xf32>
    %66 = tpu.matmul %63, %65, %cst_69 {dimension_numbers = #tpu.dot_dimension_numbers<[1], [0], [0], [1], [0, 0, 1, 1], [], []>} : vector<64x96xbf16>, vector<96x80xbf16>, vector<64x80xf32> -> vector<64x80xf32>
    %67 = arith.addf %61, %66 : vector<64x80xf32>
    %c2_70 = arith.constant 2 : index
    %c9_71 = arith.constant 9 : index
    %c0_72 = arith.constant 0 : index
    %68 = vector.load %arg13[%c2_70, %c9_71, %c0_72] : memref<10x24x96xbf16, #tpu.memory_space<vmem>>, vector<8x8x96xbf16>
    %69 = vector.shape_cast %68 : vector<8x8x96xbf16> to vector<64x96xbf16>
    %c8_73 = arith.constant 8 : index
    %c0_74 = arith.constant 0 : index
    %c0_75 = arith.constant 0 : index
    %70 = vector.load %arg4[%c8_73, %c0_74, %c0_75] : memref<9x96x80xbf16, #tpu.memory_space<vmem>>, vector<1x96x80xbf16>
    %71 = vector.shape_cast %70 : vector<1x96x80xbf16> to vector<96x80xbf16>
    %cst_76 = arith.constant dense<0.000000e+00> : vector<64x80xf32>
    %72 = tpu.matmul %69, %71, %cst_76 {dimension_numbers = #tpu.dot_dimension_numbers<[1], [0], [0], [1], [0, 0, 1, 1], [], []>} : vector<64x96xbf16>, vector<96x80xbf16>, vector<64x80xf32> -> vector<64x80xf32>
    %73 = arith.addf %67, %72 : vector<64x80xf32>
    %c0_77 = arith.constant 0 : index
    %c0_78 = arith.constant 0 : index
    %74 = vector.load %arg5[%c0_77, %c0_78] : memref<1x80xf32, #tpu.memory_space<vmem>>, vector<1x80xf32>
    %75 = vector.shape_cast %74 : vector<1x80xf32> to vector<80xf32>
    %76 = vector.shape_cast %75 : vector<80xf32> to vector<1x80xf32>
    %77 = vector.broadcast %76 : vector<1x80xf32> to vector<64x80xf32>
    %78 = arith.addf %73, %77 : vector<64x80xf32>
    %cst_79 = arith.constant 0.000000e+00 : f32
    %79 = vector.broadcast %cst_79 : f32 to vector<64x80xf32>
    %80 = arith.maximumf %78, %79 : vector<64x80xf32>
    %81 = arith.truncf %80 : vector<64x80xf32> to vector<64x80xbf16>
    %82 = vector.shape_cast %81 : vector<64x80xbf16> to vector<8x8x80xbf16>
    %c1_80 = arith.constant 1 : index
    %c8_81 = arith.constant 8 : index
    %c0_82 = arith.constant 0 : index
    %83 = vector.load %arg13[%c1_80, %c8_81, %c0_82] : memref<10x24x96xbf16, #tpu.memory_space<vmem>>, vector<8x8x80xbf16>
    tpu.vector_store %arg13[%c1_80, %c8_81, %c0_82], %82 {strides = array<i32>} : memref<10x24x96xbf16, #tpu.memory_space<vmem>>, vector<8x8x80xbf16>,
    %c0_83 = arith.constant 0 : index
    %c7_84 = arith.constant 7 : index
    %c0_85 = arith.constant 0 : index
    %84 = vector.load %arg13[%c0_83, %c7_84, %c0_85] : memref<10x24x96xbf16, #tpu.memory_space<vmem>>, vector<8x8x96xbf16>
    %85 = vector.shape_cast %84 : vector<8x8x96xbf16> to vector<64x96xbf16>
    %c0_86 = arith.constant 0 : index
    %c0_87 = arith.constant 0 : index
    %c0_88 = arith.constant 0 : index
    %86 = vector.load %arg6[%c0_86, %c0_87, %c0_88] : memref<9x96x64xbf16, #tpu.memory_space<vmem>>, vector<1x96x64xbf16>
    %87 = vector.shape_cast %86 : vector<1x96x64xbf16> to vector<96x64xbf16>
    %cst_89 = arith.constant dense<0.000000e+00> : vector<64x64xf32>
    %88 = tpu.matmul %85, %87, %cst_89 {dimension_numbers = #tpu.dot_dimension_numbers<[1], [0], [0], [1], [0, 0, 1, 1], [], []>} : vector<64x96xbf16>, vector<96x64xbf16>, vector<64x64xf32> -> vector<64x64xf32>
    %c0_90 = arith.constant 0 : index
    %c8_91 = arith.constant 8 : index
    %c0_92 = arith.constant 0 : index
    %89 = vector.load %arg13[%c0_90, %c8_91, %c0_92] : memref<10x24x96xbf16, #tpu.memory_space<vmem>>, vector<8x8x96xbf16>
    %90 = vector.shape_cast %89 : vector<8x8x96xbf16> to vector<64x96xbf16>
    %c1_93 = arith.constant 1 : index
    %c0_94 = arith.constant 0 : index
    %c0_95 = arith.constant 0 : index
    %91 = vector.load %arg6[%c1_93, %c0_94, %c0_95] : memref<9x96x64xbf16, #tpu.memory_space<vmem>>, vector<1x96x64xbf16>
    %92 = vector.shape_cast %91 : vector<1x96x64xbf16> to vector<96x64xbf16>
    %cst_96 = arith.constant dense<0.000000e+00> : vector<64x64xf32>
    %93 = tpu.matmul %90, %92, %cst_96 {dimension_numbers = #tpu.dot_dimension_numbers<[1], [0], [0], [1], [0, 0, 1, 1], [], []>} : vector<64x96xbf16>, vector<96x64xbf16>, vector<64x64xf32> -> vector<64x64xf32>
    %94 = arith.addf %88, %93 : vector<64x64xf32>
    %c0_97 = arith.constant 0 : index
    %c9_98 = arith.constant 9 : index
    %c0_99 = arith.constant 0 : index
    %95 = vector.load %arg13[%c0_97, %c9_98, %c0_99] : memref<10x24x96xbf16, #tpu.memory_space<vmem>>, vector<8x8x96xbf16>
    %96 = vector.shape_cast %95 : vector<8x8x96xbf16> to vector<64x96xbf16>
    %c2_100 = arith.constant 2 : index
    %c0_101 = arith.constant 0 : index
    %c0_102 = arith.constant 0 : index
    %97 = vector.load %arg6[%c2_100, %c0_101, %c0_102] : memref<9x96x64xbf16, #tpu.memory_space<vmem>>, vector<1x96x64xbf16>
    %98 = vector.shape_cast %97 : vector<1x96x64xbf16> to vector<96x64xbf16>
    %cst_103 = arith.constant dense<0.000000e+00> : vector<64x64xf32>
    %99 = tpu.matmul %96, %98, %cst_103 {dimension_numbers = #tpu.dot_dimension_numbers<[1], [0], [0], [1], [0, 0, 1, 1], [], []>} : vector<64x96xbf16>, vector<96x64xbf16>, vector<64x64xf32> -> vector<64x64xf32>
    %100 = arith.addf %94, %99 : vector<64x64xf32>
    %c1_104 = arith.constant 1 : index
    %c7_105 = arith.constant 7 : index
    %c0_106 = arith.constant 0 : index
    %101 = vector.load %arg13[%c1_104, %c7_105, %c0_106] : memref<10x24x96xbf16, #tpu.memory_space<vmem>>, vector<8x8x96xbf16>
    %102 = vector.shape_cast %101 : vector<8x8x96xbf16> to vector<64x96xbf16>
    %c3_107 = arith.constant 3 : index
    %c0_108 = arith.constant 0 : index
    %c0_109 = arith.constant 0 : index
    %103 = vector.load %arg6[%c3_107, %c0_108, %c0_109] : memref<9x96x64xbf16, #tpu.memory_space<vmem>>, vector<1x96x64xbf16>
    %104 = vector.shape_cast %103 : vector<1x96x64xbf16> to vector<96x64xbf16>
    %cst_110 = arith.constant dense<0.000000e+00> : vector<64x64xf32>
    %105 = tpu.matmul %102, %104, %cst_110 {dimension_numbers = #tpu.dot_dimension_numbers<[1], [0], [0], [1], [0, 0, 1, 1], [], []>} : vector<64x96xbf16>, vector<96x64xbf16>, vector<64x64xf32> -> vector<64x64xf32>
    %106 = arith.addf %100, %105 : vector<64x64xf32>
    %c1_111 = arith.constant 1 : index
    %c8_112 = arith.constant 8 : index
    %c0_113 = arith.constant 0 : index
    %107 = vector.load %arg13[%c1_111, %c8_112, %c0_113] : memref<10x24x96xbf16, #tpu.memory_space<vmem>>, vector<8x8x96xbf16>
    %108 = vector.shape_cast %107 : vector<8x8x96xbf16> to vector<64x96xbf16>
    %c4_114 = arith.constant 4 : index
    %c0_115 = arith.constant 0 : index
    %c0_116 = arith.constant 0 : index
    %109 = vector.load %arg6[%c4_114, %c0_115, %c0_116] : memref<9x96x64xbf16, #tpu.memory_space<vmem>>, vector<1x96x64xbf16>
    %110 = vector.shape_cast %109 : vector<1x96x64xbf16> to vector<96x64xbf16>
    %cst_117 = arith.constant dense<0.000000e+00> : vector<64x64xf32>
    %111 = tpu.matmul %108, %110, %cst_117 {dimension_numbers = #tpu.dot_dimension_numbers<[1], [0], [0], [1], [0, 0, 1, 1], [], []>} : vector<64x96xbf16>, vector<96x64xbf16>, vector<64x64xf32> -> vector<64x64xf32>
    %112 = arith.addf %106, %111 : vector<64x64xf32>
    %c1_118 = arith.constant 1 : index
    %c9_119 = arith.constant 9 : index
    %c0_120 = arith.constant 0 : index
    %113 = vector.load %arg13[%c1_118, %c9_119, %c0_120] : memref<10x24x96xbf16, #tpu.memory_space<vmem>>, vector<8x8x96xbf16>
    %114 = vector.shape_cast %113 : vector<8x8x96xbf16> to vector<64x96xbf16>
    %c5_121 = arith.constant 5 : index
    %c0_122 = arith.constant 0 : index
    %c0_123 = arith.constant 0 : index
    %115 = vector.load %arg6[%c5_121, %c0_122, %c0_123] : memref<9x96x64xbf16, #tpu.memory_space<vmem>>, vector<1x96x64xbf16>
    %116 = vector.shape_cast %115 : vector<1x96x64xbf16> to vector<96x64xbf16>
    %cst_124 = arith.constant dense<0.000000e+00> : vector<64x64xf32>
    %117 = tpu.matmul %114, %116, %cst_124 {dimension_numbers = #tpu.dot_dimension_numbers<[1], [0], [0], [1], [0, 0, 1, 1], [], []>} : vector<64x96xbf16>, vector<96x64xbf16>, vector<64x64xf32> -> vector<64x64xf32>
    %118 = arith.addf %112, %117 : vector<64x64xf32>
    %c2_125 = arith.constant 2 : index
    %c7_126 = arith.constant 7 : index
    %c0_127 = arith.constant 0 : index
    %119 = vector.load %arg13[%c2_125, %c7_126, %c0_127] : memref<10x24x96xbf16, #tpu.memory_space<vmem>>, vector<8x8x96xbf16>
    %120 = vector.shape_cast %119 : vector<8x8x96xbf16> to vector<64x96xbf16>
    %c6_128 = arith.constant 6 : index
    %c0_129 = arith.constant 0 : index
    %c0_130 = arith.constant 0 : index
    %121 = vector.load %arg6[%c6_128, %c0_129, %c0_130] : memref<9x96x64xbf16, #tpu.memory_space<vmem>>, vector<1x96x64xbf16>
    %122 = vector.shape_cast %121 : vector<1x96x64xbf16> to vector<96x64xbf16>
    %cst_131 = arith.constant dense<0.000000e+00> : vector<64x64xf32>
    %123 = tpu.matmul %120, %122, %cst_131 {dimension_numbers = #tpu.dot_dimension_numbers<[1], [0], [0], [1], [0, 0, 1, 1], [], []>} : vector<64x96xbf16>, vector<96x64xbf16>, vector<64x64xf32> -> vector<64x64xf32>
    %124 = arith.addf %118, %123 : vector<64x64xf32>
    %c2_132 = arith.constant 2 : index
    %c8_133 = arith.constant 8 : index
    %c0_134 = arith.constant 0 : index
    %125 = vector.load %arg13[%c2_132, %c8_133, %c0_134] : memref<10x24x96xbf16, #tpu.memory_space<vmem>>, vector<8x8x96xbf16>
    %126 = vector.shape_cast %125 : vector<8x8x96xbf16> to vector<64x96xbf16>
    %c7_135 = arith.constant 7 : index
    %c0_136 = arith.constant 0 : index
    %c0_137 = arith.constant 0 : index
    %127 = vector.load %arg6[%c7_135, %c0_136, %c0_137] : memref<9x96x64xbf16, #tpu.memory_space<vmem>>, vector<1x96x64xbf16>
    %128 = vector.shape_cast %127 : vector<1x96x64xbf16> to vector<96x64xbf16>
    %cst_138 = arith.constant dense<0.000000e+00> : vector<64x64xf32>
    %129 = tpu.matmul %126, %128, %cst_138 {dimension_numbers = #tpu.dot_dimension_numbers<[1], [0], [0], [1], [0, 0, 1, 1], [], []>} : vector<64x96xbf16>, vector<96x64xbf16>, vector<64x64xf32> -> vector<64x64xf32>
    %130 = arith.addf %124, %129 : vector<64x64xf32>
    %c2_139 = arith.constant 2 : index
    %c9_140 = arith.constant 9 : index
    %c0_141 = arith.constant 0 : index
    %131 = vector.load %arg13[%c2_139, %c9_140, %c0_141] : memref<10x24x96xbf16, #tpu.memory_space<vmem>>, vector<8x8x96xbf16>
    %132 = vector.shape_cast %131 : vector<8x8x96xbf16> to vector<64x96xbf16>
    %c8_142 = arith.constant 8 : index
    %c0_143 = arith.constant 0 : index
    %c0_144 = arith.constant 0 : index
    %133 = vector.load %arg6[%c8_142, %c0_143, %c0_144] : memref<9x96x64xbf16, #tpu.memory_space<vmem>>, vector<1x96x64xbf16>
    %134 = vector.shape_cast %133 : vector<1x96x64xbf16> to vector<96x64xbf16>
    %cst_145 = arith.constant dense<0.000000e+00> : vector<64x64xf32>
    %135 = tpu.matmul %132, %134, %cst_145 {dimension_numbers = #tpu.dot_dimension_numbers<[1], [0], [0], [1], [0, 0, 1, 1], [], []>} : vector<64x96xbf16>, vector<96x64xbf16>, vector<64x64xf32> -> vector<64x64xf32>
    %136 = arith.addf %130, %135 : vector<64x64xf32>
    %c0_146 = arith.constant 0 : index
    %c0_147 = arith.constant 0 : index
    %137 = vector.load %arg7[%c0_146, %c0_147] : memref<1x64xf32, #tpu.memory_space<vmem>>, vector<1x64xf32>
    %138 = vector.shape_cast %137 : vector<1x64xf32> to vector<64xf32>
    %139 = vector.shape_cast %138 : vector<64xf32> to vector<1x64xf32>
    %140 = vector.broadcast %139 : vector<1x64xf32> to vector<64x64xf32>
    %141 = arith.addf %136, %140 : vector<64x64xf32>
    %cst_148 = arith.constant 0.000000e+00 : f32
    %142 = vector.broadcast %cst_148 : f32 to vector<64x64xf32>
    %143 = arith.maximumf %141, %142 : vector<64x64xf32>
    %144 = arith.truncf %143 : vector<64x64xf32> to vector<64x64xbf16>
    %c0_149 = arith.constant 0 : index
    %c0_150 = arith.constant 0 : index
    %145 = vector.load %arg8[%c0_149, %c0_150] : memref<96x320xbf16, #tpu.memory_space<vmem>>, vector<96x320xbf16>
    %cst_151 = arith.constant dense<0.000000e+00> : vector<64x320xf32>
    %146 = tpu.matmul %18, %145, %cst_151 {dimension_numbers = #tpu.dot_dimension_numbers<[1], [0], [0], [1], [0, 0, 1, 1], [], []>} : vector<64x96xbf16>, vector<96x320xbf16>, vector<64x320xf32> -> vector<64x320xf32>
    %c0_152 = arith.constant 0 : index
    %c0_153 = arith.constant 0 : index
    %147 = vector.load %arg9[%c0_152, %c0_153] : memref<80x320xbf16, #tpu.memory_space<vmem>>, vector<80x320xbf16>
    %cst_154 = arith.constant dense<0.000000e+00> : vector<64x320xf32>
    %148 = tpu.matmul %81, %147, %cst_154 {dimension_numbers = #tpu.dot_dimension_numbers<[1], [0], [0], [1], [0, 0, 1, 1], [], []>} : vector<64x80xbf16>, vector<80x320xbf16>, vector<64x320xf32> -> vector<64x320xf32>
    %149 = arith.addf %146, %148 : vector<64x320xf32>
    %c0_155 = arith.constant 0 : index
    %c0_156 = arith.constant 0 : index
    %150 = vector.load %arg10[%c0_155, %c0_156] : memref<64x320xbf16, #tpu.memory_space<vmem>>, vector<64x320xbf16>
    %cst_157 = arith.constant dense<0.000000e+00> : vector<64x320xf32>
    %151 = tpu.matmul %144, %150, %cst_157 {dimension_numbers = #tpu.dot_dimension_numbers<[1], [0], [0], [1], [0, 0, 1, 1], [], []>} : vector<64x64xbf16>, vector<64x320xbf16>, vector<64x320xf32> -> vector<64x320xf32>
    %152 = arith.addf %149, %151 : vector<64x320xf32>
    %c0_158 = arith.constant 0 : index
    %c0_159 = arith.constant 0 : index
    %153 = vector.load %arg11[%c0_158, %c0_159] : memref<1x320xf32, #tpu.memory_space<vmem>>, vector<1x320xf32>
    %154 = vector.shape_cast %153 : vector<1x320xf32> to vector<320xf32>
    %155 = vector.shape_cast %154 : vector<320xf32> to vector<1x320xf32>
    %156 = vector.broadcast %155 : vector<1x320xf32> to vector<64x320xf32>
    %157 = arith.addf %152, %156 : vector<64x320xf32>
    %158 = arith.addf %157, %1 : vector<64x320xf32>
    %cst_160 = arith.constant 0.000000e+00 : f32
    %159 = vector.broadcast %cst_160 : f32 to vector<64x320xf32>
    %160 = arith.maximumf %158, %159 : vector<64x320xf32>
    %c0_161 = arith.constant 0 : index
    %c0_162 = arith.constant 0 : index
    %c0_163 = arith.constant 0 : index
    %161 = vector.load %arg12[%c0_161, %c0_162, %c0_163] : memref<1x64x320xf32, #tpu.memory_space<vmem>>, vector<1x64x320xf32>
    %162 = vector.shape_cast %161 : vector<1x64x320xf32> to vector<64x320xf32>
    %163 = vector.shape_cast %160 : vector<64x320xf32> to vector<1x64x320xf32>
    tpu.vector_store %arg12[%c0_161, %c0_162, %c0_163], %163 {strides = array<i32>} : memref<1x64x320xf32, #tpu.memory_space<vmem>>, vector<1x64x320xf32>,
    return
  }
  func.func @transform_0(%arg0: i32) -> (i32, i32, i32) {
    %c0_i32 = arith.constant 0 : i32
    %c0_i32_0 = arith.constant 0 : i32
    %c0_i32_1 = arith.constant 0 : i32
    return %arg0, %c0_i32, %c0_i32_0 : i32, i32, i32
  }
  func.func @transform_1(%arg0: i32) -> (i32, i32) {
    %c0_i32 = arith.constant 0 : i32
    %c0_i32_0 = arith.constant 0 : i32
    %c0_i32_1 = arith.constant 0 : i32
    return %c0_i32, %c0_i32_0 : i32, i32
  }
  func.func @transform_2(%arg0: i32) -> (i32, i32) {
    %c0_i32 = arith.constant 0 : i32
    %c0_i32_0 = arith.constant 0 : i32
    %c0_i32_1 = arith.constant 0 : i32
    return %c0_i32, %c0_i32_0 : i32, i32
  }
  func.func @transform_3(%arg0: i32) -> (i32, i32, i32) {
    %c0_i32 = arith.constant 0 : i32
    %c0_i32_0 = arith.constant 0 : i32
    %c0_i32_1 = arith.constant 0 : i32
    %c0_i32_2 = arith.constant 0 : i32
    return %c0_i32, %c0_i32_0, %c0_i32_1 : i32, i32, i32
  }
  func.func @transform_4(%arg0: i32) -> (i32, i32) {
    %c0_i32 = arith.constant 0 : i32
    %c0_i32_0 = arith.constant 0 : i32
    %c0_i32_1 = arith.constant 0 : i32
    return %c0_i32, %c0_i32_0 : i32, i32
  }
  func.func @transform_5(%arg0: i32) -> (i32, i32, i32) {
    %c0_i32 = arith.constant 0 : i32
    %c0_i32_0 = arith.constant 0 : i32
    %c0_i32_1 = arith.constant 0 : i32
    %c0_i32_2 = arith.constant 0 : i32
    return %c0_i32, %c0_i32_0, %c0_i32_1 : i32, i32, i32
  }
  func.func @transform_6(%arg0: i32) -> (i32, i32) {
    %c0_i32 = arith.constant 0 : i32
    %c0_i32_0 = arith.constant 0 : i32
    %c0_i32_1 = arith.constant 0 : i32
    return %c0_i32, %c0_i32_0 : i32, i32
  }
  func.func @transform_7(%arg0: i32) -> (i32, i32) {
    %c0_i32 = arith.constant 0 : i32
    %c0_i32_0 = arith.constant 0 : i32
    %c0_i32_1 = arith.constant 0 : i32
    return %c0_i32, %c0_i32_0 : i32, i32
  }
  func.func @transform_8(%arg0: i32) -> (i32, i32) {
    %c0_i32 = arith.constant 0 : i32
    %c0_i32_0 = arith.constant 0 : i32
    %c0_i32_1 = arith.constant 0 : i32
    return %c0_i32, %c0_i32_0 : i32, i32
  }
  func.func @transform_9(%arg0: i32) -> (i32, i32) {
    %c0_i32 = arith.constant 0 : i32
    %c0_i32_0 = arith.constant 0 : i32
    %c0_i32_1 = arith.constant 0 : i32
    return %c0_i32, %c0_i32_0 : i32, i32
  }
  func.func @transform_10(%arg0: i32) -> (i32, i32) {
    %c0_i32 = arith.constant 0 : i32
    %c0_i32_0 = arith.constant 0 : i32
    %c0_i32_1 = arith.constant 0 : i32
    return %c0_i32, %c0_i32_0 : i32, i32
  }
  func.func @transform_11(%arg0: i32) -> (i32, i32, i32) {
    %c0_i32 = arith.constant 0 : i32
    %c0_i32_0 = arith.constant 0 : i32
    %c0_i32_1 = arith.constant 0 : i32
    return %arg0, %c0_i32, %c0_i32_0 : i32, i32, i32
  }
}

</mosaic_0001>

<llo_original>
// kernel: block35_forward.1
$region0: #{block35_forward.1}
  #allocation0 [shape = 'u32[]', space=smem, size = 0x4, offset = 0x4, fixed_abs, tag = 'smem constant byte address 0x4 - core index']
  #allocation1 [shape = 'u32[144,128]{1,0:T(1,128)}', space=vmem, size = 0x12000, scoped, tag = 'internal scratch']
  #allocation2 [shape = 'bf16[10,24,96]{2,1,0:T(8,128)(2,1)}', space=vmem, size = 0xf000, scoped, tag = 'scratch operand']
  %s0 = inlined_call_operand.vmem [shape: f32[2,64,320], index: 0, kind: input, shape index: {}]
  %s1 = inlined_call_operand.vmem [shape: bf16[320,96], index: 1, kind: input, shape index: {}]
  %s2 = inlined_call_operand.vmem [shape: f32[1,96], index: 2, kind: input, shape index: {}]
  %s3 = inlined_call_operand.vmem [shape: bf16[9,96,80], index: 3, kind: input, shape index: {}]
  %s4 = inlined_call_operand.vmem [shape: f32[1,80], index: 4, kind: input, shape index: {}]
  %s5 = inlined_call_operand.vmem [shape: bf16[9,96,64], index: 5, kind: input, shape index: {}]
  %s6 = inlined_call_operand.vmem [shape: f32[1,64], index: 6, kind: input, shape index: {}]
  %s7 = inlined_call_operand.vmem [shape: bf16[96,320], index: 7, kind: input, shape index: {}]
  %s8 = inlined_call_operand.vmem [shape: bf16[80,320], index: 8, kind: input, shape index: {}]
  %s9 = inlined_call_operand.vmem [shape: bf16[64,320], index: 9, kind: input, shape index: {}]
  %s10 = inlined_call_operand.vmem [shape: f32[1,320], index: 10, kind: input, shape index: {}]
  %s11 = inlined_call_operand.hbm [shape: f32[2,64,320], index: 11, kind: output, shape index: {}]
  %s12 = sld [smem:[#allocation0]]
  $region77: #{block35_forward.1} parent=0
    _
  %s14 = ssub.s32 1, %s12
  %s15 = scalar_select 0, %s14, %s12
  $region1: #{block35_forward.1} parent=0
    #allocation3 [shape = 'u8[196608]{0}', space=vmem, size = 0x30000, scoped, tag = 'output window, operand 0']
    #allocation4 [shape = 's32[2]{0}', space=sflag, size = 0x8, scoped, tag = 'scoped memory for block35_forward.1']
    %16 = vsyncpa [#allocation4], 0
    %s17 = scalar_lea.sflag [#allocation4], 1
    %18 = vsyncpa %s17, 0
    loop: start=0, step=1, limit=4
    $region2: #{block35_forward.1} parent=1 // loop_pre_header
      _
    $region3: #{block35_forward.1} parent=1 // loop_header
      %s20 = sphi 0, %s24
      %p21 = scmp.ge.s32.totalorder %s20, 4
      %s30 = sphi 0, %s32
      %s33 = sphi 0, %s30
      %s34 = sphi 0, %s33
      %s50 = sphi 0, %s34
      %s54 = sphi 0, %s54
      %s56 = sphi 0, %s54
      %s57 = sphi 0, %s56
      %s71 = sphi 0, %s57
      %s75 = sphi 0, %s75
      %s77 = sphi 0, %s75
      %s78 = sphi 0, %s77
      %s92 = sphi 0, %s78
      %s96 = sphi 0, %s96
      %s98 = sphi 0, %s96
      %s99 = sphi 0, %s98
      %s113 = sphi 0, %s99
      %s117 = sphi 0, %s117
      %s119 = sphi 0, %s117
      %s120 = sphi 0, %s119
      %s134 = sphi 0, %s120
      %s138 = sphi 0, %s138
      %s140 = sphi 0, %s138
      %s141 = sphi 0, %s140
      %s155 = sphi 0, %s141
      %s159 = sphi 0, %s159
      %s161 = sphi 0, %s159
      %s162 = sphi 0, %s161
      %s176 = sphi 0, %s162
      %s180 = sphi 0, %s180
      %s182 = sphi 0, %s180
      %s183 = sphi 0, %s182
      %s197 = sphi 0, %s183
      %s201 = sphi 0, %s201
      %s203 = sphi 0, %s201
      %s204 = sphi 0, %s203
      %s218 = sphi 0, %s204
      %s222 = sphi 0, %s222
      %s224 = sphi 0, %s222
      %s225 = sphi 0, %s224
      %s239 = sphi 0, %s225
      %s243 = sphi 0, %s243
      %s245 = sphi 0, %s243
      %s246 = sphi 0, %s245
      %s260 = sphi 0, %s246
      %s266 = sphi 0, %s268
      %s269 = sphi 0, %s266
      %s270 = sphi 0, %s269
      %s286 = sphi 0, %s270
    $region4: #{block35_forward.1} parent=1 // loop_header_branch
      %23 = sbr.rel (%p21) target = $region8
    $region5: #{block35_forward.1} parent=1 // loop_body
      %s25 = ssub.s32 %s20, 1
      %s26 = ssub.s32 %s20, 2
      %s27 = sadd.s32 %s20, 1
      %s28 = ssub.s32 %s20, %s27
      %p29 = scmp.eq.s32.totalorder %s28, 0
      %s31 = sadd.s32 %s30, 1
      %s32 = scalar_select %p29, %s30, %s31
      %p35 = pneg %p29
      %p36 = scmp.eq.s32.totalorder %s20, 1
      %p37 = por %p35, %p36
      %p38 = scmp.ne.s32.totalorder %s30, %s33
      %p39 = scmp.eq.s32.totalorder %s20, 0
      %p40 = por %p38, %p39
      %p41 = scmp.ne.s32.totalorder %s30, %s33
      %p42 = scmp.eq.s32.totalorder %s25, 1
      %p43 = por %p41, %p42
      %p44 = scmp.ne.s32.totalorder %s33, %s34
      %p45 = scmp.eq.s32.totalorder %s25, 0
      %p46 = por %p44, %p45
      %p47 = scmp.ne.s32.totalorder %s33, %s34
      %p48 = scmp.eq.s32.totalorder %s26, 1
      %p49 = por %p47, %p48
      %p51 = scmp.ne.s32.totalorder %s34, %s50
      %p52 = scmp.eq.s32.totalorder %s26, 0
      %p53 = por %p51, %p52
      %s55 = sadd.s32 %s54, 1
      %p58 = scmp.eq.s32.totalorder %s20, 1
      %p59 = scmp.ne.s32.totalorder %s54, %s56
      %p60 = scmp.eq.s32.totalorder %s20, 0
      %p61 = por %p59, %p60
      %p62 = scmp.ne.s32.totalorder %s54, %s56
      %p63 = scmp.eq.s32.totalorder %s25, 1
      %p64 = por %p62, %p63
      %p65 = scmp.ne.s32.totalorder %s56, %s57
      %p66 = scmp.eq.s32.totalorder %s25, 0
      %p67 = por %p65, %p66
      %p68 = scmp.ne.s32.totalorder %s56, %s57
      %p69 = scmp.eq.s32.totalorder %s26, 1
      %p70 = por %p68, %p69
      %p72 = scmp.ne.s32.totalorder %s57, %s71
      %p73 = scmp.eq.s32.totalorder %s26, 0
      %p74 = por %p72, %p73
      %s76 = sadd.s32 %s75, 1
      %p79 = scmp.eq.s32.totalorder %s20, 1
      %p80 = scmp.ne.s32.totalorder %s75, %s77
      %p81 = scmp.eq.s32.totalorder %s20, 0
      %p82 = por %p80, %p81
      %p83 = scmp.ne.s32.totalorder %s75, %s77
      %p84 = scmp.eq.s32.totalorder %s25, 1
      %p85 = por %p83, %p84
      %p86 = scmp.ne.s32.totalorder %s77, %s78
      %p87 = scmp.eq.s32.totalorder %s25, 0
      %p88 = por %p86, %p87
      %p89 = scmp.ne.s32.totalorder %s77, %s78
      %p90 = scmp.eq.s32.totalorder %s26, 1
      %p91 = por %p89, %p90
      %p93 = scmp.ne.s32.totalorder %s78, %s92
      %p94 = scmp.eq.s32.totalorder %s26, 0
      %p95 = por %p93, %p94
      %s97 = sadd.s32 %s96, 1
      %p100 = scmp.eq.s32.totalorder %s20, 1
      %p101 = scmp.ne.s32.totalorder %s96, %s98
      %p102 = scmp.eq.s32.totalorder %s20, 0
      %p103 = por %p101, %p102
      %p104 = scmp.ne.s32.totalorder %s96, %s98
      %p105 = scmp.eq.s32.totalorder %s25, 1
      %p106 = por %p104, %p105
      %p107 = scmp.ne.s32.totalorder %s98, %s99
      %p108 = scmp.eq.s32.totalorder %s25, 0
      %p109 = por %p107, %p108
      %p110 = scmp.ne.s32.totalorder %s98, %s99
      %p111 = scmp.eq.s32.totalorder %s26, 1
      %p112 = por %p110, %p111
      %p114 = scmp.ne.s32.totalorder %s99, %s113
      %p115 = scmp.eq.s32.totalorder %s26, 0
      %p116 = por %p114, %p115
      %s118 = sadd.s32 %s117, 1
      %p121 = scmp.eq.s32.totalorder %s20, 1
      %p122 = scmp.ne.s32.totalorder %s117, %s119
      %p123 = scmp.eq.s32.totalorder %s20, 0
      %p124 = por %p122, %p123
      %p125 = scmp.ne.s32.totalorder %s117, %s119
      %p126 = scmp.eq.s32.totalorder %s25, 1
      %p127 = por %p125, %p126
      %p128 = scmp.ne.s32.totalorder %s119, %s120
      %p129 = scmp.eq.s32.totalorder %s25, 0
      %p130 = por %p128, %p129
      %p131 = scmp.ne.s32.totalorder %s119, %s120
      %p132 = scmp.eq.s32.totalorder %s26, 1
      %p133 = por %p131, %p132
      %p135 = scmp.ne.s32.totalorder %s120, %s134
      %p136 = scmp.eq.s32.totalorder %s26, 0
      %p137 = por %p135, %p136
      %s139 = sadd.s32 %s138, 1
      %p142 = scmp.eq.s32.totalorder %s20, 1
      %p143 = scmp.ne.s32.totalorder %s138, %s140
      %p144 = scmp.eq.s32.totalorder %s20, 0
      %p145 = por %p143, %p144
      %p146 = scmp.ne.s32.totalorder %s138, %s140
      %p147 = scmp.eq.s32.totalorder %s25, 1
      %p148 = por %p146, %p147
      %p149 = scmp.ne.s32.totalorder %s140, %s141
      %p150 = scmp.eq.s32.totalorder %s25, 0
      %p151 = por %p149, %p150
      %p152 = scmp.ne.s32.totalorder %s140, %s141
      %p153 = scmp.eq.s32.totalorder %s26, 1
      %p154 = por %p152, %p153
      %p156 = scmp.ne.s32.totalorder %s141, %s155
      %p157 = scmp.eq.s32.totalorder %s26, 0
      %p158 = por %p156, %p157
      %s160 = sadd.s32 %s159, 1
      %p163 = scmp.eq.s32.totalorder %s20, 1
      %p164 = scmp.ne.s32.totalorder %s159, %s161
      %p165 = scmp.eq.s32.totalorder %s20, 0
      %p166 = por %p164, %p165
      %p167 = scmp.ne.s32.totalorder %s159, %s161
      %p168 = scmp.eq.s32.totalorder %s25, 1
      %p169 = por %p167, %p168
      %p170 = scmp.ne.s32.totalorder %s161, %s162
      %p171 = scmp.eq.s32.totalorder %s25, 0
      %p172 = por %p170, %p171
      %p173 = scmp.ne.s32.totalorder %s161, %s162
      %p174 = scmp.eq.s32.totalorder %s26, 1
      %p175 = por %p173, %p174
      %p177 = scmp.ne.s32.totalorder %s162, %s176
      %p178 = scmp.eq.s32.totalorder %s26, 0
      %p179 = por %p177, %p178
      %s181 = sadd.s32 %s180, 1
      %p184 = scmp.eq.s32.totalorder %s20, 1
      %p185 = scmp.ne.s32.totalorder %s180, %s182
      %p186 = scmp.eq.s32.totalorder %s20, 0
      %p187 = por %p185, %p186
      %p188 = scmp.ne.s32.totalorder %s180, %s182
      %p189 = scmp.eq.s32.totalorder %s25, 1
      %p190 = por %p188, %p189
      %p191 = scmp.ne.s32.totalorder %s182, %s183
      %p192 = scmp.eq.s32.totalorder %s25, 0
      %p193 = por %p191, %p192
      %p194 = scmp.ne.s32.totalorder %s182, %s183
      %p195 = scmp.eq.s32.totalorder %s26, 1
      %p196 = por %p194, %p195
      %p198 = scmp.ne.s32.totalorder %s183, %s197
      %p199 = scmp.eq.s32.totalorder %s26, 0
      %p200 = por %p198, %p199
      %s202 = sadd.s32 %s201, 1
      %p205 = scmp.eq.s32.totalorder %s20, 1
      %p206 = scmp.ne.s32.totalorder %s201, %s203
      %p207 = scmp.eq.s32.totalorder %s20, 0
      %p208 = por %p206, %p207
      %p209 = scmp.ne.s32.totalorder %s201, %s203
      %p210 = scmp.eq.s32.totalorder %s25, 1
      %p211 = por %p209, %p210
      %p212 = scmp.ne.s32.totalorder %s203, %s204
      %p213 = scmp.eq.s32.totalorder %s25, 0
      %p214 = por %p212, %p213
      %p215 = scmp.ne.s32.totalorder %s203, %s204
      %p216 = scmp.eq.s32.totalorder %s26, 1
      %p217 = por %p215, %p216
      %p219 = scmp.ne.s32.totalorder %s204, %s218
      %p220 = scmp.eq.s32.totalorder %s26, 0
      %p221 = por %p219, %p220
      %s223 = sadd.s32 %s222, 1
      %p226 = scmp.eq.s32.totalorder %s20, 1
      %p227 = scmp.ne.s32.totalorder %s222, %s224
      %p228 = scmp.eq.s32.totalorder %s20, 0
      %p229 = por %p227, %p228
      %p230 = scmp.ne.s32.totalorder %s222, %s224
      %p231 = scmp.eq.s32.totalorder %s25, 1
      %p232 = por %p230, %p231
      %p233 = scmp.ne.s32.totalorder %s224, %s225
      %p234 = scmp.eq.s32.totalorder %s25, 0
      %p235 = por %p233, %p234
      %p236 = scmp.ne.s32.totalorder %s224, %s225
      %p237 = scmp.eq.s32.totalorder %s26, 1
      %p238 = por %p236, %p237
      %p240 = scmp.ne.s32.totalorder %s225, %s239
      %p241 = scmp.eq.s32.totalorder %s26, 0
      %p242 = por %p240, %p241
      %s244 = sadd.s32 %s243, 1
      %p247 = scmp.eq.s32.totalorder %s20, 1
      %p248 = scmp.ne.s32.totalorder %s243, %s245
      %p249 = scmp.eq.s32.totalorder %s20, 0
      %p250 = por %p248, %p249
      %p251 = scmp.ne.s32.totalorder %s243, %s245
      %p252 = scmp.eq.s32.totalorder %s25, 1
      %p253 = por %p251, %p252
      %p254 = scmp.ne.s32.totalorder %s245, %s246
      %p255 = scmp.eq.s32.totalorder %s25, 0
      %p256 = por %p254, %p255
      %p257 = scmp.ne.s32.totalorder %s245, %s246
      %p258 = scmp.eq.s32.totalorder %s26, 1
      %p259 = por %p257, %p258
      %p261 = scmp.ne.s32.totalorder %s246, %s260
      %p262 = scmp.eq.s32.totalorder %s26, 0
      %p263 = por %p261, %p262
      %s264 = ssub.s32 %s20, %s27
      %p265 = scmp.eq.s32.totalorder %s264, 0
      %s267 = sadd.s32 %s266, 1
      %s268 = scalar_select %p265, %s266, %s267
      %p271 = pneg %p265
      %p272 = scmp.eq.s32.totalorder %s20, 1
      %p273 = por %p271, %p272
      %p274 = scmp.ne.s32.totalorder %s266, %s269
      %p275 = scmp.eq.s32.totalorder %s20, 0
      %p276 = por %p274, %p275
      %p277 = scmp.ne.s32.totalorder %s266, %s269
      %p278 = scmp.eq.s32.totalorder %s25, 1
      %p279 = por %p277, %p278
      %p280 = scmp.ne.s32.totalorder %s269, %s270
      %p281 = scmp.eq.s32.totalorder %s25, 0
      %p282 = por %p280, %p281
      %p283 = scmp.ne.s32.totalorder %s269, %s270
      %p284 = scmp.eq.s32.totalorder %s26, 1
      %p285 = por %p283, %p284
      %p287 = scmp.ne.s32.totalorder %s270, %s286
      %p288 = scmp.eq.s32.totalorder %s26, 0
      %p289 = por %p287, %p288
      %p290 = scmp.le.s32.totalorder 1, %s20
      %p291 = scmp.lt.s32.totalorder %s20, 3
      %p292 = pnand %p290, %p291
      %p293 = pneg %p292
      // Predicated region
      $region9: #{block35_forward.1} parent=5 // pred_check
        _
      $region10: #{block35_forward.1} parent=5 // pred_check_branch
        %295 = sbr.rel (%p292) target = $region12
      $region11: #{block35_forward.1} parent=5 // pred_region
        %s296 = ssub.s32 %s20, 1
        // Predicated region
        $region13: #{block35_forward.1} parent=11 // pred_check
          %p297 = pneg %p67
        $region14: #{block35_forward.1} parent=11 // pred_check_branch
          %299 = sbr.rel (%p297) target = $region16
        $region15: #{block35_forward.1} parent=11 // pred_region
          _
        $region16: #{block35_forward.1} parent=11 // pred_fallthru
          _
        // Predicated region
        $region17: #{block35_forward.1} parent=11 // pred_check
          %p300 = pneg %p88
        $region18: #{block35_forward.1} parent=11 // pred_check_branch
          %302 = sbr.rel (%p300) target = $region20
        $region19: #{block35_forward.1} parent=11 // pred_region
          _
        $region20: #{block35_forward.1} parent=11 // pred_fallthru
          _
        // Predicated region
        $region21: #{block35_forward.1} parent=11 // pred_check
          %p303 = pneg %p109
        $region22: #{block35_forward.1} parent=11 // pred_check_branch
          %305 = sbr.rel (%p303) target = $region24
        $region23: #{block35_forward.1} parent=11 // pred_region
          _
        $region24: #{block35_forward.1} parent=11 // pred_fallthru
          _
        // Predicated region
        $region25: #{block35_forward.1} parent=11 // pred_check
          %p306 = pneg %p130
        $region26: #{block35_forward.1} parent=11 // pred_check_branch
          %308 = sbr.rel (%p306) target = $region28
        $region27: #{block35_forward.1} parent=11 // pred_region
          _
        $region28: #{block35_forward.1} parent=11 // pred_fallthru
          _
        // Predicated region
        $region29: #{block35_forward.1} parent=11 // pred_check
          %p309 = pneg %p151
        $region30: #{block35_forward.1} parent=11 // pred_check_branch
          %311 = sbr.rel (%p309) target = $region32
        $region31: #{block35_forward.1} parent=11 // pred_region
          _
        $region32: #{block35_forward.1} parent=11 // pred_fallthru
          _
        // Predicated region
        $region33: #{block35_forward.1} parent=11 // pred_check
          %p312 = pneg %p172
        $region34: #{block35_forward.1} parent=11 // pred_check_branch
          %314 = sbr.rel (%p312) target = $region36
        $region35: #{block35_forward.1} parent=11 // pred_region
          _
        $region36: #{block35_forward.1} parent=11 // pred_fallthru
          _
        // Predicated region
        $region37: #{block35_forward.1} parent=11 // pred_check
          %p315 = pneg %p193
        $region38: #{block35_forward.1} parent=11 // pred_check_branch
          %317 = sbr.rel (%p315) target = $region40
        $region39: #{block35_forward.1} parent=11 // pred_region
          _
        $region40: #{block35_forward.1} parent=11 // pred_fallthru
          _
        // Predicated region
        $region41: #{block35_forward.1} parent=11 // pred_check
          %p318 = pneg %p214
        $region42: #{block35_forward.1} parent=11 // pred_check_branch
          %320 = sbr.rel (%p318) target = $region44
        $region43: #{block35_forward.1} parent=11 // pred_region
          _
        $region44: #{block35_forward.1} parent=11 // pred_fallthru
          _
        // Predicated region
        $region45: #{block35_forward.1} parent=11 // pred_check
          %p321 = pneg %p235
        $region46: #{block35_forward.1} parent=11 // pred_check_branch
          %323 = sbr.rel (%p321) target = $region48
        $region47: #{block35_forward.1} parent=11 // pred_region
          _
        $region48: #{block35_forward.1} parent=11 // pred_fallthru
          _
        // Predicated region
        $region49: #{block35_forward.1} parent=11 // pred_check
          %p324 = pneg %p256
        $region50: #{block35_forward.1} parent=11 // pred_check_branch
          %326 = sbr.rel (%p324) target = $region52
        $region51: #{block35_forward.1} parent=11 // pred_region
          _
        $region52: #{block35_forward.1} parent=11 // pred_fallthru
          _
      $region12: #{block35_forward.1} parent=5 // pred_fallthru
        _
      %p327 = scmp.lt.s32.totalorder %s20, 2
      // Predicated region
      $region53: #{block35_forward.1} parent=5 // pred_check
        %p328 = pneg %p327
      $region54: #{block35_forward.1} parent=5 // pred_check_branch
        %330 = sbr.rel (%p328) target = $region56
      $region55: #{block35_forward.1} parent=5 // pred_region
        // Predicated region
        $region57: #{block35_forward.1} parent=55 // pred_check
          %p331 = pneg %p40
        $region58: #{block35_forward.1} parent=55 // pred_check_branch
          %333 = sbr.rel (%p331) target = $region60
        $region59: #{block35_forward.1} parent=55 // pred_region
          %p334 = scmp.lt.s32.totalorder %s20, 1
          %s335 = scalar_select %p334, %s20, 1
          %s336 = smul.addr %s335, 24
          %s337 = smul.addr %s336, 8
          %s338 = scalar_lea.vmem %s0, %s337
        $region60: #{block35_forward.1} parent=55 // pred_fallthru
          _
      $region56: #{block35_forward.1} parent=5 // pred_fallthru
        _
      %p339 = scmp.le.s32.totalorder 1, %s20
      %p340 = scmp.lt.s32.totalorder %s20, 3
      %p341 = pnand %p339, %p340
      %p342 = pneg %p341
      // Predicated region
      $region61: #{block35_forward.1} parent=5 // pred_check
        _
      $region62: #{block35_forward.1} parent=5 // pred_check_branch
        %344 = sbr.rel (%p341) target = $region64
      $region63: #{block35_forward.1} parent=5 // pred_region
        %s345 = ssub.s32 %s20, 1
        %p346 = scmp.lt.s32.totalorder %s25, 1
        %s347 = scalar_select %p346, %s25, 1
        %s348 = smul.addr %s347, 24
        %s349 = smul.addr %s348, 8
        %s350 = scalar_lea.vmem %s0, %s349
        %p351 = pneg %p46
        %p352 = pneg %p43
        %p353 = pneg %p67
        %p354 = pneg %p64
        %p355 = pneg %p88
        %p356 = pneg %p85
        %p357 = pneg %p109
        %p358 = pneg %p106
        %p359 = pneg %p130
        %p360 = pneg %p127
        %p361 = pneg %p151
        %p362 = pneg %p148
        %p363 = pneg %p172
        %p364 = pneg %p169
        %p365 = pneg %p193
        %p366 = pneg %p190
        %p367 = pneg %p214
        %p368 = pneg %p211
        %p369 = pneg %p235
        %p370 = pneg %p232
        %p371 = pneg %p256
        %p372 = pneg %p253
        %p373 = pneg %p282
        %p374 = pneg %p279
        %s375 = sand.u32 %s269, 1
        %s376 = scalar_lea.sflag [#allocation4], %s375
        %s377 = sand.u32 %s269, 1
        %s378 = smul.addr %s377, 192
        %s379 = scalar_lea.vmem [#allocation3], %s378
        %p380 = scmp.lt.s32.totalorder %s25, 1
        %s381 = scalar_select %p380, %s25, 1
        %s382 = smul.addr %s381, 24
        %s383 = smul.addr %s382, 8
        %s384 = scalar_lea.vmem %s0, %s383
        %v386 = vld [vmem:[%s384] sm:$0xff]
        %v387 = vld [vmem:[%s384 + $0x8] sm:$0xff]
        %v388 = vld [vmem:[%s384 + $0x10] sm:$0xff]
        %v389 = vld [vmem:[%s384 + $0x18] sm:$0xff]
        %v390 = vld [vmem:[%s384 + $0x20] sm:$0xff]
        %v391 = vld [vmem:[%s384 + $0x28] sm:$0xff]
        %v392 = vld [vmem:[%s384 + $0x30] sm:$0xff]
        %v393 = vld [vmem:[%s384 + $0x38] sm:$0xff]
        %v394 = vld [vmem:[%s384 + $0x40] sm:$0xff]
        %v395 = vld [vmem:[%s384 + $0x48] sm:$0xff]
        %v396 = vld [vmem:[%s384 + $0x50] sm:$0xff]
        %v397 = vld [vmem:[%s384 + $0x58] sm:$0xff]
        %v398 = vld [vmem:[%s384 + $0x60] sm:$0xff]
        %v399 = vld [vmem:[%s384 + $0x68] sm:$0xff]
        %v400 = vld [vmem:[%s384 + $0x70] sm:$0xff]
        %v401 = vld [vmem:[%s384 + $0x78] sm:$0xff]
        %v402 = vld [vmem:[%s384 + $0x80] sm:$0xff]
        %v403 = vld [vmem:[%s384 + $0x88] sm:$0xff]
        %v404 = vld [vmem:[%s384 + $0x90] sm:$0xff]
        %v405 = vld [vmem:[%s384 + $0x98] sm:$0xff]
        %v406 = vld [vmem:[%s384 + $0xa0] sm:$0xff]
        %v407 = vld [vmem:[%s384 + $0xa8] sm:$0xff]
        %v408 = vld [vmem:[%s384 + $0xb0] sm:$0xff]
        %v409 = vld [vmem:[%s384 + $0xb8] sm:$0xff]
        %v410 = vpack.c.bf16 %v389, %v386
        %v411 = vpack.c.bf16 %v390, %v387
        %v412 = vpack.c.bf16 %v391, %v388
        %v413 = vpack.c.bf16 %v395, %v392
        %v414 = vpack.c.bf16 %v396, %v393
        %v415 = vpack.c.bf16 %v397, %v394
        %v416 = vpack.c.bf16 %v401, %v398
        %v417 = vpack.c.bf16 %v402, %v399
        %v418 = vpack.c.bf16 %v403, %v400
        %v419 = vpack.c.bf16 %v407, %v404
        %v420 = vpack.c.bf16 %v408, %v405
        %v421 = vpack.c.bf16 %v409, %v406
        %vm422 = vcmask 781312
        %423 = vst.msk [vmem:[#allocation2] sm:$0xf] %vm422, 0
        %424 = vst.msk [vmem:[#allocation2 + $0x4] sm:$0xf] %vm422, 0
        %425 = vst.msk [vmem:[#allocation2 + $0x8] sm:$0xf] %vm422, 0
        %s426 = scalar_lea.vmem [#allocation2], 108
        %427 = vst.msk [vmem:[%s426] sm:$0xf] %vm422, 0
        %428 = vst.msk [vmem:[%s426 + $0x4] sm:$0xf] %vm422, 0
        %429 = vst.msk [vmem:[%s426 + $0x8] sm:$0xf] %vm422, 0
        %430 = vst.msk [vmem:[#allocation2] sm:$0xf] %vm422, 0
        %431 = vst.msk [vmem:[#allocation2 + $0xc] sm:$0xf] %vm422, 0
        %432 = vst.msk [vmem:[#allocation2 + $0x18] sm:$0xf] %vm422, 0
        %433 = vst.msk [vmem:[#allocation2 + $0x24] sm:$0xf] %vm422, 0
        %434 = vst.msk [vmem:[#allocation2 + $0x30] sm:$0xf] %vm422, 0
        %435 = vst.msk [vmem:[#allocation2 + $0x3c] sm:$0xf] %vm422, 0
        %436 = vst.msk [vmem:[#allocation2 + $0x48] sm:$0xf] %vm422, 0
        %437 = vst.msk [vmem:[#allocation2 + $0x54] sm:$0xf] %vm422, 0
        %438 = vst.msk [vmem:[#allocation2 + $0x60] sm:$0xf] %vm422, 0
        %439 = vst.msk [vmem:[#allocation2 + $0x6c] sm:$0xf] %vm422, 0
        %440 = vst.msk [vmem:[#allocation2 + $0x8] sm:$0xf] %vm422, 0
        %441 = vst.msk [vmem:[#allocation2 + $0x14] sm:$0xf] %vm422, 0
        %442 = vst.msk [vmem:[#allocation2 + $0x20] sm:$0xf] %vm422, 0
        %443 = vst.msk [vmem:[#allocation2 + $0x2c] sm:$0xf] %vm422, 0
        %444 = vst.msk [vmem:[#allocation2 + $0x38] sm:$0xf] %vm422, 0
        %445 = vst.msk [vmem:[#allocation2 + $0x44] sm:$0xf] %vm422, 0
        %446 = vst.msk [vmem:[#allocation2 + $0x50] sm:$0xf] %vm422, 0
        %447 = vst.msk [vmem:[#allocation2 + $0x5c] sm:$0xf] %vm422, 0
        %448 = vst.msk [vmem:[#allocation2 + $0x68] sm:$0xf] %vm422, 0
        %449 = vst.msk [vmem:[#allocation2 + $0x74] sm:$0xf] %vm422, 0
        %v450 = vld [vmem:[%s1] sm:$0xf]
        %v451 = vld [vmem:[%s1 + $0x4] sm:$0xf]
        %v452 = vld [vmem:[%s1 + $0x8] sm:$0xf]
        %v453 = vld [vmem:[%s1 + $0xc] sm:$0xf]
        %v454 = vld [vmem:[%s1 + $0x10] sm:$0xf]
        %v455 = vld [vmem:[%s1 + $0x14] sm:$0xf]
        %v456 = vld [vmem:[%s1 + $0x18] sm:$0xf]
        %v457 = vld [vmem:[%s1 + $0x1c] sm:$0xf]
        %v458 = vld [vmem:[%s1 + $0x20] sm:$0xf]
        %v459 = vld [vmem:[%s1 + $0x24] sm:$0xf]
        %v460 = vld [vmem:[%s1 + $0x28] sm:$0xf]
        %v461 = vld [vmem:[%s1 + $0x2c] sm:$0xf]
        %v462 = vld [vmem:[%s1 + $0x30] sm:$0xf]
        %v463 = vld [vmem:[%s1 + $0x34] sm:$0xf]
        %v464 = vld [vmem:[%s1 + $0x38] sm:$0xf]
        %v465 = vld [vmem:[%s1 + $0x3c] sm:$0xf]
        %v466 = vld [vmem:[%s1 + $0x40] sm:$0xf]
        %v467 = vld [vmem:[%s1 + $0x44] sm:$0xf]
        %v468 = vld [vmem:[%s1 + $0x48] sm:$0xf]
        %v469 = vld [vmem:[%s1 + $0x4c] sm:$0xf]
        %v470 = vld [vmem:[%s1 + $0x50] sm:$0xf]
        %v471 = vld [vmem:[%s1 + $0x54] sm:$0xf]
        %v472 = vld [vmem:[%s1 + $0x58] sm:$0xf]
        %v473 = vld [vmem:[%s1 + $0x5c] sm:$0xf]
        %v474 = vld [vmem:[%s1 + $0x60] sm:$0xf]
        %v475 = vld [vmem:[%s1 + $0x64] sm:$0xf]
        %v476 = vld [vmem:[%s1 + $0x68] sm:$0xf]
        %v477 = vld [vmem:[%s1 + $0x6c] sm:$0xf]
        %v478 = vld [vmem:[%s1 + $0x70] sm:$0xf]
        %v479 = vld [vmem:[%s1 + $0x74] sm:$0xf]
        %v480 = vld [vmem:[%s1 + $0x78] sm:$0xf]
        %v481 = vld [vmem:[%s1 + $0x7c] sm:$0xf]
        %v482 = vld [vmem:[%s1 + $0x80] sm:$0xf]
        %v483 = vld [vmem:[%s1 + $0x84] sm:$0xf]
        %v484 = vld [vmem:[%s1 + $0x88] sm:$0xf]
        %v485 = vld [vmem:[%s1 + $0x8c] sm:$0xf]
        %v486 = vld [vmem:[%s1 + $0x90] sm:$0xf]
        %v487 = vld [vmem:[%s1 + $0x94] sm:$0xf]
        %v488 = vld [vmem:[%s1 + $0x98] sm:$0xf]
        %v489 = vld [vmem:[%s1 + $0x9c] sm:$0xf]
        %v490 = vld [vmem:[%s2] sm:$0x1]
        %v492 = vlaneseq
        %v493 = vshrl.u32 %v492, 7
        %v494 = vsub.s32 0, %v493
        %v495 = vrot.slane %v490, %v494
        %v537 = vunpack.c.l.b16 %v450
        %v538 = vunpack.c.l.b16 %v451
        %v539 = vunpack.c.l.b16 %v452
        %v540 = vunpack.c.l.b16 %v453
        %v541 = vunpack.c.l.b16 %v454
        %v542 = vunpack.c.l.b16 %v455
        %v543 = vunpack.c.l.b16 %v456
        %v544 = vunpack.c.l.b16 %v457
        %v545 = vunpack.c.l.b16 %v458
        %v546 = vunpack.c.l.b16 %v459
        %v547 = vunpack.c.l.b16 %v460
        %v548 = vunpack.c.l.b16 %v461
        %v549 = vunpack.c.l.b16 %v462
        %v550 = vunpack.c.l.b16 %v463
        %v551 = vunpack.c.l.b16 %v464
        %v552 = vunpack.c.l.b16 %v465
        %v553 = vunpack.c.l.b16 %v466
        %v554 = vunpack.c.l.b16 %v467
        %v555 = vunpack.c.l.b16 %v468
        %v556 = vunpack.c.l.b16 %v469
        %v557 = vunpack.c.l.b16 %v470
        %v558 = vunpack.c.l.b16 %v471
        %v559 = vunpack.c.l.b16 %v472
        %v560 = vunpack.c.l.b16 %v473
        %v561 = vunpack.c.l.b16 %v474
        %v562 = vunpack.c.l.b16 %v475
        %v563 = vunpack.c.l.b16 %v476
        %v564 = vunpack.c.l.b16 %v477
        %v565 = vunpack.c.l.b16 %v478
        %v566 = vunpack.c.l.b16 %v479
        %v567 = vunpack.c.l.b16 %v480
        %v568 = vunpack.c.l.b16 %v481
        %v569 = vunpack.c.l.b16 %v482
        %v570 = vunpack.c.l.b16 %v483
        %v571 = vunpack.c.l.b16 %v484
        %v572 = vunpack.c.l.b16 %v485
        %v573 = vunpack.c.l.b16 %v486
        %v574 = vunpack.c.l.b16 %v487
        %v575 = vunpack.c.l.b16 %v488
        %v576 = vunpack.c.l.b16 %v489
        %v577 = vpack.c.b16 %v538, %v537
        %v578 = vpack.c.b16 %v540, %v539
        %v579 = vpack.c.b16 %v542, %v541
        %v580 = vpack.c.b16 %v544, %v543
        %v581 = vpack.c.b16 %v546, %v545
        %v582 = vpack.c.b16 %v548, %v547
        %v583 = vpack.c.b16 %v550, %v549
        %v584 = vpack.c.b16 %v552, %v551
        %v585 = vpack.c.b16 %v554, %v553
        %v586 = vpack.c.b16 %v556, %v555
        %v587 = vpack.c.b16 %v558, %v557
        %v588 = vpack.c.b16 %v560, %v559
        %v589 = vpack.c.b16 %v562, %v561
        %v590 = vpack.c.b16 %v564, %v563
        %v591 = vpack.c.b16 %v566, %v565
        %v592 = vpack.c.b16 %v568, %v567
        %v593 = vpack.c.b16 %v570, %v569
        %v594 = vpack.c.b16 %v572, %v571
        %v595 = vpack.c.b16 %v574, %v573
        %v596 = vpack.c.b16 %v576, %v575
        %vm617 = vcmask 523264
        %v619 = vsel %vm617, %v412, 0
        %v622 = vsel %vm617, %v415, 0
        %v625 = vsel %vm617, %v418, 0
        %v628 = vsel %vm617, %v421, 0
        %630 = vmatprep.subr.bf16.mxu0 0
        %631 = vmatpush1.bf16.msra.mxu0 %v577
        %632 = vmatprep.subr.bf16.mxu0 0
        %633 = vmatpush1.bf16.msra.mxu0 %v578
        %634 = vmatprep.subr.bf16.mxu0 0
        %635 = vmatpush1.bf16.msra.mxu0 %v579
        %636 = vmatprep.subr.bf16.mxu0 0
        %637 = vmatpush1.bf16.msra.mxu0 %v580
        %638 = vmatprep.subr.bf16.mxu0 0
        %639 = vmatpush1.bf16.msra.mxu0 %v581
        %640 = vmatprep.subr.bf16.mxu0 0
        %641 = vmatpush1.bf16.msra.mxu0 %v582
        %642 = vmatprep.subr.bf16.mxu0 0
        %643 = vmatpush1.bf16.msra.mxu0 %v583
        %644 = vmatprep.subr.bf16.mxu0 0
        %645 = vmatpush1.bf16.msra.mxu0 %v584
        %646 = vmatprep.subr.bf16.mxu0 0
        %647 = vmatpush1.bf16.msra.mxu0 %v585
        %648 = vmatprep.subr.bf16.mxu0 0
        %649 = vmatpush1.bf16.msra.mxu0 %v586
        %650 = vmatprep.subr.bf16.mxu0 0
        %651 = vmatpush1.bf16.msra.mxu0 %v587
        %652 = vmatprep.subr.bf16.mxu0 0
        %653 = vmatpush1.bf16.msra.mxu0 %v588
        %654 = vmatprep.subr.bf16.mxu0 0
        %655 = vmatpush1.bf16.msra.mxu0 %v589
        %656 = vmatprep.subr.bf16.mxu0 0
        %657 = vmatpush1.bf16.msra.mxu0 %v590
        %658 = vmatprep.subr.bf16.mxu0 0
        %659 = vmatpush1.bf16.msra.mxu0 %v591
        %660 = vmatprep.subr.bf16.mxu0 0
        %661 = vmatpush1.bf16.msra.mxu0 %v592
        %662 = vmatprep.mubr.bf16.mxu0 %v411
        %663 = vmatmul.mubr.bf16.gmra.mrb[0].mxu0 %v410
        %v664 = vpop.f32.mrb[0].mxu0
        %v665 = vadd.f32 %v495, %v664
        %v666 = vpop.f32.mrb[0].mxu0
        %v667 = vpop.f32.mrb[0].mxu0
        %v668 = vadd.f32 %v495, %v667
        %v669 = vpop.f32.mrb[0].mxu0
        %670 = vmatprep.mubr.bf16.mxu0 %v414
        %671 = vmatmul.mubr.bf16.gmra.mrb[0].mxu0 %v413
        %v672 = vpop.f32.mrb[0].mxu0
        %v673 = vadd.f32 %v495, %v672
        %v674 = vpop.f32.mrb[0].mxu0
        %v675 = vpop.f32.mrb[0].mxu0
        %v676 = vadd.f32 %v495, %v675
        %v677 = vpop.f32.mrb[0].mxu0
        %678 = vmatprep.mubr.bf16.mxu0 %v417
        %679 = vmatmul.mubr.bf16.gmra.mrb[0].mxu0 %v416
        %v680 = vpop.f32.mrb[0].mxu0
        %v681 = vadd.f32 %v495, %v680
        %v682 = vpop.f32.mrb[0].mxu0
        %v683 = vpop.f32.mrb[0].mxu0
        %v684 = vadd.f32 %v495, %v683
        %v685 = vpop.f32.mrb[0].mxu0
        %686 = vmatprep.mubr.bf16.mxu0 %v420
        %687 = vmatmul.mubr.bf16.gmra.mrb[0].mxu0 %v419
        %v688 = vpop.f32.mrb[0].mxu0
        %v689 = vadd.f32 %v495, %v688
        %v690 = vpop.f32.mrb[0].mxu0
        %v691 = vpop.f32.mrb[0].mxu0
        %v692 = vadd.f32 %v495, %v691
        %v693 = vpop.f32.mrb[0].mxu0
        %694 = vdwg.mxu0
        %695 = vmatprep.subr.bf16.mxu0 0
        %696 = vmatpush1.bf16.msra.mxu0 %v593
        %697 = vmatprep.subr.bf16.mxu0 0
        %698 = vmatpush1.bf16.msra.mxu0 %v594
        %699 = vmatprep.subr.bf16.mxu0 0
        %700 = vmatpush1.bf16.msra.mxu0 %v595
        %701 = vmatprep.subr.bf16.mxu0 0
        %702 = vmatpush1.bf16.msra.mxu0 %v596
        %703 = vmatprep.subr.bf16.mxu0 0
        %704 = vmatpush1.bf16.msra.mxu0 0
        %705 = vmatprep.subr.bf16.mxu0 0
        %706 = vmatpush1.bf16.msra.mxu0 0
        %707 = vmatprep.subr.bf16.mxu0 0
        %708 = vmatpush1.bf16.msra.mxu0 0
        %709 = vmatprep.subr.bf16.mxu0 0
        %710 = vmatpush1.bf16.msra.mxu0 0
        %711 = vmatprep.subr.bf16.mxu0 0
        %712 = vmatpush1.bf16.msra.mxu0 0
        %713 = vmatprep.subr.bf16.mxu0 0
        %714 = vmatpush1.bf16.msra.mxu0 0
        %715 = vmatprep.subr.bf16.mxu0 0
        %716 = vmatpush1.bf16.msra.mxu0 0
        %717 = vmatprep.subr.bf16.mxu0 0
        %718 = vmatpush1.bf16.msra.mxu0 0
        %719 = vmatprep.subr.bf16.mxu0 0
        %720 = vmatpush1.bf16.msra.mxu0 0
        %721 = vmatprep.subr.bf16.mxu0 0
        %722 = vmatpush1.bf16.msra.mxu0 0
        %723 = vmatprep.subr.bf16.mxu0 0
        %724 = vmatpush1.bf16.msra.mxu0 0
        %725 = vmatprep.subr.bf16.mxu0 0
        %726 = vmatpush1.bf16.msra.mxu0 0
        %727 = vmatprep.mubr.bf16.mxu0 0
        %728 = vmatmul.mubr.bf16.gmra.mrb[0].mxu0 %v619
        %v729 = vpop.f32.mrb[0].mxu0
        %v730 = vadd.f32 %v665, %v729
        %v731 = vpop.f32.mrb[0].mxu0
        %v732 = vpop.f32.mrb[0].mxu0
        %v733 = vadd.f32 %v668, %v732
        %v734 = vpop.f32.mrb[0].mxu0
        %735 = vmatprep.mubr.bf16.mxu0 0
        %736 = vmatmul.mubr.bf16.gmra.mrb[0].mxu0 %v622
        %v737 = vpop.f32.mrb[0].mxu0
        %v738 = vadd.f32 %v673, %v737
        %v739 = vpop.f32.mrb[0].mxu0
        %v740 = vpop.f32.mrb[0].mxu0
        %v741 = vadd.f32 %v676, %v740
        %v742 = vpop.f32.mrb[0].mxu0
        %743 = vmatprep.mubr.bf16.mxu0 0
        %744 = vmatmul.mubr.bf16.gmra.mrb[0].mxu0 %v625
        %v745 = vpop.f32.mrb[0].mxu0
        %v746 = vadd.f32 %v681, %v745
        %v747 = vpop.f32.mrb[0].mxu0
        %v748 = vpop.f32.mrb[0].mxu0
        %v749 = vadd.f32 %v684, %v748
        %v750 = vpop.f32.mrb[0].mxu0
        %751 = vmatprep.mubr.bf16.mxu0 0
        %752 = vmatmul.mubr.bf16.gmra.mrb[0].mxu0 %v628
        %v753 = vpop.f32.mrb[0].mxu0
        %v754 = vadd.f32 %v689, %v753
        %v755 = vpop.f32.mrb[0].mxu0
        %v756 = vpop.f32.mrb[0].mxu0
        %v757 = vadd.f32 %v692, %v756
        %v758 = vpop.f32.mrb[0].mxu0
        %759 = vdwg.mxu0
        %v760 = vmax.f32 %v730, 0.0
        %v761 = vmax.f32 %v733, 0.0
        %v762 = vmax.f32 %v738, 0.0
        %v763 = vmax.f32 %v741, 0.0
        %v764 = vmax.f32 %v746, 0.0
        %v765 = vmax.f32 %v749, 0.0
        %v766 = vmax.f32 %v754, 0.0
        %v767 = vmax.f32 %v757, 0.0
        %v768 = vpack.c.bf16 %v761, %v760
        %v769 = vpack.c.bf16 %v763, %v762
        %v770 = vpack.c.bf16 %v765, %v764
        %v771 = vpack.c.bf16 %v767, %v766
        %v776 = vunpack.c.l.b16 %v768
        %v777 = vunpack.c.h.b16 %v768
        %v778 = vunpack.c.l.b16 %v769
        %v779 = vunpack.c.h.b16 %v769
        %v780 = vunpack.c.l.b16 %v770
        %v781 = vunpack.c.h.b16 %v770
        %v782 = vunpack.c.l.b16 %v771
        %v783 = vunpack.c.h.b16 %v771
        %v784 = vpack.c.b16 %v776, %v776
        %v785 = vpack.c.b16 %v777, %v777
        %v786 = vpack.c.b16 %v778, %v778
        %v787 = vpack.c.b16 %v779, %v779
        %v788 = vpack.c.b16 %v780, %v780
        %v789 = vpack.c.b16 %v781, %v781
        %v790 = vpack.c.b16 %v782, %v782
        %v791 = vpack.c.b16 %v783, %v783
        %s800 = scalar_lea.vmem [#allocation2], 12
        %801 = vst.msk [vmem:[%s800 + $0x4] sm:$0xf] %vm422, %v784
        %802 = vst.msk [vmem:[%s800 + $0x10] sm:$0xf] %vm422, %v785
        %803 = vst.msk [vmem:[%s800 + $0x1c] sm:$0xf] %vm422, %v786
        %804 = vst.msk [vmem:[%s800 + $0x28] sm:$0xf] %vm422, %v787
        %805 = vst.msk [vmem:[%s800 + $0x34] sm:$0xf] %vm422, %v788
        %806 = vst.msk [vmem:[%s800 + $0x40] sm:$0xf] %vm422, %v789
        %807 = vst.msk [vmem:[%s800 + $0x4c] sm:$0xf] %vm422, %v790
        %808 = vst.msk [vmem:[%s800 + $0x58] sm:$0xf] %vm422, %v791
        %v809 = vld [vmem:[#allocation2] sm:$0x8]
        %v810 = vld [vmem:[#allocation2 + $0x4] sm:$0xf]
        %v811 = vld [vmem:[#allocation2 + $0xc] sm:$0x8]
        %v812 = vld [vmem:[#allocation2 + $0x10] sm:$0xf]
        %v813 = vld [vmem:[#allocation2 + $0x18] sm:$0x8]
        %v814 = vld [vmem:[#allocation2 + $0x1c] sm:$0xf]
        %v815 = vld [vmem:[#allocation2 + $0x24] sm:$0x8]
        %v816 = vld [vmem:[#allocation2 + $0x28] sm:$0xf]
        %v817 = vld [vmem:[#allocation2 + $0x30] sm:$0x8]
        %v818 = vld [vmem:[#allocation2 + $0x34] sm:$0xf]
        %v819 = vld [vmem:[#allocation2 + $0x3c] sm:$0x8]
        %v820 = vld [vmem:[#allocation2 + $0x40] sm:$0xf]
        %v821 = vld [vmem:[#allocation2 + $0x48] sm:$0x8]
        %v822 = vld [vmem:[#allocation2 + $0x4c] sm:$0xf]
        %v823 = vld [vmem:[#allocation2 + $0x54] sm:$0x8]
        %v824 = vld [vmem:[#allocation2 + $0x58] sm:$0xf]
        %vm825 = vsmask.f32 256
        %vm826 = vsmask.f32 4368
        %vm827 = vmor %vm825, %vm826
        %v829 = vshrl.u32 %v809, 16
        %v831 = vrot.slane %v829, 7
        %v832 = vrot.slane %v831, 4
        %v834 = vshrl.u32 %v810, 16
        %v836 = vrot.slane %v834, 7
        %v837 = vshll.u32 %v810, 16
        %v839 = vor.u32 %v836, %v837
        %v840 = vsel %vm827, %v832, %v839
        %v842 = vshrl.u32 %v811, 16
        %v844 = vrot.slane %v842, 7
        %v845 = vrot.slane %v844, 4
        %v847 = vshrl.u32 %v812, 16
        %v849 = vrot.slane %v847, 7
        %v850 = vshll.u32 %v812, 16
        %v852 = vor.u32 %v849, %v850
        %v853 = vsel %vm827, %v845, %v852
        %v855 = vshrl.u32 %v813, 16
        %v857 = vrot.slane %v855, 7
        %v858 = vrot.slane %v857, 4
        %v860 = vshrl.u32 %v814, 16
        %v862 = vrot.slane %v860, 7
        %v863 = vshll.u32 %v814, 16
        %v865 = vor.u32 %v862, %v863
        %v866 = vsel %vm827, %v858, %v865
        %v868 = vshrl.u32 %v815, 16
        %v870 = vrot.slane %v868, 7
        %v871 = vrot.slane %v870, 4
        %v873 = vshrl.u32 %v816, 16
        %v875 = vrot.slane %v873, 7
        %v876 = vshll.u32 %v816, 16
        %v878 = vor.u32 %v875, %v876
        %v879 = vsel %vm827, %v871, %v878
        %v881 = vshrl.u32 %v817, 16
        %v883 = vrot.slane %v881, 7
        %v884 = vrot.slane %v883, 4
        %v886 = vshrl.u32 %v818, 16
        %v888 = vrot.slane %v886, 7
        %v889 = vshll.u32 %v818, 16
        %v891 = vor.u32 %v888, %v889
        %v892 = vsel %vm827, %v884, %v891
        %v894 = vshrl.u32 %v819, 16
        %v896 = vrot.slane %v894, 7
        %v897 = vrot.slane %v896, 4
        %v899 = vshrl.u32 %v820, 16
        %v901 = vrot.slane %v899, 7
        %v902 = vshll.u32 %v820, 16
        %v904 = vor.u32 %v901, %v902
        %v905 = vsel %vm827, %v897, %v904
        %v907 = vshrl.u32 %v821, 16
        %v909 = vrot.slane %v907, 7
        %v910 = vrot.slane %v909, 4
        %v912 = vshrl.u32 %v822, 16
        %v914 = vrot.slane %v912, 7
        %v915 = vshll.u32 %v822, 16
        %v917 = vor.u32 %v914, %v915
        %v918 = vsel %vm827, %v910, %v917
        %v920 = vshrl.u32 %v823, 16
        %v922 = vrot.slane %v920, 7
        %v923 = vrot.slane %v922, 4
        %v925 = vshrl.u32 %v824, 16
        %v927 = vrot.slane %v925, 7
        %v928 = vshll.u32 %v824, 16
        %v930 = vor.u32 %v927, %v928
        %v931 = vsel %vm827, %v923, %v930
        %v932 = vld [vmem:[%s3] sm:$0xf]
        %v933 = vld [vmem:[%s3 + $0x4] sm:$0xf]
        %v934 = vld [vmem:[%s3 + $0x8] sm:$0xf]
        %v935 = vld [vmem:[%s3 + $0xc] sm:$0xf]
        %v936 = vld [vmem:[%s3 + $0x10] sm:$0xf]
        %v937 = vld [vmem:[%s3 + $0x14] sm:$0xf]
        %v938 = vld [vmem:[%s3 + $0x18] sm:$0xf]
        %v939 = vld [vmem:[%s3 + $0x1c] sm:$0xf]
        %v940 = vld [vmem:[%s3 + $0x20] sm:$0xf]
        %v941 = vld [vmem:[%s3 + $0x24] sm:$0xf]
        %v942 = vld [vmem:[%s3 + $0x28] sm:$0xf]
        %v943 = vld [vmem:[%s3 + $0x2c] sm:$0xf]
        %s944 = scalar_lea.vmem %s3, 48
        %v945 = vld [vmem:[%s944] sm:$0xf]
        %v946 = vld [vmem:[%s944 + $0x4] sm:$0xf]
        %v947 = vld [vmem:[%s944 + $0x8] sm:$0xf]
        %v948 = vld [vmem:[%s944 + $0xc] sm:$0xf]
        %v949 = vld [vmem:[%s944 + $0x10] sm:$0xf]
        %v950 = vld [vmem:[%s944 + $0x14] sm:$0xf]
        %v951 = vld [vmem:[%s944 + $0x18] sm:$0xf]
        %v952 = vld [vmem:[%s944 + $0x1c] sm:$0xf]
        %v953 = vld [vmem:[%s944 + $0x20] sm:$0xf]
        %v954 = vld [vmem:[%s944 + $0x24] sm:$0xf]
        %v955 = vld [vmem:[%s944 + $0x28] sm:$0xf]
        %v956 = vld [vmem:[%s944 + $0x2c] sm:$0xf]
        %v965 = vunpack.c.l.b16 %v810
        %v966 = vunpack.c.l.b16 %v812
        %v967 = vunpack.c.l.b16 %v814
        %v968 = vunpack.c.l.b16 %v816
        %v969 = vunpack.c.l.b16 %v818
        %v970 = vunpack.c.l.b16 %v820
        %v971 = vunpack.c.l.b16 %v822
        %v972 = vunpack.c.l.b16 %v824
        %v973 = vpack.c.b16 %v966, %v965
        %v974 = vpack.c.b16 %v968, %v967
        %v975 = vpack.c.b16 %v970, %v969
        %v976 = vpack.c.b16 %v972, %v971
        %v989 = vunpack.c.l.b16 %v945
        %v990 = vunpack.c.l.b16 %v946
        %v991 = vunpack.c.l.b16 %v947
        %v992 = vunpack.c.l.b16 %v948
        %v993 = vunpack.c.l.b16 %v949
        %v994 = vunpack.c.l.b16 %v950
        %v995 = vunpack.c.l.b16 %v951
        %v996 = vunpack.c.l.b16 %v952
        %v997 = vunpack.c.l.b16 %v953
        %v998 = vunpack.c.l.b16 %v954
        %v999 = vunpack.c.l.b16 %v955
        %v1000 = vunpack.c.l.b16 %v956
        %v1001 = vpack.c.b16 %v990, %v989
        %v1002 = vpack.c.b16 %v992, %v991
        %v1003 = vpack.c.b16 %v994, %v993
        %v1004 = vpack.c.b16 %v996, %v995
        %v1005 = vpack.c.b16 %v998, %v997
        %v1006 = vpack.c.b16 %v1000, %v999
        %vm1013 = vcmask 785408
        %v1015 = vsel %vm1013, %v973, 0
        %v1018 = vsel %vm1013, %v974, 0
        %v1021 = vsel %vm1013, %v975, 0
        %v1024 = vsel %vm1013, %v976, 0
        %1026 = vmatprep.subr.bf16.mxu0 0
        %1027 = vmatpush1.bf16.msra.mxu0 %v1001
        %1028 = vmatprep.subr.bf16.mxu0 0
        %1029 = vmatpush1.bf16.msra.mxu0 %v1002
        %1030 = vmatprep.subr.bf16.mxu0 0
        %1031 = vmatpush1.bf16.msra.mxu0 %v1003
        %1032 = vmatprep.subr.bf16.mxu0 0
        %1033 = vmatpush1.bf16.msra.mxu0 %v1004
        %1034 = vmatprep.subr.bf16.mxu0 0
        %1035 = vmatpush1.bf16.msra.mxu0 %v1005
        %1036 = vmatprep.subr.bf16.mxu0 0
        %1037 = vmatpush1.bf16.msra.mxu0 %v1006
        %1038 = vmatprep.subr.bf16.mxu0 0
        %1039 = vmatpush1.bf16.msra.mxu0 0
        %1040 = vmatprep.subr.bf16.mxu0 0
        %1041 = vmatpush1.bf16.msra.mxu0 0
        %1042 = vmatprep.subr.bf16.mxu0 0
        %1043 = vmatpush1.bf16.msra.mxu0 0
        %1044 = vmatprep.subr.bf16.mxu0 0
        %1045 = vmatpush1.bf16.msra.mxu0 0
        %1046 = vmatprep.subr.bf16.mxu0 0
        %1047 = vmatpush1.bf16.msra.mxu0 0
        %1048 = vmatprep.subr.bf16.mxu0 0
        %1049 = vmatpush1.bf16.msra.mxu0 0
        %1050 = vmatprep.subr.bf16.mxu0 0
        %1051 = vmatpush1.bf16.msra.mxu0 0
        %1052 = vmatprep.subr.bf16.mxu0 0
        %1053 = vmatpush1.bf16.msra.mxu0 0
        %1054 = vmatprep.subr.bf16.mxu0 0
        %1055 = vmatpush1.bf16.msra.mxu0 0
        %1056 = vmatprep.subr.bf16.mxu0 0
        %1057 = vmatpush1.bf16.msra.mxu0 0
        %1058 = vmatprep.mubr.bf16.mxu0 0
        %1059 = vmatmul.mubr.bf16.gmra.mrb[0].mxu0 %v1015
        %v1060 = vpop.f32.mrb[0].mxu0
        %v1061 = vadd.f32 0.0, %v1060
        %v1062 = vpop.f32.mrb[0].mxu0
        %v1063 = vpop.f32.mrb[0].mxu0
        %v1064 = vadd.f32 0.0, %v1063
        %v1065 = vpop.f32.mrb[0].mxu0
        %1066 = vmatprep.mubr.bf16.mxu0 0
        %1067 = vmatmul.mubr.bf16.gmra.mrb[0].mxu0 %v1018
        %v1068 = vpop.f32.mrb[0].mxu0
        %v1069 = vadd.f32 0.0, %v1068
        %v1070 = vpop.f32.mrb[0].mxu0
        %v1071 = vpop.f32.mrb[0].mxu0
        %v1072 = vadd.f32 0.0, %v1071
        %v1073 = vpop.f32.mrb[0].mxu0
        %1074 = vmatprep.mubr.bf16.mxu0 0
        %1075 = vmatmul.mubr.bf16.gmra.mrb[0].mxu0 %v1021
        %v1076 = vpop.f32.mrb[0].mxu0
        %v1077 = vadd.f32 0.0, %v1076
        %v1078 = vpop.f32.mrb[0].mxu0
        %v1079 = vpop.f32.mrb[0].mxu0
        %v1080 = vadd.f32 0.0, %v1079
        %v1081 = vpop.f32.mrb[0].mxu0
        %1082 = vmatprep.mubr.bf16.mxu0 0
        %1083 = vmatmul.mubr.bf16.gmra.mrb[0].mxu0 %v1024
        %v1084 = vpop.f32.mrb[0].mxu0
        %v1085 = vadd.f32 0.0, %v1084
        %v1086 = vpop.f32.mrb[0].mxu0
        %v1087 = vpop.f32.mrb[0].mxu0
        %v1088 = vadd.f32 0.0, %v1087
        %v1089 = vpop.f32.mrb[0].mxu0
        %1090 = vdwg.mxu0
        %v1091 = vunpack.c.l.b16 %v840
        %v1092 = vunpack.c.l.b16 %v853
        %v1093 = vunpack.c.l.b16 %v866
        %v1094 = vunpack.c.l.b16 %v879
        %v1095 = vunpack.c.l.b16 %v892
        %v1096 = vunpack.c.l.b16 %v905
        %v1097 = vunpack.c.l.b16 %v918
        %v1098 = vunpack.c.l.b16 %v931
        %v1099 = vpack.c.b16 %v1092, %v1091
        %v1100 = vpack.c.b16 %v1094, %v1093
        %v1101 = vpack.c.b16 %v1096, %v1095
        %v1102 = vpack.c.b16 %v1098, %v1097
        %v1115 = vunpack.c.l.b16 %v932
        %v1116 = vunpack.c.l.b16 %v933
        %v1117 = vunpack.c.l.b16 %v934
        %v1118 = vunpack.c.l.b16 %v935
        %v1119 = vunpack.c.l.b16 %v936
        %v1120 = vunpack.c.l.b16 %v937
        %v1121 = vunpack.c.l.b16 %v938
        %v1122 = vunpack.c.l.b16 %v939
        %v1123 = vunpack.c.l.b16 %v940
        %v1124 = vunpack.c.l.b16 %v941
        %v1125 = vunpack.c.l.b16 %v942
        %v1126 = vunpack.c.l.b16 %v943
        %v1127 = vpack.c.b16 %v1116, %v1115
        %v1128 = vpack.c.b16 %v1118, %v1117
        %v1129 = vpack.c.b16 %v1120, %v1119
        %v1130 = vpack.c.b16 %v1122, %v1121
        %v1131 = vpack.c.b16 %v1124, %v1123
        %v1132 = vpack.c.b16 %v1126, %v1125
        %v1140 = vsel %vm1013, %v1099, 0
        %v1143 = vsel %vm1013, %v1100, 0
        %v1146 = vsel %vm1013, %v1101, 0
        %v1149 = vsel %vm1013, %v1102, 0
        %1151 = vmatprep.subr.bf16.mxu0 0
        %1152 = vmatpush1.bf16.msra.mxu0 %v1127
        %1153 = vmatprep.subr.bf16.mxu0 0
        %1154 = vmatpush1.bf16.msra.mxu0 %v1128
        %1155 = vmatprep.subr.bf16.mxu0 0
        %1156 = vmatpush1.bf16.msra.mxu0 %v1129
        %1157 = vmatprep.subr.bf16.mxu0 0
        %1158 = vmatpush1.bf16.msra.mxu0 %v1130
        %1159 = vmatprep.subr.bf16.mxu0 0
        %1160 = vmatpush1.bf16.msra.mxu0 %v1131
        %1161 = vmatprep.subr.bf16.mxu0 0
        %1162 = vmatpush1.bf16.msra.mxu0 %v1132
        %1163 = vmatprep.subr.bf16.mxu0 0
        %1164 = vmatpush1.bf16.msra.mxu0 0
        %1165 = vmatprep.subr.bf16.mxu0 0
        %1166 = vmatpush1.bf16.msra.mxu0 0
        %1167 = vmatprep.subr.bf16.mxu0 0
        %1168 = vmatpush1.bf16.msra.mxu0 0
        %1169 = vmatprep.subr.bf16.mxu0 0
        %1170 = vmatpush1.bf16.msra.mxu0 0
        %1171 = vmatprep.subr.bf16.mxu0 0
        %1172 = vmatpush1.bf16.msra.mxu0 0
        %1173 = vmatprep.subr.bf16.mxu0 0
        %1174 = vmatpush1.bf16.msra.mxu0 0
        %1175 = vmatprep.subr.bf16.mxu0 0
        %1176 = vmatpush1.bf16.msra.mxu0 0
        %1177 = vmatprep.subr.bf16.mxu0 0
        %1178 = vmatpush1.bf16.msra.mxu0 0
        %1179 = vmatprep.subr.bf16.mxu0 0
        %1180 = vmatpush1.bf16.msra.mxu0 0
        %1181 = vmatprep.subr.bf16.mxu0 0
        %1182 = vmatpush1.bf16.msra.mxu0 0
        %1183 = vmatprep.mubr.bf16.mxu0 0
        %1184 = vmatmul.mubr.bf16.gmra.mrb[0].mxu0 %v1140
        %v1185 = vpop.f32.mrb[0].mxu0
        %v1186 = vadd.f32 %v1061, %v1185
        %v1187 = vpop.f32.mrb[0].mxu0
        %v1188 = vpop.f32.mrb[0].mxu0
        %v1189 = vadd.f32 %v1064, %v1188
        %v1190 = vpop.f32.mrb[0].mxu0
        %1191 = vmatprep.mubr.bf16.mxu0 0
        %1192 = vmatmul.mubr.bf16.gmra.mrb[0].mxu0 %v1143
        %v1193 = vpop.f32.mrb[0].mxu0
        %v1194 = vadd.f32 %v1069, %v1193
        %v1195 = vpop.f32.mrb[0].mxu0
        %v1196 = vpop.f32.mrb[0].mxu0
        %v1197 = vadd.f32 %v1072, %v1196
        %v1198 = vpop.f32.mrb[0].mxu0
        %1199 = vmatprep.mubr.bf16.mxu0 0
        %1200 = vmatmul.mubr.bf16.gmra.mrb[0].mxu0 %v1146
        %v1201 = vpop.f32.mrb[0].mxu0
        %v1202 = vadd.f32 %v1077, %v1201
        %v1203 = vpop.f32.mrb[0].mxu0
        %v1204 = vpop.f32.mrb[0].mxu0
        %v1205 = vadd.f32 %v1080, %v1204
        %v1206 = vpop.f32.mrb[0].mxu0
        %1207 = vmatprep.mubr.bf16.mxu0 0
        %1208 = vmatmul.mubr.bf16.gmra.mrb[0].mxu0 %v1149
        %v1209 = vpop.f32.mrb[0].mxu0
        %v1210 = vadd.f32 %v1085, %v1209
        %v1211 = vpop.f32.mrb[0].mxu0
        %v1212 = vpop.f32.mrb[0].mxu0
        %v1213 = vadd.f32 %v1088, %v1212
        %v1214 = vpop.f32.mrb[0].mxu0
        %1215 = vdwg.mxu0
        %v1216 = vld [vmem:[#allocation2 + $0x4] sm:$0xf]
        %v1217 = vld [vmem:[#allocation2 + $0x8] sm:$0x1]
        %v1218 = vld [vmem:[#allocation2 + $0x10] sm:$0xf]
        %v1219 = vld [vmem:[#allocation2 + $0x14] sm:$0x1]
        %v1220 = vld [vmem:[#allocation2 + $0x1c] sm:$0xf]
        %v1221 = vld [vmem:[#allocation2 + $0x20] sm:$0x1]
        %v1222 = vld [vmem:[#allocation2 + $0x28] sm:$0xf]
        %v1223 = vld [vmem:[#allocation2 + $0x2c] sm:$0x1]
        %v1224 = vld [vmem:[#allocation2 + $0x34] sm:$0xf]
        %v1225 = vld [vmem:[#allocation2 + $0x38] sm:$0x1]
        %v1226 = vld [vmem:[#allocation2 + $0x40] sm:$0xf]
        %v1227 = vld [vmem:[#allocation2 + $0x44] sm:$0x1]
        %v1228 = vld [vmem:[#allocation2 + $0x4c] sm:$0xf]
        %v1229 = vld [vmem:[#allocation2 + $0x50] sm:$0x1]
        %v1230 = vld [vmem:[#allocation2 + $0x58] sm:$0xf]
        %v1231 = vld [vmem:[#allocation2 + $0x5c] sm:$0x1]
        %vm1232 = vsmask.f32 3328
        %vm1233 = vsmask.f32 7440
        %vm1234 = vmor %vm1232, %vm1233
        %v1236 = vshrl.u32 %v1216, 16
        %v1238 = vrot.slane %v1236, 4
        %v1239 = vshll.u32 %v1216, 16
        %v1241 = vrot.slane %v1239, 5
        %v1242 = vor.u32 %v1238, %v1241
        %v1243 = vrot.slane %v1242, 4
        %v1245 = vshll.u32 %v1217, 16
        %v1247 = vrot.slane %v1245, 5
        %v1248 = vsel %vm1234, %v1243, %v1247
        %v1250 = vshrl.u32 %v1218, 16
        %v1252 = vrot.slane %v1250, 4
        %v1253 = vshll.u32 %v1218, 16
        %v1255 = vrot.slane %v1253, 5
        %v1256 = vor.u32 %v1252, %v1255
        %v1257 = vrot.slane %v1256, 4
        %v1259 = vshll.u32 %v1219, 16
        %v1261 = vrot.slane %v1259, 5
        %v1262 = vsel %vm1234, %v1257, %v1261
        %v1264 = vshrl.u32 %v1220, 16
        %v1266 = vrot.slane %v1264, 4
        %v1267 = vshll.u32 %v1220, 16
        %v1269 = vrot.slane %v1267, 5
        %v1270 = vor.u32 %v1266, %v1269
        %v1271 = vrot.slane %v1270, 4
        %v1273 = vshll.u32 %v1221, 16
        %v1275 = vrot.slane %v1273, 5
        %v1276 = vsel %vm1234, %v1271, %v1275
        %v1278 = vshrl.u32 %v1222, 16
        %v1280 = vrot.slane %v1278, 4
        %v1281 = vshll.u32 %v1222, 16
        %v1283 = vrot.slane %v1281, 5
        %v1284 = vor.u32 %v1280, %v1283
        %v1285 = vrot.slane %v1284, 4
        %v1287 = vshll.u32 %v1223, 16
        %v1289 = vrot.slane %v1287, 5
        %v1290 = vsel %vm1234, %v1285, %v1289
        %v1292 = vshrl.u32 %v1224, 16
        %v1294 = vrot.slane %v1292, 4
        %v1295 = vshll.u32 %v1224, 16
        %v1297 = vrot.slane %v1295, 5
        %v1298 = vor.u32 %v1294, %v1297
        %v1299 = vrot.slane %v1298, 4
        %v1301 = vshll.u32 %v1225, 16
        %v1303 = vrot.slane %v1301, 5
        %v1304 = vsel %vm1234, %v1299, %v1303
        %v1306 = vshrl.u32 %v1226, 16
        %v1308 = vrot.slane %v1306, 4
        %v1309 = vshll.u32 %v1226, 16
        %v1311 = vrot.slane %v1309, 5
        %v1312 = vor.u32 %v1308, %v1311
        %v1313 = vrot.slane %v1312, 4
        %v1315 = vshll.u32 %v1227, 16
        %v1317 = vrot.slane %v1315, 5
        %v1318 = vsel %vm1234, %v1313, %v1317
        %v1320 = vshrl.u32 %v1228, 16
        %v1322 = vrot.slane %v1320, 4
        %v1323 = vshll.u32 %v1228, 16
        %v1325 = vrot.slane %v1323, 5
        %v1326 = vor.u32 %v1322, %v1325
        %v1327 = vrot.slane %v1326, 4
        %v1329 = vshll.u32 %v1229, 16
        %v1331 = vrot.slane %v1329, 5
        %v1332 = vsel %vm1234, %v1327, %v1331
        %v1334 = vshrl.u32 %v1230, 16
        %v1336 = vrot.slane %v1334, 4
        %v1337 = vshll.u32 %v1230, 16
        %v1339 = vrot.slane %v1337, 5
        %v1340 = vor.u32 %v1336, %v1339
        %v1341 = vrot.slane %v1340, 4
        %v1343 = vshll.u32 %v1231, 16
        %v1345 = vrot.slane %v1343, 5
        %v1346 = vsel %vm1234, %v1341, %v1345
        %s1347 = scalar_lea.vmem %s3, 96
        %v1348 = vld [vmem:[%s1347] sm:$0xf]
        %v1349 = vld [vmem:[%s1347 + $0x4] sm:$0xf]
        %v1350 = vld [vmem:[%s1347 + $0x8] sm:$0xf]
        %v1351 = vld [vmem:[%s1347 + $0xc] sm:$0xf]
        %v1352 = vld [vmem:[%s1347 + $0x10] sm:$0xf]
        %v1353 = vld [vmem:[%s1347 + $0x14] sm:$0xf]
        %v1354 = vld [vmem:[%s1347 + $0x18] sm:$0xf]
        %v1355 = vld [vmem:[%s1347 + $0x1c] sm:$0xf]
        %v1356 = vld [vmem:[%s1347 + $0x20] sm:$0xf]
        %v1357 = vld [vmem:[%s1347 + $0x24] sm:$0xf]
        %v1358 = vld [vmem:[%s1347 + $0x28] sm:$0xf]
        %v1359 = vld [vmem:[%s1347 + $0x2c] sm:$0xf]
        %v1360 = vunpack.c.l.b16 %v1248
        %v1361 = vunpack.c.l.b16 %v1262
        %v1362 = vunpack.c.l.b16 %v1276
        %v1363 = vunpack.c.l.b16 %v1290
        %v1364 = vunpack.c.l.b16 %v1304
        %v1365 = vunpack.c.l.b16 %v1318
        %v1366 = vunpack.c.l.b16 %v1332
        %v1367 = vunpack.c.l.b16 %v1346
        %v1368 = vpack.c.b16 %v1361, %v1360
        %v1369 = vpack.c.b16 %v1363, %v1362
        %v1370 = vpack.c.b16 %v1365, %v1364
        %v1371 = vpack.c.b16 %v1367, %v1366
        %v1384 = vunpack.c.l.b16 %v1348
        %v1385 = vunpack.c.l.b16 %v1349
        %v1386 = vunpack.c.l.b16 %v1350
        %v1387 = vunpack.c.l.b16 %v1351
        %v1388 = vunpack.c.l.b16 %v1352
        %v1389 = vunpack.c.l.b16 %v1353
        %v1390 = vunpack.c.l.b16 %v1354
        %v1391 = vunpack.c.l.b16 %v1355
        %v1392 = vunpack.c.l.b16 %v1356
        %v1393 = vunpack.c.l.b16 %v1357
        %v1394 = vunpack.c.l.b16 %v1358
        %v1395 = vunpack.c.l.b16 %v1359
        %v1396 = vpack.c.b16 %v1385, %v1384
        %v1397 = vpack.c.b16 %v1387, %v1386
        %v1398 = vpack.c.b16 %v1389, %v1388
        %v1399 = vpack.c.b16 %v1391, %v1390
        %v1400 = vpack.c.b16 %v1393, %v1392
        %v1401 = vpack.c.b16 %v1395, %v1394
        %v1409 = vsel %vm1013, %v1368, 0
        %v1412 = vsel %vm1013, %v1369, 0
        %v1415 = vsel %vm1013, %v1370, 0
        %v1418 = vsel %vm1013, %v1371, 0
        %1420 = vmatprep.subr.bf16.mxu0 0
        %1421 = vmatpush1.bf16.msra.mxu0 %v1396
        %1422 = vmatprep.subr.bf16.mxu0 0
        %1423 = vmatpush1.bf16.msra.mxu0 %v1397
        %1424 = vmatprep.subr.bf16.mxu0 0
        %1425 = vmatpush1.bf16.msra.mxu0 %v1398
        %1426 = vmatprep.subr.bf16.mxu0 0
        %1427 = vmatpush1.bf16.msra.mxu0 %v1399
        %1428 = vmatprep.subr.bf16.mxu0 0
        %1429 = vmatpush1.bf16.msra.mxu0 %v1400
        %1430 = vmatprep.subr.bf16.mxu0 0
        %1431 = vmatpush1.bf16.msra.mxu0 %v1401
        %1432 = vmatprep.subr.bf16.mxu0 0
        %1433 = vmatpush1.bf16.msra.mxu0 0
        %1434 = vmatprep.subr.bf16.mxu0 0
        %1435 = vmatpush1.bf16.msra.mxu0 0
        %1436 = vmatprep.subr.bf16.mxu0 0
        %1437 = vmatpush1.bf16.msra.mxu0 0
        %1438 = vmatprep.subr.bf16.mxu0 0
        %1439 = vmatpush1.bf16.msra.mxu0 0
        %1440 = vmatprep.subr.bf16.mxu0 0
        %1441 = vmatpush1.bf16.msra.mxu0 0
        %1442 = vmatprep.subr.bf16.mxu0 0
        %1443 = vmatpush1.bf16.msra.mxu0 0
        %1444 = vmatprep.subr.bf16.mxu0 0
        %1445 = vmatpush1.bf16.msra.mxu0 0
        %1446 = vmatprep.subr.bf16.mxu0 0
        %1447 = vmatpush1.bf16.msra.mxu0 0
        %1448 = vmatprep.subr.bf16.mxu0 0
        %1449 = vmatpush1.bf16.msra.mxu0 0
        %1450 = vmatprep.subr.bf16.mxu0 0
        %1451 = vmatpush1.bf16.msra.mxu0 0
        %1452 = vmatprep.mubr.bf16.mxu0 0
        %1453 = vmatmul.mubr.bf16.gmra.mrb[0].mxu0 %v1409
        %v1454 = vpop.f32.mrb[0].mxu0
        %v1455 = vadd.f32 0.0, %v1454
        %v1456 = vpop.f32.mrb[0].mxu0
        %v1457 = vpop.f32.mrb[0].mxu0
        %v1458 = vadd.f32 0.0, %v1457
        %v1459 = vpop.f32.mrb[0].mxu0
        %1460 = vmatprep.mubr.bf16.mxu0 0
        %1461 = vmatmul.mubr.bf16.gmra.mrb[0].mxu0 %v1412
        %v1462 = vpop.f32.mrb[0].mxu0
        %v1463 = vadd.f32 0.0, %v1462
        %v1464 = vpop.f32.mrb[0].mxu0
        %v1465 = vpop.f32.mrb[0].mxu0
        %v1466 = vadd.f32 0.0, %v1465
        %v1467 = vpop.f32.mrb[0].mxu0
        %1468 = vmatprep.mubr.bf16.mxu0 0
        %1469 = vmatmul.mubr.bf16.gmra.mrb[0].mxu0 %v1415
        %v1470 = vpop.f32.mrb[0].mxu0
        %v1471 = vadd.f32 0.0, %v1470
        %v1472 = vpop.f32.mrb[0].mxu0
        %v1473 = vpop.f32.mrb[0].mxu0
        %v1474 = vadd.f32 0.0, %v1473
        %v1475 = vpop.f32.mrb[0].mxu0
        %1476 = vmatprep.mubr.bf16.mxu0 0
        %1477 = vmatmul.mubr.bf16.gmra.mrb[0].mxu0 %v1418
        %v1478 = vpop.f32.mrb[0].mxu0
        %v1479 = vadd.f32 0.0, %v1478
        %v1480 = vpop.f32.mrb[0].mxu0
        %v1481 = vpop.f32.mrb[0].mxu0
        %v1482 = vadd.f32 0.0, %v1481
        %v1483 = vpop.f32.mrb[0].mxu0
        %1484 = vdwg.mxu0
        %v1485 = vadd.f32 %v1186, %v1455
        %v1486 = vadd.f32 %v1189, %v1458
        %v1487 = vadd.f32 %v1194, %v1463
        %v1488 = vadd.f32 %v1197, %v1466
        %v1489 = vadd.f32 %v1202, %v1471
        %v1490 = vadd.f32 %v1205, %v1474
        %v1491 = vadd.f32 %v1210, %v1479
        %v1492 = vadd.f32 %v1213, %v1482
        %v1493 = vld [vmem:[%s800] sm:$0x8]
        %v1494 = vld [vmem:[%s800 + $0x4] sm:$0xf]
        %v1495 = vld [vmem:[%s800 + $0xc] sm:$0x8]
        %v1496 = vld [vmem:[%s800 + $0x10] sm:$0xf]
        %v1497 = vld [vmem:[%s800 + $0x18] sm:$0x8]
        %v1498 = vld [vmem:[%s800 + $0x1c] sm:$0xf]
        %v1499 = vld [vmem:[%s800 + $0x24] sm:$0x8]
        %v1500 = vld [vmem:[%s800 + $0x28] sm:$0xf]
        %v1501 = vld [vmem:[%s800 + $0x30] sm:$0x8]
        %v1502 = vld [vmem:[%s800 + $0x34] sm:$0xf]
        %v1503 = vld [vmem:[%s800 + $0x3c] sm:$0x8]
        %v1504 = vld [vmem:[%s800 + $0x40] sm:$0xf]
        %v1505 = vld [vmem:[%s800 + $0x48] sm:$0x8]
        %v1506 = vld [vmem:[%s800 + $0x4c] sm:$0xf]
        %v1507 = vld [vmem:[%s800 + $0x54] sm:$0x8]
        %v1508 = vld [vmem:[%s800 + $0x58] sm:$0xf]
        %v1510 = vshrl.u32 %v1493, 16
        %v1512 = vrot.slane %v1510, 7
        %v1513 = vrot.slane %v1512, 4
        %v1515 = vshrl.u32 %v1494, 16
        %v1517 = vrot.slane %v1515, 7
        %v1518 = vshll.u32 %v1494, 16
        %v1520 = vor.u32 %v1517, %v1518
        %v1521 = vsel %vm827, %v1513, %v1520
        %v1523 = vshrl.u32 %v1495, 16
        %v1525 = vrot.slane %v1523, 7
        %v1526 = vrot.slane %v1525, 4
        %v1528 = vshrl.u32 %v1496, 16
        %v1530 = vrot.slane %v1528, 7
        %v1531 = vshll.u32 %v1496, 16
        %v1533 = vor.u32 %v1530, %v1531
        %v1534 = vsel %vm827, %v1526, %v1533
        %v1536 = vshrl.u32 %v1497, 16
        %v1538 = vrot.slane %v1536, 7
        %v1539 = vrot.slane %v1538, 4
        %v1541 = vshrl.u32 %v1498, 16
        %v1543 = vrot.slane %v1541, 7
        %v1544 = vshll.u32 %v1498, 16
        %v1546 = vor.u32 %v1543, %v1544
        %v1547 = vsel %vm827, %v1539, %v1546
        %v1549 = vshrl.u32 %v1499, 16
        %v1551 = vrot.slane %v1549, 7
        %v1552 = vrot.slane %v1551, 4
        %v1554 = vshrl.u32 %v1500, 16
        %v1556 = vrot.slane %v1554, 7
        %v1557 = vshll.u32 %v1500, 16
        %v1559 = vor.u32 %v1556, %v1557
        %v1560 = vsel %vm827, %v1552, %v1559
        %v1562 = vshrl.u32 %v1501, 16
        %v1564 = vrot.slane %v1562, 7
        %v1565 = vrot.slane %v1564, 4
        %v1567 = vshrl.u32 %v1502, 16
        %v1569 = vrot.slane %v1567, 7
        %v1570 = vshll.u32 %v1502, 16
        %v1572 = vor.u32 %v1569, %v1570
        %v1573 = vsel %vm827, %v1565, %v1572
        %v1575 = vshrl.u32 %v1503, 16
        %v1577 = vrot.slane %v1575, 7
        %v1578 = vrot.slane %v1577, 4
        %v1580 = vshrl.u32 %v1504, 16
        %v1582 = vrot.slane %v1580, 7
        %v1583 = vshll.u32 %v1504, 16
        %v1585 = vor.u32 %v1582, %v1583
        %v1586 = vsel %vm827, %v1578, %v1585
        %v1588 = vshrl.u32 %v1505, 16
        %v1590 = vrot.slane %v1588, 7
        %v1591 = vrot.slane %v1590, 4
        %v1593 = vshrl.u32 %v1506, 16
        %v1595 = vrot.slane %v1593, 7
        %v1596 = vshll.u32 %v1506, 16
        %v1598 = vor.u32 %v1595, %v1596
        %v1599 = vsel %vm827, %v1591, %v1598
        %v1601 = vshrl.u32 %v1507, 16
        %v1603 = vrot.slane %v1601, 7
        %v1604 = vrot.slane %v1603, 4
        %v1606 = vshrl.u32 %v1508, 16
        %v1608 = vrot.slane %v1606, 7
        %v1609 = vshll.u32 %v1508, 16
        %v1611 = vor.u32 %v1608, %v1609
        %v1612 = vsel %vm827, %v1604, %v1611
        %s1613 = scalar_lea.vmem %s3, 144
        %v1614 = vld [vmem:[%s1613] sm:$0xf]
        %v1615 = vld [vmem:[%s1613 + $0x4] sm:$0xf]
        %v1616 = vld [vmem:[%s1613 + $0x8] sm:$0xf]
        %v1617 = vld [vmem:[%s1613 + $0xc] sm:$0xf]
        %v1618 = vld [vmem:[%s1613 + $0x10] sm:$0xf]
        %v1619 = vld [vmem:[%s1613 + $0x14] sm:$0xf]
        %v1620 = vld [vmem:[%s1613 + $0x18] sm:$0xf]
        %v1621 = vld [vmem:[%s1613 + $0x1c] sm:$0xf]
        %v1622 = vld [vmem:[%s1613 + $0x20] sm:$0xf]
        %v1623 = vld [vmem:[%s1613 + $0x24] sm:$0xf]
        %v1624 = vld [vmem:[%s1613 + $0x28] sm:$0xf]
        %v1625 = vld [vmem:[%s1613 + $0x2c] sm:$0xf]
        %v1626 = vunpack.c.l.b16 %v1521
        %v1627 = vunpack.c.l.b16 %v1534
        %v1628 = vunpack.c.l.b16 %v1547
        %v1629 = vunpack.c.l.b16 %v1560
        %v1630 = vunpack.c.l.b16 %v1573
        %v1631 = vunpack.c.l.b16 %v1586
        %v1632 = vunpack.c.l.b16 %v1599
        %v1633 = vunpack.c.l.b16 %v1612
        %v1634 = vpack.c.b16 %v1627, %v1626
        %v1635 = vpack.c.b16 %v1629, %v1628
        %v1636 = vpack.c.b16 %v1631, %v1630
        %v1637 = vpack.c.b16 %v1633, %v1632
        %v1650 = vunpack.c.l.b16 %v1614
        %v1651 = vunpack.c.l.b16 %v1615
        %v1652 = vunpack.c.l.b16 %v1616
        %v1653 = vunpack.c.l.b16 %v1617
        %v1654 = vunpack.c.l.b16 %v1618
        %v1655 = vunpack.c.l.b16 %v1619
        %v1656 = vunpack.c.l.b16 %v1620
        %v1657 = vunpack.c.l.b16 %v1621
        %v1658 = vunpack.c.l.b16 %v1622
        %v1659 = vunpack.c.l.b16 %v1623
        %v1660 = vunpack.c.l.b16 %v1624
        %v1661 = vunpack.c.l.b16 %v1625
        %v1662 = vpack.c.b16 %v1651, %v1650
        %v1663 = vpack.c.b16 %v1653, %v1652
        %v1664 = vpack.c.b16 %v1655, %v1654
        %v1665 = vpack.c.b16 %v1657, %v1656
        %v1666 = vpack.c.b16 %v1659, %v1658
        %v1667 = vpack.c.b16 %v1661, %v1660
        %v1675 = vsel %vm1013, %v1634, 0
        %v1678 = vsel %vm1013, %v1635, 0
        %v1681 = vsel %vm1013, %v1636, 0
        %v1684 = vsel %vm1013, %v1637, 0
        %1686 = vmatprep.subr.bf16.mxu0 0
        %1687 = vmatpush1.bf16.msra.mxu0 %v1662
        %1688 = vmatprep.subr.bf16.mxu0 0
        %1689 = vmatpush1.bf16.msra.mxu0 %v1663
        %1690 = vmatprep.subr.bf16.mxu0 0
        %1691 = vmatpush1.bf16.msra.mxu0 %v1664
        %1692 = vmatprep.subr.bf16.mxu0 0
        %1693 = vmatpush1.bf16.msra.mxu0 %v1665
        %1694 = vmatprep.subr.bf16.mxu0 0
        %1695 = vmatpush1.bf16.msra.mxu0 %v1666
        %1696 = vmatprep.subr.bf16.mxu0 0
        %1697 = vmatpush1.bf16.msra.mxu0 %v1667
        %1698 = vmatprep.subr.bf16.mxu0 0
        %1699 = vmatpush1.bf16.msra.mxu0 0
        %1700 = vmatprep.subr.bf16.mxu0 0
        %1701 = vmatpush1.bf16.msra.mxu0 0
        %1702 = vmatprep.subr.bf16.mxu0 0
        %1703 = vmatpush1.bf16.msra.mxu0 0
        %1704 = vmatprep.subr.bf16.mxu0 0
        %1705 = vmatpush1.bf16.msra.mxu0 0
        %1706 = vmatprep.subr.bf16.mxu0 0
        %1707 = vmatpush1.bf16.msra.mxu0 0
        %1708 = vmatprep.subr.bf16.mxu0 0
        %1709 = vmatpush1.bf16.msra.mxu0 0
        %1710 = vmatprep.subr.bf16.mxu0 0
        %1711 = vmatpush1.bf16.msra.mxu0 0
        %1712 = vmatprep.subr.bf16.mxu0 0
        %1713 = vmatpush1.bf16.msra.mxu0 0
        %1714 = vmatprep.subr.bf16.mxu0 0
        %1715 = vmatpush1.bf16.msra.mxu0 0
        %1716 = vmatprep.subr.bf16.mxu0 0
        %1717 = vmatpush1.bf16.msra.mxu0 0
        %1718 = vmatprep.mubr.bf16.mxu0 0
        %1719 = vmatmul.mubr.bf16.gmra.mrb[0].mxu0 %v1675
        %v1720 = vpop.f32.mrb[0].mxu0
        %v1721 = vadd.f32 0.0, %v1720
        %v1722 = vpop.f32.mrb[0].mxu0
        %v1723 = vpop.f32.mrb[0].mxu0
        %v1724 = vadd.f32 0.0, %v1723
        %v1725 = vpop.f32.mrb[0].mxu0
        %1726 = vmatprep.mubr.bf16.mxu0 0
        %1727 = vmatmul.mubr.bf16.gmra.mrb[0].mxu0 %v1678
        %v1728 = vpop.f32.mrb[0].mxu0
        %v1729 = vadd.f32 0.0, %v1728
        %v1730 = vpop.f32.mrb[0].mxu0
        %v1731 = vpop.f32.mrb[0].mxu0
        %v1732 = vadd.f32 0.0, %v1731
        %v1733 = vpop.f32.mrb[0].mxu0
        %1734 = vmatprep.mubr.bf16.mxu0 0
        %1735 = vmatmul.mubr.bf16.gmra.mrb[0].mxu0 %v1681
        %v1736 = vpop.f32.mrb[0].mxu0
        %v1737 = vadd.f32 0.0, %v1736
        %v1738 = vpop.f32.mrb[0].mxu0
        %v1739 = vpop.f32.mrb[0].mxu0
        %v1740 = vadd.f32 0.0, %v1739
        %v1741 = vpop.f32.mrb[0].mxu0
        %1742 = vmatprep.mubr.bf16.mxu0 0
        %1743 = vmatmul.mubr.bf16.gmra.mrb[0].mxu0 %v1684
        %v1744 = vpop.f32.mrb[0].mxu0
        %v1745 = vadd.f32 0.0, %v1744
        %v1746 = vpop.f32.mrb[0].mxu0
        %v1747 = vpop.f32.mrb[0].mxu0
        %v1748 = vadd.f32 0.0, %v1747
        %v1749 = vpop.f32.mrb[0].mxu0
        %1750 = vdwg.mxu0
        %v1751 = vadd.f32 %v1485, %v1721
        %v1752 = vadd.f32 %v1486, %v1724
        %v1753 = vadd.f32 %v1487, %v1729
        %v1754 = vadd.f32 %v1488, %v1732
        %v1755 = vadd.f32 %v1489, %v1737
        %v1756 = vadd.f32 %v1490, %v1740
        %v1757 = vadd.f32 %v1491, %v1745
        %v1758 = vadd.f32 %v1492, %v1748
        %s1759 = scalar_lea.vmem %s3, 192
        %v1760 = vld [vmem:[%s1759] sm:$0xf]
        %v1761 = vld [vmem:[%s1759 + $0x4] sm:$0xf]
        %v1762 = vld [vmem:[%s1759 + $0x8] sm:$0xf]
        %v1763 = vld [vmem:[%s1759 + $0xc] sm:$0xf]
        %v1764 = vld [vmem:[%s1759 + $0x10] sm:$0xf]
        %v1765 = vld [vmem:[%s1759 + $0x14] sm:$0xf]
        %v1766 = vld [vmem:[%s1759 + $0x18] sm:$0xf]
        %v1767 = vld [vmem:[%s1759 + $0x1c] sm:$0xf]
        %v1768 = vld [vmem:[%s1759 + $0x20] sm:$0xf]
        %v1769 = vld [vmem:[%s1759 + $0x24] sm:$0xf]
        %v1770 = vld [vmem:[%s1759 + $0x28] sm:$0xf]
        %v1771 = vld [vmem:[%s1759 + $0x2c] sm:$0xf]
        %v1780 = vunpack.c.l.b16 %v1494
        %v1781 = vunpack.c.l.b16 %v1496
        %v1782 = vunpack.c.l.b16 %v1498
        %v1783 = vunpack.c.l.b16 %v1500
        %v1784 = vunpack.c.l.b16 %v1502
        %v1785 = vunpack.c.l.b16 %v1504
        %v1786 = vunpack.c.l.b16 %v1506
        %v1787 = vunpack.c.l.b16 %v1508
        %v1788 = vpack.c.b16 %v1781, %v1780
        %v1789 = vpack.c.b16 %v1783, %v1782
        %v1790 = vpack.c.b16 %v1785, %v1784
        %v1791 = vpack.c.b16 %v1787, %v1786
        %v1804 = vunpack.c.l.b16 %v1760
        %v1805 = vunpack.c.l.b16 %v1761
        %v1806 = vunpack.c.l.b16 %v1762
        %v1807 = vunpack.c.l.b16 %v1763
        %v1808 = vunpack.c.l.b16 %v1764
        %v1809 = vunpack.c.l.b16 %v1765
        %v1810 = vunpack.c.l.b16 %v1766
        %v1811 = vunpack.c.l.b16 %v1767
        %v1812 = vunpack.c.l.b16 %v1768
        %v1813 = vunpack.c.l.b16 %v1769
        %v1814 = vunpack.c.l.b16 %v1770
        %v1815 = vunpack.c.l.b16 %v1771
        %v1816 = vpack.c.b16 %v1805, %v1804
        %v1817 = vpack.c.b16 %v1807, %v1806
        %v1818 = vpack.c.b16 %v1809, %v1808
        %v1819 = vpack.c.b16 %v1811, %v1810
        %v1820 = vpack.c.b16 %v1813, %v1812
        %v1821 = vpack.c.b16 %v1815, %v1814
        %v1829 = vsel %vm1013, %v1788, 0
        %v1832 = vsel %vm1013, %v1789, 0
        %v1835 = vsel %vm1013, %v1790, 0
        %v1838 = vsel %vm1013, %v1791, 0
        %1840 = vmatprep.subr.bf16.mxu0 0
        %1841 = vmatpush1.bf16.msra.mxu0 %v1816
        %1842 = vmatprep.subr.bf16.mxu0 0
        %1843 = vmatpush1.bf16.msra.mxu0 %v1817
        %1844 = vmatprep.subr.bf16.mxu0 0
        %1845 = vmatpush1.bf16.msra.mxu0 %v1818
        %1846 = vmatprep.subr.bf16.mxu0 0
        %1847 = vmatpush1.bf16.msra.mxu0 %v1819
        %1848 = vmatprep.subr.bf16.mxu0 0
        %1849 = vmatpush1.bf16.msra.mxu0 %v1820
        %1850 = vmatprep.subr.bf16.mxu0 0
        %1851 = vmatpush1.bf16.msra.mxu0 %v1821
        %1852 = vmatprep.subr.bf16.mxu0 0
        %1853 = vmatpush1.bf16.msra.mxu0 0
        %1854 = vmatprep.subr.bf16.mxu0 0
        %1855 = vmatpush1.bf16.msra.mxu0 0
        %1856 = vmatprep.subr.bf16.mxu0 0
        %1857 = vmatpush1.bf16.msra.mxu0 0
        %1858 = vmatprep.subr.bf16.mxu0 0
        %1859 = vmatpush1.bf16.msra.mxu0 0
        %1860 = vmatprep.subr.bf16.mxu0 0
        %1861 = vmatpush1.bf16.msra.mxu0 0
        %1862 = vmatprep.subr.bf16.mxu0 0
        %1863 = vmatpush1.bf16.msra.mxu0 0
        %1864 = vmatprep.subr.bf16.mxu0 0
        %1865 = vmatpush1.bf16.msra.mxu0 0
        %1866 = vmatprep.subr.bf16.mxu0 0
        %1867 = vmatpush1.bf16.msra.mxu0 0
        %1868 = vmatprep.subr.bf16.mxu0 0
        %1869 = vmatpush1.bf16.msra.mxu0 0
        %1870 = vmatprep.subr.bf16.mxu0 0
        %1871 = vmatpush1.bf16.msra.mxu0 0
        %1872 = vmatprep.mubr.bf16.mxu0 0
        %1873 = vmatmul.mubr.bf16.gmra.mrb[0].mxu0 %v1829
        %v1874 = vpop.f32.mrb[0].mxu0
        %v1875 = vadd.f32 0.0, %v1874
        %v1876 = vpop.f32.mrb[0].mxu0
        %v1877 = vpop.f32.mrb[0].mxu0
        %v1878 = vadd.f32 0.0, %v1877
        %v1879 = vpop.f32.mrb[0].mxu0
        %1880 = vmatprep.mubr.bf16.mxu0 0
        %1881 = vmatmul.mubr.bf16.gmra.mrb[0].mxu0 %v1832
        %v1882 = vpop.f32.mrb[0].mxu0
        %v1883 = vadd.f32 0.0, %v1882
        %v1884 = vpop.f32.mrb[0].mxu0
        %v1885 = vpop.f32.mrb[0].mxu0
        %v1886 = vadd.f32 0.0, %v1885
        %v1887 = vpop.f32.mrb[0].mxu0
        %1888 = vmatprep.mubr.bf16.mxu0 0
        %1889 = vmatmul.mubr.bf16.gmra.mrb[0].mxu0 %v1835
        %v1890 = vpop.f32.mrb[0].mxu0
        %v1891 = vadd.f32 0.0, %v1890
        %v1892 = vpop.f32.mrb[0].mxu0
        %v1893 = vpop.f32.mrb[0].mxu0
        %v1894 = vadd.f32 0.0, %v1893
        %v1895 = vpop.f32.mrb[0].mxu0
        %1896 = vmatprep.mubr.bf16.mxu0 0
        %1897 = vmatmul.mubr.bf16.gmra.mrb[0].mxu0 %v1838
        %v1898 = vpop.f32.mrb[0].mxu0
        %v1899 = vadd.f32 0.0, %v1898
        %v1900 = vpop.f32.mrb[0].mxu0
        %v1901 = vpop.f32.mrb[0].mxu0
        %v1902 = vadd.f32 0.0, %v1901
        %v1903 = vpop.f32.mrb[0].mxu0
        %1904 = vdwg.mxu0
        %v1905 = vadd.f32 %v1751, %v1875
        %v1906 = vadd.f32 %v1752, %v1878
        %v1907 = vadd.f32 %v1753, %v1883
        %v1908 = vadd.f32 %v1754, %v1886
        %v1909 = vadd.f32 %v1755, %v1891
        %v1910 = vadd.f32 %v1756, %v1894
        %v1911 = vadd.f32 %v1757, %v1899
        %v1912 = vadd.f32 %v1758, %v1902
        %v1913 = vld [vmem:[%s800 + $0x4] sm:$0xf]
        %v1914 = vld [vmem:[%s800 + $0x8] sm:$0x1]
        %v1915 = vld [vmem:[%s800 + $0x10] sm:$0xf]
        %v1916 = vld [vmem:[%s800 + $0x14] sm:$0x1]
        %v1917 = vld [vmem:[%s800 + $0x1c] sm:$0xf]
        %v1918 = vld [vmem:[%s800 + $0x20] sm:$0x1]
        %v1919 = vld [vmem:[%s800 + $0x28] sm:$0xf]
        %v1920 = vld [vmem:[%s800 + $0x2c] sm:$0x1]
        %v1921 = vld [vmem:[%s800 + $0x34] sm:$0xf]
        %v1922 = vld [vmem:[%s800 + $0x38] sm:$0x1]
        %v1923 = vld [vmem:[%s800 + $0x40] sm:$0xf]
        %v1924 = vld [vmem:[%s800 + $0x44] sm:$0x1]
        %v1925 = vld [vmem:[%s800 + $0x4c] sm:$0xf]
        %v1926 = vld [vmem:[%s800 + $0x50] sm:$0x1]
        %v1927 = vld [vmem:[%s800 + $0x58] sm:$0xf]
        %v1928 = vld [vmem:[%s800 + $0x5c] sm:$0x1]
        %v1930 = vshrl.u32 %v1913, 16
        %v1932 = vrot.slane %v1930, 4
        %v1933 = vshll.u32 %v1913, 16
        %v1935 = vrot.slane %v1933, 5
        %v1936 = vor.u32 %v1932, %v1935
        %v1937 = vrot.slane %v1936, 4
        %v1939 = vshll.u32 %v1914, 16
        %v1941 = vrot.slane %v1939, 5
        %v1942 = vsel %vm1234, %v1937, %v1941
        %v1944 = vshrl.u32 %v1915, 16
        %v1946 = vrot.slane %v1944, 4
        %v1947 = vshll.u32 %v1915, 16
        %v1949 = vrot.slane %v1947, 5
        %v1950 = vor.u32 %v1946, %v1949
        %v1951 = vrot.slane %v1950, 4
        %v1953 = vshll.u32 %v1916, 16
        %v1955 = vrot.slane %v1953, 5
        %v1956 = vsel %vm1234, %v1951, %v1955
        %v1958 = vshrl.u32 %v1917, 16
        %v1960 = vrot.slane %v1958, 4
        %v1961 = vshll.u32 %v1917, 16
        %v1963 = vrot.slane %v1961, 5
        %v1964 = vor.u32 %v1960, %v1963
        %v1965 = vrot.slane %v1964, 4
        %v1967 = vshll.u32 %v1918, 16
        %v1969 = vrot.slane %v1967, 5
        %v1970 = vsel %vm1234, %v1965, %v1969
        %v1972 = vshrl.u32 %v1919, 16
        %v1974 = vrot.slane %v1972, 4
        %v1975 = vshll.u32 %v1919, 16
        %v1977 = vrot.slane %v1975, 5
        %v1978 = vor.u32 %v1974, %v1977
        %v1979 = vrot.slane %v1978, 4
        %v1981 = vshll.u32 %v1920, 16
        %v1983 = vrot.slane %v1981, 5
        %v1984 = vsel %vm1234, %v1979, %v1983
        %v1986 = vshrl.u32 %v1921, 16
        %v1988 = vrot.slane %v1986, 4
        %v1989 = vshll.u32 %v1921, 16
        %v1991 = vrot.slane %v1989, 5
        %v1992 = vor.u32 %v1988, %v1991
        %v1993 = vrot.slane %v1992, 4
        %v1995 = vshll.u32 %v1922, 16
        %v1997 = vrot.slane %v1995, 5
        %v1998 = vsel %vm1234, %v1993, %v1997
        %v2000 = vshrl.u32 %v1923, 16
        %v2002 = vrot.slane %v2000, 4
        %v2003 = vshll.u32 %v1923, 16
        %v2005 = vrot.slane %v2003, 5
        %v2006 = vor.u32 %v2002, %v2005
        %v2007 = vrot.slane %v2006, 4
        %v2009 = vshll.u32 %v1924, 16
        %v2011 = vrot.slane %v2009, 5
        %v2012 = vsel %vm1234, %v2007, %v2011
        %v2014 = vshrl.u32 %v1925, 16
        %v2016 = vrot.slane %v2014, 4
        %v2017 = vshll.u32 %v1925, 16
        %v2019 = vrot.slane %v2017, 5
        %v2020 = vor.u32 %v2016, %v2019
        %v2021 = vrot.slane %v2020, 4
        %v2023 = vshll.u32 %v1926, 16
        %v2025 = vrot.slane %v2023, 5
        %v2026 = vsel %vm1234, %v2021, %v2025
        %v2028 = vshrl.u32 %v1927, 16
        %v2030 = vrot.slane %v2028, 4
        %v2031 = vshll.u32 %v1927, 16
        %v2033 = vrot.slane %v2031, 5
        %v2034 = vor.u32 %v2030, %v2033
        %v2035 = vrot.slane %v2034, 4
        %v2037 = vshll.u32 %v1928, 16
        %v2039 = vrot.slane %v2037, 5
        %v2040 = vsel %vm1234, %v2035, %v2039
        %s2041 = scalar_lea.vmem %s3, 240
        %v2042 = vld [vmem:[%s2041] sm:$0xf]
        %v2043 = vld [vmem:[%s2041 + $0x4] sm:$0xf]
        %v2044 = vld [vmem:[%s2041 + $0x8] sm:$0xf]
        %v2045 = vld [vmem:[%s2041 + $0xc] sm:$0xf]
        %v2046 = vld [vmem:[%s2041 + $0x10] sm:$0xf]
        %v2047 = vld [vmem:[%s2041 + $0x14] sm:$0xf]
        %v2048 = vld [vmem:[%s2041 + $0x18] sm:$0xf]
        %v2049 = vld [vmem:[%s2041 + $0x1c] sm:$0xf]
        %v2050 = vld [vmem:[%s2041 + $0x20] sm:$0xf]
        %v2051 = vld [vmem:[%s2041 + $0x24] sm:$0xf]
        %v2052 = vld [vmem:[%s2041 + $0x28] sm:$0xf]
        %v2053 = vld [vmem:[%s2041 + $0x2c] sm:$0xf]
        %v2054 = vunpack.c.l.b16 %v1942
        %v2055 = vunpack.c.l.b16 %v1956
        %v2056 = vunpack.c.l.b16 %v1970
        %v2057 = vunpack.c.l.b16 %v1984
        %v2058 = vunpack.c.l.b16 %v1998
        %v2059 = vunpack.c.l.b16 %v2012
        %v2060 = vunpack.c.l.b16 %v2026
        %v2061 = vunpack.c.l.b16 %v2040
        %v2062 = vpack.c.b16 %v2055, %v2054
        %v2063 = vpack.c.b16 %v2057, %v2056
        %v2064 = vpack.c.b16 %v2059, %v2058
        %v2065 = vpack.c.b16 %v2061, %v2060
        %v2078 = vunpack.c.l.b16 %v2042
        %v2079 = vunpack.c.l.b16 %v2043
        %v2080 = vunpack.c.l.b16 %v2044
        %v2081 = vunpack.c.l.b16 %v2045
        %v2082 = vunpack.c.l.b16 %v2046
        %v2083 = vunpack.c.l.b16 %v2047
        %v2084 = vunpack.c.l.b16 %v2048
        %v2085 = vunpack.c.l.b16 %v2049
        %v2086 = vunpack.c.l.b16 %v2050
        %v2087 = vunpack.c.l.b16 %v2051
        %v2088 = vunpack.c.l.b16 %v2052
        %v2089 = vunpack.c.l.b16 %v2053
        %v2090 = vpack.c.b16 %v2079, %v2078
        %v2091 = vpack.c.b16 %v2081, %v2080
        %v2092 = vpack.c.b16 %v2083, %v2082
        %v2093 = vpack.c.b16 %v2085, %v2084
        %v2094 = vpack.c.b16 %v2087, %v2086
        %v2095 = vpack.c.b16 %v2089, %v2088
        %v2103 = vsel %vm1013, %v2062, 0
        %v2106 = vsel %vm1013, %v2063, 0
        %v2109 = vsel %vm1013, %v2064, 0
        %v2112 = vsel %vm1013, %v2065, 0
        %2114 = vmatprep.subr.bf16.mxu0 0
        %2115 = vmatpush1.bf16.msra.mxu0 %v2090
        %2116 = vmatprep.subr.bf16.mxu0 0
        %2117 = vmatpush1.bf16.msra.mxu0 %v2091
        %2118 = vmatprep.subr.bf16.mxu0 0
        %2119 = vmatpush1.bf16.msra.mxu0 %v2092
        %2120 = vmatprep.subr.bf16.mxu0 0
        %2121 = vmatpush1.bf16.msra.mxu0 %v2093
        %2122 = vmatprep.subr.bf16.mxu0 0
        %2123 = vmatpush1.bf16.msra.mxu0 %v2094
        %2124 = vmatprep.subr.bf16.mxu0 0
        %2125 = vmatpush1.bf16.msra.mxu0 %v2095
        %2126 = vmatprep.subr.bf16.mxu0 0
        %2127 = vmatpush1.bf16.msra.mxu0 0
        %2128 = vmatprep.subr.bf16.mxu0 0
        %2129 = vmatpush1.bf16.msra.mxu0 0
        %2130 = vmatprep.subr.bf16.mxu0 0
        %2131 = vmatpush1.bf16.msra.mxu0 0
        %2132 = vmatprep.subr.bf16.mxu0 0
        %2133 = vmatpush1.bf16.msra.mxu0 0
        %2134 = vmatprep.subr.bf16.mxu0 0
        %2135 = vmatpush1.bf16.msra.mxu0 0
        %2136 = vmatprep.subr.bf16.mxu0 0
        %2137 = vmatpush1.bf16.msra.mxu0 0
        %2138 = vmatprep.subr.bf16.mxu0 0
        %2139 = vmatpush1.bf16.msra.mxu0 0
        %2140 = vmatprep.subr.bf16.mxu0 0
        %2141 = vmatpush1.bf16.msra.mxu0 0
        %2142 = vmatprep.subr.bf16.mxu0 0
        %2143 = vmatpush1.bf16.msra.mxu0 0
        %2144 = vmatprep.subr.bf16.mxu0 0
        %2145 = vmatpush1.bf16.msra.mxu0 0
        %2146 = vmatprep.mubr.bf16.mxu0 0
        %2147 = vmatmul.mubr.bf16.gmra.mrb[0].mxu0 %v2103
        %v2148 = vpop.f32.mrb[0].mxu0
        %v2149 = vadd.f32 0.0, %v2148
        %v2150 = vpop.f32.mrb[0].mxu0
        %v2151 = vpop.f32.mrb[0].mxu0
        %v2152 = vadd.f32 0.0, %v2151
        %v2153 = vpop.f32.mrb[0].mxu0
        %2154 = vmatprep.mubr.bf16.mxu0 0
        %2155 = vmatmul.mubr.bf16.gmra.mrb[0].mxu0 %v2106
        %v2156 = vpop.f32.mrb[0].mxu0
        %v2157 = vadd.f32 0.0, %v2156
        %v2158 = vpop.f32.mrb[0].mxu0
        %v2159 = vpop.f32.mrb[0].mxu0
        %v2160 = vadd.f32 0.0, %v2159
        %v2161 = vpop.f32.mrb[0].mxu0
        %2162 = vmatprep.mubr.bf16.mxu0 0
        %2163 = vmatmul.mubr.bf16.gmra.mrb[0].mxu0 %v2109
        %v2164 = vpop.f32.mrb[0].mxu0
        %v2165 = vadd.f32 0.0, %v2164
        %v2166 = vpop.f32.mrb[0].mxu0
        %v2167 = vpop.f32.mrb[0].mxu0
        %v2168 = vadd.f32 0.0, %v2167
        %v2169 = vpop.f32.mrb[0].mxu0
        %2170 = vmatprep.mubr.bf16.mxu0 0
        %2171 = vmatmul.mubr.bf16.gmra.mrb[0].mxu0 %v2112
        %v2172 = vpop.f32.mrb[0].mxu0
        %v2173 = vadd.f32 0.0, %v2172
        %v2174 = vpop.f32.mrb[0].mxu0
        %v2175 = vpop.f32.mrb[0].mxu0
        %v2176 = vadd.f32 0.0, %v2175
        %v2177 = vpop.f32.mrb[0].mxu0
        %2178 = vdwg.mxu0
        %v2179 = vadd.f32 %v1905, %v2149
        %v2180 = vadd.f32 %v1906, %v2152
        %v2181 = vadd.f32 %v1907, %v2157
        %v2182 = vadd.f32 %v1908, %v2160
        %v2183 = vadd.f32 %v1909, %v2165
        %v2184 = vadd.f32 %v1910, %v2168
        %v2185 = vadd.f32 %v1911, %v2173
        %v2186 = vadd.f32 %v1912, %v2176
        %s2187 = scalar_lea.vmem [#allocation2], 24
        %v2188 = vld [vmem:[%s2187] sm:$0x8]
        %v2189 = vld [vmem:[%s2187 + $0x4] sm:$0xf]
        %v2190 = vld [vmem:[%s2187 + $0xc] sm:$0x8]
        %v2191 = vld [vmem:[%s2187 + $0x10] sm:$0xf]
        %v2192 = vld [vmem:[%s2187 + $0x18] sm:$0x8]
        %v2193 = vld [vmem:[%s2187 + $0x1c] sm:$0xf]
        %v2194 = vld [vmem:[%s2187 + $0x24] sm:$0x8]
        %v2195 = vld [vmem:[%s2187 + $0x28] sm:$0xf]
        %v2196 = vld [vmem:[%s2187 + $0x30] sm:$0x8]
        %v2197 = vld [vmem:[%s2187 + $0x34] sm:$0xf]
        %v2198 = vld [vmem:[%s2187 + $0x3c] sm:$0x8]
        %v2199 = vld [vmem:[%s2187 + $0x40] sm:$0xf]
        %v2200 = vld [vmem:[%s2187 + $0x48] sm:$0x8]
        %v2201 = vld [vmem:[%s2187 + $0x4c] sm:$0xf]
        %v2202 = vld [vmem:[%s2187 + $0x54] sm:$0x8]
        %v2203 = vld [vmem:[%s2187 + $0x58] sm:$0xf]
        %v2205 = vshrl.u32 %v2188, 16
        %v2207 = vrot.slane %v2205, 7
        %v2208 = vrot.slane %v2207, 4
        %v2210 = vshrl.u32 %v2189, 16
        %v2212 = vrot.slane %v2210, 7
        %v2213 = vshll.u32 %v2189, 16
        %v2215 = vor.u32 %v2212, %v2213
        %v2216 = vsel %vm827, %v2208, %v2215
        %v2218 = vshrl.u32 %v2190, 16
        %v2220 = vrot.slane %v2218, 7
        %v2221 = vrot.slane %v2220, 4
        %v2223 = vshrl.u32 %v2191, 16
        %v2225 = vrot.slane %v2223, 7
        %v2226 = vshll.u32 %v2191, 16
        %v2228 = vor.u32 %v2225, %v2226
        %v2229 = vsel %vm827, %v2221, %v2228
        %v2231 = vshrl.u32 %v2192, 16
        %v2233 = vrot.slane %v2231, 7
        %v2234 = vrot.slane %v2233, 4
        %v2236 = vshrl.u32 %v2193, 16
        %v2238 = vrot.slane %v2236, 7
        %v2239 = vshll.u32 %v2193, 16
        %v2241 = vor.u32 %v2238, %v2239
        %v2242 = vsel %vm827, %v2234, %v2241
        %v2244 = vshrl.u32 %v2194, 16
        %v2246 = vrot.slane %v2244, 7
        %v2247 = vrot.slane %v2246, 4
        %v2249 = vshrl.u32 %v2195, 16
        %v2251 = vrot.slane %v2249, 7
        %v2252 = vshll.u32 %v2195, 16
        %v2254 = vor.u32 %v2251, %v2252
        %v2255 = vsel %vm827, %v2247, %v2254
        %v2257 = vshrl.u32 %v2196, 16
        %v2259 = vrot.slane %v2257, 7
        %v2260 = vrot.slane %v2259, 4
        %v2262 = vshrl.u32 %v2197, 16
        %v2264 = vrot.slane %v2262, 7
        %v2265 = vshll.u32 %v2197, 16
        %v2267 = vor.u32 %v2264, %v2265
        %v2268 = vsel %vm827, %v2260, %v2267
        %v2270 = vshrl.u32 %v2198, 16
        %v2272 = vrot.slane %v2270, 7
        %v2273 = vrot.slane %v2272, 4
        %v2275 = vshrl.u32 %v2199, 16
        %v2277 = vrot.slane %v2275, 7
        %v2278 = vshll.u32 %v2199, 16
        %v2280 = vor.u32 %v2277, %v2278
        %v2281 = vsel %vm827, %v2273, %v2280
        %v2283 = vshrl.u32 %v2200, 16
        %v2285 = vrot.slane %v2283, 7
        %v2286 = vrot.slane %v2285, 4
        %v2288 = vshrl.u32 %v2201, 16
        %v2290 = vrot.slane %v2288, 7
        %v2291 = vshll.u32 %v2201, 16
        %v2293 = vor.u32 %v2290, %v2291
        %v2294 = vsel %vm827, %v2286, %v2293
        %v2296 = vshrl.u32 %v2202, 16
        %v2298 = vrot.slane %v2296, 7
        %v2299 = vrot.slane %v2298, 4
        %v2301 = vshrl.u32 %v2203, 16
        %v2303 = vrot.slane %v2301, 7
        %v2304 = vshll.u32 %v2203, 16
        %v2306 = vor.u32 %v2303, %v2304
        %v2307 = vsel %vm827, %v2299, %v2306
        %s2308 = scalar_lea.vmem %s3, 288
        %v2309 = vld [vmem:[%s2308] sm:$0xf]
        %v2310 = vld [vmem:[%s2308 + $0x4] sm:$0xf]
        %v2311 = vld [vmem:[%s2308 + $0x8] sm:$0xf]
        %v2312 = vld [vmem:[%s2308 + $0xc] sm:$0xf]
        %v2313 = vld [vmem:[%s2308 + $0x10] sm:$0xf]
        %v2314 = vld [vmem:[%s2308 + $0x14] sm:$0xf]
        %v2315 = vld [vmem:[%s2308 + $0x18] sm:$0xf]
        %v2316 = vld [vmem:[%s2308 + $0x1c] sm:$0xf]
        %v2317 = vld [vmem:[%s2308 + $0x20] sm:$0xf]
        %v2318 = vld [vmem:[%s2308 + $0x24] sm:$0xf]
        %v2319 = vld [vmem:[%s2308 + $0x28] sm:$0xf]
        %v2320 = vld [vmem:[%s2308 + $0x2c] sm:$0xf]
        %v2321 = vunpack.c.l.b16 %v2216
        %v2322 = vunpack.c.l.b16 %v2229
        %v2323 = vunpack.c.l.b16 %v2242
        %v2324 = vunpack.c.l.b16 %v2255
        %v2325 = vunpack.c.l.b16 %v2268
        %v2326 = vunpack.c.l.b16 %v2281
        %v2327 = vunpack.c.l.b16 %v2294
        %v2328 = vunpack.c.l.b16 %v2307
        %v2329 = vpack.c.b16 %v2322, %v2321
        %v2330 = vpack.c.b16 %v2324, %v2323
        %v2331 = vpack.c.b16 %v2326, %v2325
        %v2332 = vpack.c.b16 %v2328, %v2327
        %v2345 = vunpack.c.l.b16 %v2309
        %v2346 = vunpack.c.l.b16 %v2310
        %v2347 = vunpack.c.l.b16 %v2311
        %v2348 = vunpack.c.l.b16 %v2312
        %v2349 = vunpack.c.l.b16 %v2313
        %v2350 = vunpack.c.l.b16 %v2314
        %v2351 = vunpack.c.l.b16 %v2315
        %v2352 = vunpack.c.l.b16 %v2316
        %v2353 = vunpack.c.l.b16 %v2317
        %v2354 = vunpack.c.l.b16 %v2318
        %v2355 = vunpack.c.l.b16 %v2319
        %v2356 = vunpack.c.l.b16 %v2320
        %v2357 = vpack.c.b16 %v2346, %v2345
        %v2358 = vpack.c.b16 %v2348, %v2347
        %v2359 = vpack.c.b16 %v2350, %v2349
        %v2360 = vpack.c.b16 %v2352, %v2351
        %v2361 = vpack.c.b16 %v2354, %v2353
        %v2362 = vpack.c.b16 %v2356, %v2355
        %v2370 = vsel %vm1013, %v2329, 0
        %v2373 = vsel %vm1013, %v2330, 0
        %v2376 = vsel %vm1013, %v2331, 0
        %v2379 = vsel %vm1013, %v2332, 0
        %2381 = vmatprep.subr.bf16.mxu0 0
        %2382 = vmatpush1.bf16.msra.mxu0 %v2357
        %2383 = vmatprep.subr.bf16.mxu0 0
        %2384 = vmatpush1.bf16.msra.mxu0 %v2358
        %2385 = vmatprep.subr.bf16.mxu0 0
        %2386 = vmatpush1.bf16.msra.mxu0 %v2359
        %2387 = vmatprep.subr.bf16.mxu0 0
        %2388 = vmatpush1.bf16.msra.mxu0 %v2360
        %2389 = vmatprep.subr.bf16.mxu0 0
        %2390 = vmatpush1.bf16.msra.mxu0 %v2361
        %2391 = vmatprep.subr.bf16.mxu0 0
        %2392 = vmatpush1.bf16.msra.mxu0 %v2362
        %2393 = vmatprep.subr.bf16.mxu0 0
        %2394 = vmatpush1.bf16.msra.mxu0 0
        %2395 = vmatprep.subr.bf16.mxu0 0
        %2396 = vmatpush1.bf16.msra.mxu0 0
        %2397 = vmatprep.subr.bf16.mxu0 0
        %2398 = vmatpush1.bf16.msra.mxu0 0
        %2399 = vmatprep.subr.bf16.mxu0 0
        %2400 = vmatpush1.bf16.msra.mxu0 0
        %2401 = vmatprep.subr.bf16.mxu0 0
        %2402 = vmatpush1.bf16.msra.mxu0 0
        %2403 = vmatprep.subr.bf16.mxu0 0
        %2404 = vmatpush1.bf16.msra.mxu0 0
        %2405 = vmatprep.subr.bf16.mxu0 0
        %2406 = vmatpush1.bf16.msra.mxu0 0
        %2407 = vmatprep.subr.bf16.mxu0 0
        %2408 = vmatpush1.bf16.msra.mxu0 0
        %2409 = vmatprep.subr.bf16.mxu0 0
        %2410 = vmatpush1.bf16.msra.mxu0 0
        %2411 = vmatprep.subr.bf16.mxu0 0
        %2412 = vmatpush1.bf16.msra.mxu0 0
        %2413 = vmatprep.mubr.bf16.mxu0 0
        %2414 = vmatmul.mubr.bf16.gmra.mrb[0].mxu0 %v2370
        %v2415 = vpop.f32.mrb[0].mxu0
        %v2416 = vadd.f32 0.0, %v2415
        %v2417 = vpop.f32.mrb[0].mxu0
        %v2418 = vpop.f32.mrb[0].mxu0
        %v2419 = vadd.f32 0.0, %v2418
        %v2420 = vpop.f32.mrb[0].mxu0
        %2421 = vmatprep.mubr.bf16.mxu0 0
        %2422 = vmatmul.mubr.bf16.gmra.mrb[0].mxu0 %v2373
        %v2423 = vpop.f32.mrb[0].mxu0
        %v2424 = vadd.f32 0.0, %v2423
        %v2425 = vpop.f32.mrb[0].mxu0
        %v2426 = vpop.f32.mrb[0].mxu0
        %v2427 = vadd.f32 0.0, %v2426
        %v2428 = vpop.f32.mrb[0].mxu0
        %2429 = vmatprep.mubr.bf16.mxu0 0
        %2430 = vmatmul.mubr.bf16.gmra.mrb[0].mxu0 %v2376
        %v2431 = vpop.f32.mrb[0].mxu0
        %v2432 = vadd.f32 0.0, %v2431
        %v2433 = vpop.f32.mrb[0].mxu0
        %v2434 = vpop.f32.mrb[0].mxu0
        %v2435 = vadd.f32 0.0, %v2434
        %v2436 = vpop.f32.mrb[0].mxu0
        %2437 = vmatprep.mubr.bf16.mxu0 0
        %2438 = vmatmul.mubr.bf16.gmra.mrb[0].mxu0 %v2379
        %v2439 = vpop.f32.mrb[0].mxu0
        %v2440 = vadd.f32 0.0, %v2439
        %v2441 = vpop.f32.mrb[0].mxu0
        %v2442 = vpop.f32.mrb[0].mxu0
        %v2443 = vadd.f32 0.0, %v2442
        %v2444 = vpop.f32.mrb[0].mxu0
        %2445 = vdwg.mxu0
        %v2446 = vadd.f32 %v2179, %v2416
        %v2447 = vadd.f32 %v2180, %v2419
        %v2448 = vadd.f32 %v2181, %v2424
        %v2449 = vadd.f32 %v2182, %v2427
        %v2450 = vadd.f32 %v2183, %v2432
        %v2451 = vadd.f32 %v2184, %v2435
        %v2452 = vadd.f32 %v2185, %v2440
        %v2453 = vadd.f32 %v2186, %v2443
        %s2454 = scalar_lea.vmem %s3, 336
        %v2455 = vld [vmem:[%s2454] sm:$0xf]
        %v2456 = vld [vmem:[%s2454 + $0x4] sm:$0xf]
        %v2457 = vld [vmem:[%s2454 + $0x8] sm:$0xf]
        %v2458 = vld [vmem:[%s2454 + $0xc] sm:$0xf]
        %v2459 = vld [vmem:[%s2454 + $0x10] sm:$0xf]
        %v2460 = vld [vmem:[%s2454 + $0x14] sm:$0xf]
        %v2461 = vld [vmem:[%s2454 + $0x18] sm:$0xf]
        %v2462 = vld [vmem:[%s2454 + $0x1c] sm:$0xf]
        %v2463 = vld [vmem:[%s2454 + $0x20] sm:$0xf]
        %v2464 = vld [vmem:[%s2454 + $0x24] sm:$0xf]
        %v2465 = vld [vmem:[%s2454 + $0x28] sm:$0xf]
        %v2466 = vld [vmem:[%s2454 + $0x2c] sm:$0xf]
        %v2475 = vunpack.c.l.b16 %v2189
        %v2476 = vunpack.c.l.b16 %v2191
        %v2477 = vunpack.c.l.b16 %v2193
        %v2478 = vunpack.c.l.b16 %v2195
        %v2479 = vunpack.c.l.b16 %v2197
        %v2480 = vunpack.c.l.b16 %v2199
        %v2481 = vunpack.c.l.b16 %v2201
        %v2482 = vunpack.c.l.b16 %v2203
        %v2483 = vpack.c.b16 %v2476, %v2475
        %v2484 = vpack.c.b16 %v2478, %v2477
        %v2485 = vpack.c.b16 %v2480, %v2479
        %v2486 = vpack.c.b16 %v2482, %v2481
        %v2499 = vunpack.c.l.b16 %v2455
        %v2500 = vunpack.c.l.b16 %v2456
        %v2501 = vunpack.c.l.b16 %v2457
        %v2502 = vunpack.c.l.b16 %v2458
        %v2503 = vunpack.c.l.b16 %v2459
        %v2504 = vunpack.c.l.b16 %v2460
        %v2505 = vunpack.c.l.b16 %v2461
        %v2506 = vunpack.c.l.b16 %v2462
        %v2507 = vunpack.c.l.b16 %v2463
        %v2508 = vunpack.c.l.b16 %v2464
        %v2509 = vunpack.c.l.b16 %v2465
        %v2510 = vunpack.c.l.b16 %v2466
        %v2511 = vpack.c.b16 %v2500, %v2499
        %v2512 = vpack.c.b16 %v2502, %v2501
        %v2513 = vpack.c.b16 %v2504, %v2503
        %v2514 = vpack.c.b16 %v2506, %v2505
        %v2515 = vpack.c.b16 %v2508, %v2507
        %v2516 = vpack.c.b16 %v2510, %v2509
        %v2524 = vsel %vm1013, %v2483, 0
        %v2527 = vsel %vm1013, %v2484, 0
        %v2530 = vsel %vm1013, %v2485, 0
        %v2533 = vsel %vm1013, %v2486, 0
        %2535 = vmatprep.subr.bf16.mxu0 0
        %2536 = vmatpush1.bf16.msra.mxu0 %v2511
        %2537 = vmatprep.subr.bf16.mxu0 0
        %2538 = vmatpush1.bf16.msra.mxu0 %v2512
        %2539 = vmatprep.subr.bf16.mxu0 0
        %2540 = vmatpush1.bf16.msra.mxu0 %v2513
        %2541 = vmatprep.subr.bf16.mxu0 0
        %2542 = vmatpush1.bf16.msra.mxu0 %v2514
        %2543 = vmatprep.subr.bf16.mxu0 0
        %2544 = vmatpush1.bf16.msra.mxu0 %v2515
        %2545 = vmatprep.subr.bf16.mxu0 0
        %2546 = vmatpush1.bf16.msra.mxu0 %v2516
        %2547 = vmatprep.subr.bf16.mxu0 0
        %2548 = vmatpush1.bf16.msra.mxu0 0
        %2549 = vmatprep.subr.bf16.mxu0 0
        %2550 = vmatpush1.bf16.msra.mxu0 0
        %2551 = vmatprep.subr.bf16.mxu0 0
        %2552 = vmatpush1.bf16.msra.mxu0 0
        %2553 = vmatprep.subr.bf16.mxu0 0
        %2554 = vmatpush1.bf16.msra.mxu0 0
        %2555 = vmatprep.subr.bf16.mxu0 0
        %2556 = vmatpush1.bf16.msra.mxu0 0
        %2557 = vmatprep.subr.bf16.mxu0 0
        %2558 = vmatpush1.bf16.msra.mxu0 0
        %2559 = vmatprep.subr.bf16.mxu0 0
        %2560 = vmatpush1.bf16.msra.mxu0 0
        %2561 = vmatprep.subr.bf16.mxu0 0
        %2562 = vmatpush1.bf16.msra.mxu0 0
        %2563 = vmatprep.subr.bf16.mxu0 0
        %2564 = vmatpush1.bf16.msra.mxu0 0
        %2565 = vmatprep.subr.bf16.mxu0 0
        %2566 = vmatpush1.bf16.msra.mxu0 0
        %2567 = vmatprep.mubr.bf16.mxu0 0
        %2568 = vmatmul.mubr.bf16.gmra.mrb[0].mxu0 %v2524
        %v2569 = vpop.f32.mrb[0].mxu0
        %v2570 = vadd.f32 0.0, %v2569
        %v2571 = vpop.f32.mrb[0].mxu0
        %v2572 = vpop.f32.mrb[0].mxu0
        %v2573 = vadd.f32 0.0, %v2572
        %v2574 = vpop.f32.mrb[0].mxu0
        %2575 = vmatprep.mubr.bf16.mxu0 0
        %2576 = vmatmul.mubr.bf16.gmra.mrb[0].mxu0 %v2527
        %v2577 = vpop.f32.mrb[0].mxu0
        %v2578 = vadd.f32 0.0, %v2577
        %v2579 = vpop.f32.mrb[0].mxu0
        %v2580 = vpop.f32.mrb[0].mxu0
        %v2581 = vadd.f32 0.0, %v2580
        %v2582 = vpop.f32.mrb[0].mxu0
        %2583 = vmatprep.mubr.bf16.mxu0 0
        %2584 = vmatmul.mubr.bf16.gmra.mrb[0].mxu0 %v2530
        %v2585 = vpop.f32.mrb[0].mxu0
        %v2586 = vadd.f32 0.0, %v2585
        %v2587 = vpop.f32.mrb[0].mxu0
        %v2588 = vpop.f32.mrb[0].mxu0
        %v2589 = vadd.f32 0.0, %v2588
        %v2590 = vpop.f32.mrb[0].mxu0
        %2591 = vmatprep.mubr.bf16.mxu0 0
        %2592 = vmatmul.mubr.bf16.gmra.mrb[0].mxu0 %v2533
        %v2593 = vpop.f32.mrb[0].mxu0
        %v2594 = vadd.f32 0.0, %v2593
        %v2595 = vpop.f32.mrb[0].mxu0
        %v2596 = vpop.f32.mrb[0].mxu0
        %v2597 = vadd.f32 0.0, %v2596
        %v2598 = vpop.f32.mrb[0].mxu0
        %2599 = vdwg.mxu0
        %v2600 = vadd.f32 %v2446, %v2570
        %v2601 = vadd.f32 %v2447, %v2573
        %v2602 = vadd.f32 %v2448, %v2578
        %v2603 = vadd.f32 %v2449, %v2581
        %v2604 = vadd.f32 %v2450, %v2586
        %v2605 = vadd.f32 %v2451, %v2589
        %v2606 = vadd.f32 %v2452, %v2594
        %v2607 = vadd.f32 %v2453, %v2597
        %v2608 = vld [vmem:[%s2187 + $0x4] sm:$0xf]
        %v2609 = vld [vmem:[%s2187 + $0x8] sm:$0x1]
        %v2610 = vld [vmem:[%s2187 + $0x10] sm:$0xf]
        %v2611 = vld [vmem:[%s2187 + $0x14] sm:$0x1]
        %v2612 = vld [vmem:[%s2187 + $0x1c] sm:$0xf]
        %v2613 = vld [vmem:[%s2187 + $0x20] sm:$0x1]
        %v2614 = vld [vmem:[%s2187 + $0x28] sm:$0xf]
        %v2615 = vld [vmem:[%s2187 + $0x2c] sm:$0x1]
        %v2616 = vld [vmem:[%s2187 + $0x34] sm:$0xf]
        %v2617 = vld [vmem:[%s2187 + $0x38] sm:$0x1]
        %v2618 = vld [vmem:[%s2187 + $0x40] sm:$0xf]
        %v2619 = vld [vmem:[%s2187 + $0x44] sm:$0x1]
        %v2620 = vld [vmem:[%s2187 + $0x4c] sm:$0xf]
        %v2621 = vld [vmem:[%s2187 + $0x50] sm:$0x1]
        %v2622 = vld [vmem:[%s2187 + $0x58] sm:$0xf]
        %v2623 = vld [vmem:[%s2187 + $0x5c] sm:$0x1]
        %v2625 = vshrl.u32 %v2608, 16
        %v2627 = vrot.slane %v2625, 4
        %v2628 = vshll.u32 %v2608, 16
        %v2630 = vrot.slane %v2628, 5
        %v2631 = vor.u32 %v2627, %v2630
        %v2632 = vrot.slane %v2631, 4
        %v2634 = vshll.u32 %v2609, 16
        %v2636 = vrot.slane %v2634, 5
        %v2637 = vsel %vm1234, %v2632, %v2636
        %v2639 = vshrl.u32 %v2610, 16
        %v2641 = vrot.slane %v2639, 4
        %v2642 = vshll.u32 %v2610, 16
        %v2644 = vrot.slane %v2642, 5
        %v2645 = vor.u32 %v2641, %v2644
        %v2646 = vrot.slane %v2645, 4
        %v2648 = vshll.u32 %v2611, 16
        %v2650 = vrot.slane %v2648, 5
        %v2651 = vsel %vm1234, %v2646, %v2650
        %v2653 = vshrl.u32 %v2612, 16
        %v2655 = vrot.slane %v2653, 4
        %v2656 = vshll.u32 %v2612, 16
        %v2658 = vrot.slane %v2656, 5
        %v2659 = vor.u32 %v2655, %v2658
        %v2660 = vrot.slane %v2659, 4
        %v2662 = vshll.u32 %v2613, 16
        %v2664 = vrot.slane %v2662, 5
        %v2665 = vsel %vm1234, %v2660, %v2664
        %v2667 = vshrl.u32 %v2614, 16
        %v2669 = vrot.slane %v2667, 4
        %v2670 = vshll.u32 %v2614, 16
        %v2672 = vrot.slane %v2670, 5
        %v2673 = vor.u32 %v2669, %v2672
        %v2674 = vrot.slane %v2673, 4
        %v2676 = vshll.u32 %v2615, 16
        %v2678 = vrot.slane %v2676, 5
        %v2679 = vsel %vm1234, %v2674, %v2678
        %v2681 = vshrl.u32 %v2616, 16
        %v2683 = vrot.slane %v2681, 4
        %v2684 = vshll.u32 %v2616, 16
        %v2686 = vrot.slane %v2684, 5
        %v2687 = vor.u32 %v2683, %v2686
        %v2688 = vrot.slane %v2687, 4
        %v2690 = vshll.u32 %v2617, 16
        %v2692 = vrot.slane %v2690, 5
        %v2693 = vsel %vm1234, %v2688, %v2692
        %v2695 = vshrl.u32 %v2618, 16
        %v2697 = vrot.slane %v2695, 4
        %v2698 = vshll.u32 %v2618, 16
        %v2700 = vrot.slane %v2698, 5
        %v2701 = vor.u32 %v2697, %v2700
        %v2702 = vrot.slane %v2701, 4
        %v2704 = vshll.u32 %v2619, 16
        %v2706 = vrot.slane %v2704, 5
        %v2707 = vsel %vm1234, %v2702, %v2706
        %v2709 = vshrl.u32 %v2620, 16
        %v2711 = vrot.slane %v2709, 4
        %v2712 = vshll.u32 %v2620, 16
        %v2714 = vrot.slane %v2712, 5
        %v2715 = vor.u32 %v2711, %v2714
        %v2716 = vrot.slane %v2715, 4
        %v2718 = vshll.u32 %v2621, 16
        %v2720 = vrot.slane %v2718, 5
        %v2721 = vsel %vm1234, %v2716, %v2720
        %v2723 = vshrl.u32 %v2622, 16
        %v2725 = vrot.slane %v2723, 4
        %v2726 = vshll.u32 %v2622, 16
        %v2728 = vrot.slane %v2726, 5
        %v2729 = vor.u32 %v2725, %v2728
        %v2730 = vrot.slane %v2729, 4
        %v2732 = vshll.u32 %v2623, 16
        %v2734 = vrot.slane %v2732, 5
        %v2735 = vsel %vm1234, %v2730, %v2734
        %s2736 = scalar_lea.vmem %s3, 384
        %v2737 = vld [vmem:[%s2736] sm:$0xf]
        %v2738 = vld [vmem:[%s2736 + $0x4] sm:$0xf]
        %v2739 = vld [vmem:[%s2736 + $0x8] sm:$0xf]
        %v2740 = vld [vmem:[%s2736 + $0xc] sm:$0xf]
        %v2741 = vld [vmem:[%s2736 + $0x10] sm:$0xf]
        %v2742 = vld [vmem:[%s2736 + $0x14] sm:$0xf]
        %v2743 = vld [vmem:[%s2736 + $0x18] sm:$0xf]
        %v2744 = vld [vmem:[%s2736 + $0x1c] sm:$0xf]
        %v2745 = vld [vmem:[%s2736 + $0x20] sm:$0xf]
        %v2746 = vld [vmem:[%s2736 + $0x24] sm:$0xf]
        %v2747 = vld [vmem:[%s2736 + $0x28] sm:$0xf]
        %v2748 = vld [vmem:[%s2736 + $0x2c] sm:$0xf]
        %v2749 = vunpack.c.l.b16 %v2637
        %v2750 = vunpack.c.l.b16 %v2651
        %v2751 = vunpack.c.l.b16 %v2665
        %v2752 = vunpack.c.l.b16 %v2679
        %v2753 = vunpack.c.l.b16 %v2693
        %v2754 = vunpack.c.l.b16 %v2707
        %v2755 = vunpack.c.l.b16 %v2721
        %v2756 = vunpack.c.l.b16 %v2735
        %v2757 = vpack.c.b16 %v2750, %v2749
        %v2758 = vpack.c.b16 %v2752, %v2751
        %v2759 = vpack.c.b16 %v2754, %v2753
        %v2760 = vpack.c.b16 %v2756, %v2755
        %v2773 = vunpack.c.l.b16 %v2737
        %v2774 = vunpack.c.l.b16 %v2738
        %v2775 = vunpack.c.l.b16 %v2739
        %v2776 = vunpack.c.l.b16 %v2740
        %v2777 = vunpack.c.l.b16 %v2741
        %v2778 = vunpack.c.l.b16 %v2742
        %v2779 = vunpack.c.l.b16 %v2743
        %v2780 = vunpack.c.l.b16 %v2744
        %v2781 = vunpack.c.l.b16 %v2745
        %v2782 = vunpack.c.l.b16 %v2746
        %v2783 = vunpack.c.l.b16 %v2747
        %v2784 = vunpack.c.l.b16 %v2748
        %v2785 = vpack.c.b16 %v2774, %v2773
        %v2786 = vpack.c.b16 %v2776, %v2775
        %v2787 = vpack.c.b16 %v2778, %v2777
        %v2788 = vpack.c.b16 %v2780, %v2779
        %v2789 = vpack.c.b16 %v2782, %v2781
        %v2790 = vpack.c.b16 %v2784, %v2783
        %v2798 = vsel %vm1013, %v2757, 0
        %v2801 = vsel %vm1013, %v2758, 0
        %v2804 = vsel %vm1013, %v2759, 0
        %v2807 = vsel %vm1013, %v2760, 0
        %2809 = vmatprep.subr.bf16.mxu0 0
        %2810 = vmatpush1.bf16.msra.mxu0 %v2785
        %2811 = vmatprep.subr.bf16.mxu0 0
        %2812 = vmatpush1.bf16.msra.mxu0 %v2786
        %2813 = vmatprep.subr.bf16.mxu0 0
        %2814 = vmatpush1.bf16.msra.mxu0 %v2787
        %2815 = vmatprep.subr.bf16.mxu0 0
        %2816 = vmatpush1.bf16.msra.mxu0 %v2788
        %2817 = vmatprep.subr.bf16.mxu0 0
        %2818 = vmatpush1.bf16.msra.mxu0 %v2789
        %2819 = vmatprep.subr.bf16.mxu0 0
        %2820 = vmatpush1.bf16.msra.mxu0 %v2790
        %2821 = vmatprep.subr.bf16.mxu0 0
        %2822 = vmatpush1.bf16.msra.mxu0 0
        %2823 = vmatprep.subr.bf16.mxu0 0
        %2824 = vmatpush1.bf16.msra.mxu0 0
        %2825 = vmatprep.subr.bf16.mxu0 0
        %2826 = vmatpush1.bf16.msra.mxu0 0
        %2827 = vmatprep.subr.bf16.mxu0 0
        %2828 = vmatpush1.bf16.msra.mxu0 0
        %2829 = vmatprep.subr.bf16.mxu0 0
        %2830 = vmatpush1.bf16.msra.mxu0 0
        %2831 = vmatprep.subr.bf16.mxu0 0
        %2832 = vmatpush1.bf16.msra.mxu0 0
        %2833 = vmatprep.subr.bf16.mxu0 0
        %2834 = vmatpush1.bf16.msra.mxu0 0
        %2835 = vmatprep.subr.bf16.mxu0 0
        %2836 = vmatpush1.bf16.msra.mxu0 0
        %2837 = vmatprep.subr.bf16.mxu0 0
        %2838 = vmatpush1.bf16.msra.mxu0 0
        %2839 = vmatprep.subr.bf16.mxu0 0
        %2840 = vmatpush1.bf16.msra.mxu0 0
        %2841 = vmatprep.mubr.bf16.mxu0 0
        %2842 = vmatmul.mubr.bf16.gmra.mrb[0].mxu0 %v2798
        %v2843 = vpop.f32.mrb[0].mxu0
        %v2844 = vadd.f32 0.0, %v2843
        %v2845 = vpop.f32.mrb[0].mxu0
        %v2846 = vpop.f32.mrb[0].mxu0
        %v2847 = vadd.f32 0.0, %v2846
        %v2848 = vpop.f32.mrb[0].mxu0
        %2849 = vmatprep.mubr.bf16.mxu0 0
        %2850 = vmatmul.mubr.bf16.gmra.mrb[0].mxu0 %v2801
        %v2851 = vpop.f32.mrb[0].mxu0
        %v2852 = vadd.f32 0.0, %v2851
        %v2853 = vpop.f32.mrb[0].mxu0
        %v2854 = vpop.f32.mrb[0].mxu0
        %v2855 = vadd.f32 0.0, %v2854
        %v2856 = vpop.f32.mrb[0].mxu0
        %2857 = vmatprep.mubr.bf16.mxu0 0
        %2858 = vmatmul.mubr.bf16.gmra.mrb[0].mxu0 %v2804
        %v2859 = vpop.f32.mrb[0].mxu0
        %v2860 = vadd.f32 0.0, %v2859
        %v2861 = vpop.f32.mrb[0].mxu0
        %v2862 = vpop.f32.mrb[0].mxu0
        %v2863 = vadd.f32 0.0, %v2862
        %v2864 = vpop.f32.mrb[0].mxu0
        %2865 = vmatprep.mubr.bf16.mxu0 0
        %2866 = vmatmul.mubr.bf16.gmra.mrb[0].mxu0 %v2807
        %v2867 = vpop.f32.mrb[0].mxu0
        %v2868 = vadd.f32 0.0, %v2867
        %v2869 = vpop.f32.mrb[0].mxu0
        %v2870 = vpop.f32.mrb[0].mxu0
        %v2871 = vadd.f32 0.0, %v2870
        %v2872 = vpop.f32.mrb[0].mxu0
        %2873 = vdwg.mxu0
        %v2874 = vadd.f32 %v2600, %v2844
        %v2875 = vadd.f32 %v2601, %v2847
        %v2876 = vadd.f32 %v2602, %v2852
        %v2877 = vadd.f32 %v2603, %v2855
        %v2878 = vadd.f32 %v2604, %v2860
        %v2879 = vadd.f32 %v2605, %v2863
        %v2880 = vadd.f32 %v2606, %v2868
        %v2881 = vadd.f32 %v2607, %v2871
        %v2882 = vld [vmem:[%s4] sm:$0x1]
        %v2884 = vlaneseq
        %v2885 = vshrl.u32 %v2884, 7
        %v2886 = vsub.s32 0, %v2885
        %v2887 = vrot.slane %v2882, %v2886
        %v2889 = vadd.f32 %v2874, %v2887
        %v2890 = vadd.f32 %v2875, %v2887
        %v2891 = vadd.f32 %v2876, %v2887
        %v2892 = vadd.f32 %v2877, %v2887
        %v2893 = vadd.f32 %v2878, %v2887
        %v2894 = vadd.f32 %v2879, %v2887
        %v2895 = vadd.f32 %v2880, %v2887
        %v2896 = vadd.f32 %v2881, %v2887
        %v2897 = vmax.f32 %v2889, 0.0
        %v2898 = vmax.f32 %v2890, 0.0
        %v2899 = vmax.f32 %v2891, 0.0
        %v2900 = vmax.f32 %v2892, 0.0
        %v2901 = vmax.f32 %v2893, 0.0
        %v2902 = vmax.f32 %v2894, 0.0
        %v2903 = vmax.f32 %v2895, 0.0
        %v2904 = vmax.f32 %v2896, 0.0
        %v2905 = vpack.c.bf16 %v2898, %v2897
        %v2906 = vpack.c.bf16 %v2900, %v2899
        %v2907 = vpack.c.bf16 %v2902, %v2901
        %v2908 = vpack.c.bf16 %v2904, %v2903
        %v2913 = vunpack.c.l.b16 %v2905
        %v2914 = vunpack.c.h.b16 %v2905
        %v2915 = vunpack.c.l.b16 %v2906
        %v2916 = vunpack.c.h.b16 %v2906
        %v2917 = vunpack.c.l.b16 %v2907
        %v2918 = vunpack.c.h.b16 %v2907
        %v2919 = vunpack.c.l.b16 %v2908
        %v2920 = vunpack.c.h.b16 %v2908
        %v2921 = vpack.c.b16 %v2913, %v2913
        %v2922 = vpack.c.b16 %v2914, %v2914
        %v2923 = vpack.c.b16 %v2915, %v2915
        %v2924 = vpack.c.b16 %v2916, %v2916
        %v2925 = vpack.c.b16 %v2917, %v2917
        %v2926 = vpack.c.b16 %v2918, %v2918
        %v2927 = vpack.c.b16 %v2919, %v2919
        %v2928 = vpack.c.b16 %v2920, %v2920
        %vm2937 = vcmask 650240
        %2938 = vst.msk [vmem:[%s800 + $0x4] sm:$0xf] %vm2937, %v2921
        %2939 = vst.msk [vmem:[%s800 + $0x10] sm:$0xf] %vm2937, %v2922
        %2940 = vst.msk [vmem:[%s800 + $0x1c] sm:$0xf] %vm2937, %v2923
        %2941 = vst.msk [vmem:[%s800 + $0x28] sm:$0xf] %vm2937, %v2924
        %2942 = vst.msk [vmem:[%s800 + $0x34] sm:$0xf] %vm2937, %v2925
        %2943 = vst.msk [vmem:[%s800 + $0x40] sm:$0xf] %vm2937, %v2926
        %2944 = vst.msk [vmem:[%s800 + $0x4c] sm:$0xf] %vm2937, %v2927
        %2945 = vst.msk [vmem:[%s800 + $0x58] sm:$0xf] %vm2937, %v2928
        %v2946 = vld [vmem:[#allocation2] sm:$0x8]
        %v2947 = vld [vmem:[#allocation2 + $0x4] sm:$0xf]
        %v2948 = vld [vmem:[#allocation2 + $0xc] sm:$0x8]
        %v2949 = vld [vmem:[#allocation2 + $0x10] sm:$0xf]
        %v2950 = vld [vmem:[#allocation2 + $0x18] sm:$0x8]
        %v2951 = vld [vmem:[#allocation2 + $0x1c] sm:$0xf]
        %v2952 = vld [vmem:[#allocation2 + $0x24] sm:$0x8]
        %v2953 = vld [vmem:[#allocation2 + $0x28] sm:$0xf]
        %v2954 = vld [vmem:[#allocation2 + $0x30] sm:$0x8]
        %v2955 = vld [vmem:[#allocation2 + $0x34] sm:$0xf]
        %v2956 = vld [vmem:[#allocation2 + $0x3c] sm:$0x8]
        %v2957 = vld [vmem:[#allocation2 + $0x40] sm:$0xf]
        %v2958 = vld [vmem:[#allocation2 + $0x48] sm:$0x8]
        %v2959 = vld [vmem:[#allocation2 + $0x4c] sm:$0xf]
        %v2960 = vld [vmem:[#allocation2 + $0x54] sm:$0x8]
        %v2961 = vld [vmem:[#allocation2 + $0x58] sm:$0xf]
        %v2963 = vshrl.u32 %v2946, 16
        %v2965 = vrot.slane %v2963, 7
        %v2966 = vrot.slane %v2965, 4
        %v2968 = vshrl.u32 %v2947, 16
        %v2970 = vrot.slane %v2968, 7
        %v2971 = vshll.u32 %v2947, 16
        %v2973 = vor.u32 %v2970, %v2971
        %v2974 = vsel %vm827, %v2966, %v2973
        %v2976 = vshrl.u32 %v2948, 16
        %v2978 = vrot.slane %v2976, 7
        %v2979 = vrot.slane %v2978, 4
        %v2981 = vshrl.u32 %v2949, 16
        %v2983 = vrot.slane %v2981, 7
        %v2984 = vshll.u32 %v2949, 16
        %v2986 = vor.u32 %v2983, %v2984
        %v2987 = vsel %vm827, %v2979, %v2986
        %v2989 = vshrl.u32 %v2950, 16
        %v2991 = vrot.slane %v2989, 7
        %v2992 = vrot.slane %v2991, 4
        %v2994 = vshrl.u32 %v2951, 16
        %v2996 = vrot.slane %v2994, 7
        %v2997 = vshll.u32 %v2951, 16
        %v2999 = vor.u32 %v2996, %v2997
        %v3000 = vsel %vm827, %v2992, %v2999
        %v3002 = vshrl.u32 %v2952, 16
        %v3004 = vrot.slane %v3002, 7
        %v3005 = vrot.slane %v3004, 4
        %v3007 = vshrl.u32 %v2953, 16
        %v3009 = vrot.slane %v3007, 7
        %v3010 = vshll.u32 %v2953, 16
        %v3012 = vor.u32 %v3009, %v3010
        %v3013 = vsel %vm827, %v3005, %v3012
        %v3015 = vshrl.u32 %v2954, 16
        %v3017 = vrot.slane %v3015, 7
        %v3018 = vrot.slane %v3017, 4
        %v3020 = vshrl.u32 %v2955, 16
        %v3022 = vrot.slane %v3020, 7
        %v3023 = vshll.u32 %v2955, 16
        %v3025 = vor.u32 %v3022, %v3023
        %v3026 = vsel %vm827, %v3018, %v3025
        %v3028 = vshrl.u32 %v2956, 16
        %v3030 = vrot.slane %v3028, 7
        %v3031 = vrot.slane %v3030, 4
        %v3033 = vshrl.u32 %v2957, 16
        %v3035 = vrot.slane %v3033, 7
        %v3036 = vshll.u32 %v2957, 16
        %v3038 = vor.u32 %v3035, %v3036
        %v3039 = vsel %vm827, %v3031, %v3038
        %v3041 = vshrl.u32 %v2958, 16
        %v3043 = vrot.slane %v3041, 7
        %v3044 = vrot.slane %v3043, 4
        %v3046 = vshrl.u32 %v2959, 16
        %v3048 = vrot.slane %v3046, 7
        %v3049 = vshll.u32 %v2959, 16
        %v3051 = vor.u32 %v3048, %v3049
        %v3052 = vsel %vm827, %v3044, %v3051
        %v3054 = vshrl.u32 %v2960, 16
        %v3056 = vrot.slane %v3054, 7
        %v3057 = vrot.slane %v3056, 4
        %v3059 = vshrl.u32 %v2961, 16
        %v3061 = vrot.slane %v3059, 7
        %v3062 = vshll.u32 %v2961, 16
        %v3064 = vor.u32 %v3061, %v3062
        %v3065 = vsel %vm827, %v3057, %v3064
        %v3066 = vld [vmem:[%s5] sm:$0xf]
        %v3067 = vld [vmem:[%s5 + $0x4] sm:$0xf]
        %v3068 = vld [vmem:[%s5 + $0x8] sm:$0xf]
        %v3069 = vld [vmem:[%s5 + $0xc] sm:$0xf]
        %v3070 = vld [vmem:[%s5 + $0x10] sm:$0xf]
        %v3071 = vld [vmem:[%s5 + $0x14] sm:$0xf]
        %v3072 = vld [vmem:[%s5 + $0x18] sm:$0xf]
        %v3073 = vld [vmem:[%s5 + $0x1c] sm:$0xf]
        %v3074 = vld [vmem:[%s5 + $0x20] sm:$0xf]
        %v3075 = vld [vmem:[%s5 + $0x24] sm:$0xf]
        %v3076 = vld [vmem:[%s5 + $0x28] sm:$0xf]
        %v3077 = vld [vmem:[%s5 + $0x2c] sm:$0xf]
        %s3078 = scalar_lea.vmem %s5, 48
        %v3079 = vld [vmem:[%s3078] sm:$0xf]
        %v3080 = vld [vmem:[%s3078 + $0x4] sm:$0xf]
        %v3081 = vld [vmem:[%s3078 + $0x8] sm:$0xf]
        %v3082 = vld [vmem:[%s3078 + $0xc] sm:$0xf]
        %v3083 = vld [vmem:[%s3078 + $0x10] sm:$0xf]
        %v3084 = vld [vmem:[%s3078 + $0x14] sm:$0xf]
        %v3085 = vld [vmem:[%s3078 + $0x18] sm:$0xf]
        %v3086 = vld [vmem:[%s3078 + $0x1c] sm:$0xf]
        %v3087 = vld [vmem:[%s3078 + $0x20] sm:$0xf]
        %v3088 = vld [vmem:[%s3078 + $0x24] sm:$0xf]
        %v3089 = vld [vmem:[%s3078 + $0x28] sm:$0xf]
        %v3090 = vld [vmem:[%s3078 + $0x2c] sm:$0xf]
        %v3099 = vunpack.c.l.b16 %v2947
        %v3100 = vunpack.c.l.b16 %v2949
        %v3101 = vunpack.c.l.b16 %v2951
        %v3102 = vunpack.c.l.b16 %v2953
        %v3103 = vunpack.c.l.b16 %v2955
        %v3104 = vunpack.c.l.b16 %v2957
        %v3105 = vunpack.c.l.b16 %v2959
        %v3106 = vunpack.c.l.b16 %v2961
        %v3107 = vpack.c.b16 %v3100, %v3099
        %v3108 = vpack.c.b16 %v3102, %v3101
        %v3109 = vpack.c.b16 %v3104, %v3103
        %v3110 = vpack.c.b16 %v3106, %v3105
        %v3123 = vunpack.c.l.b16 %v3079
        %v3124 = vunpack.c.l.b16 %v3080
        %v3125 = vunpack.c.l.b16 %v3081
        %v3126 = vunpack.c.l.b16 %v3082
        %v3127 = vunpack.c.l.b16 %v3083
        %v3128 = vunpack.c.l.b16 %v3084
        %v3129 = vunpack.c.l.b16 %v3085
        %v3130 = vunpack.c.l.b16 %v3086
        %v3131 = vunpack.c.l.b16 %v3087
        %v3132 = vunpack.c.l.b16 %v3088
        %v3133 = vunpack.c.l.b16 %v3089
        %v3134 = vunpack.c.l.b16 %v3090
        %v3135 = vpack.c.b16 %v3124, %v3123
        %v3136 = vpack.c.b16 %v3126, %v3125
        %v3137 = vpack.c.b16 %v3128, %v3127
        %v3138 = vpack.c.b16 %v3130, %v3129
        %v3139 = vpack.c.b16 %v3132, %v3131
        %v3140 = vpack.c.b16 %v3134, %v3133
        %v3148 = vsel %vm1013, %v3107, 0
        %v3151 = vsel %vm1013, %v3108, 0
        %v3154 = vsel %vm1013, %v3109, 0
        %v3157 = vsel %vm1013, %v3110, 0
        %3159 = vmatprep.subr.bf16.mxu0 0
        %3160 = vmatpush1.bf16.msra.mxu0 %v3135
        %3161 = vmatprep.subr.bf16.mxu0 0
        %3162 = vmatpush1.bf16.msra.mxu0 %v3136
        %3163 = vmatprep.subr.bf16.mxu0 0
        %3164 = vmatpush1.bf16.msra.mxu0 %v3137
        %3165 = vmatprep.subr.bf16.mxu0 0
        %3166 = vmatpush1.bf16.msra.mxu0 %v3138
        %3167 = vmatprep.subr.bf16.mxu0 0
        %3168 = vmatpush1.bf16.msra.mxu0 %v3139
        %3169 = vmatprep.subr.bf16.mxu0 0
        %3170 = vmatpush1.bf16.msra.mxu0 %v3140
        %3171 = vmatprep.subr.bf16.mxu0 0
        %3172 = vmatpush1.bf16.msra.mxu0 0
        %3173 = vmatprep.subr.bf16.mxu0 0
        %3174 = vmatpush1.bf16.msra.mxu0 0
        %3175 = vmatprep.subr.bf16.mxu0 0
        %3176 = vmatpush1.bf16.msra.mxu0 0
        %3177 = vmatprep.subr.bf16.mxu0 0
        %3178 = vmatpush1.bf16.msra.mxu0 0
        %3179 = vmatprep.subr.bf16.mxu0 0
        %3180 = vmatpush1.bf16.msra.mxu0 0
        %3181 = vmatprep.subr.bf16.mxu0 0
        %3182 = vmatpush1.bf16.msra.mxu0 0
        %3183 = vmatprep.subr.bf16.mxu0 0
        %3184 = vmatpush1.bf16.msra.mxu0 0
        %3185 = vmatprep.subr.bf16.mxu0 0
        %3186 = vmatpush1.bf16.msra.mxu0 0
        %3187 = vmatprep.subr.bf16.mxu0 0
        %3188 = vmatpush1.bf16.msra.mxu0 0
        %3189 = vmatprep.subr.bf16.mxu0 0
        %3190 = vmatpush1.bf16.msra.mxu0 0
        %3191 = vmatprep.mubr.bf16.mxu0 0
        %3192 = vmatmul.mubr.bf16.gmra.mrb[0].mxu0 %v3148
        %v3193 = vpop.f32.mrb[0].mxu0
        %v3194 = vadd.f32 0.0, %v3193
        %v3195 = vpop.f32.mrb[0].mxu0
        %v3196 = vpop.f32.mrb[0].mxu0
        %v3197 = vadd.f32 0.0, %v3196
        %v3198 = vpop.f32.mrb[0].mxu0
        %3199 = vmatprep.mubr.bf16.mxu0 0
        %3200 = vmatmul.mubr.bf16.gmra.mrb[0].mxu0 %v3151
        %v3201 = vpop.f32.mrb[0].mxu0
        %v3202 = vadd.f32 0.0, %v3201
        %v3203 = vpop.f32.mrb[0].mxu0
        %v3204 = vpop.f32.mrb[0].mxu0
        %v3205 = vadd.f32 0.0, %v3204
        %v3206 = vpop.f32.mrb[0].mxu0
        %3207 = vmatprep.mubr.bf16.mxu0 0
        %3208 = vmatmul.mubr.bf16.gmra.mrb[0].mxu0 %v3154
        %v3209 = vpop.f32.mrb[0].mxu0
        %v3210 = vadd.f32 0.0, %v3209
        %v3211 = vpop.f32.mrb[0].mxu0
        %v3212 = vpop.f32.mrb[0].mxu0
        %v3213 = vadd.f32 0.0, %v3212
        %v3214 = vpop.f32.mrb[0].mxu0
        %3215 = vmatprep.mubr.bf16.mxu0 0
        %3216 = vmatmul.mubr.bf16.gmra.mrb[0].mxu0 %v3157
        %v3217 = vpop.f32.mrb[0].mxu0
        %v3218 = vadd.f32 0.0, %v3217
        %v3219 = vpop.f32.mrb[0].mxu0
        %v3220 = vpop.f32.mrb[0].mxu0
        %v3221 = vadd.f32 0.0, %v3220
        %v3222 = vpop.f32.mrb[0].mxu0
        %3223 = vdwg.mxu0
        %v3224 = vunpack.c.l.b16 %v2974
        %v3225 = vunpack.c.l.b16 %v2987
        %v3226 = vunpack.c.l.b16 %v3000
        %v3227 = vunpack.c.l.b16 %v3013
        %v3228 = vunpack.c.l.b16 %v3026
        %v3229 = vunpack.c.l.b16 %v3039
        %v3230 = vunpack.c.l.b16 %v3052
        %v3231 = vunpack.c.l.b16 %v3065
        %v3232 = vpack.c.b16 %v3225, %v3224
        %v3233 = vpack.c.b16 %v3227, %v3226
        %v3234 = vpack.c.b16 %v3229, %v3228
        %v3235 = vpack.c.b16 %v3231, %v3230
        %v3248 = vunpack.c.l.b16 %v3066
        %v3249 = vunpack.c.l.b16 %v3067
        %v3250 = vunpack.c.l.b16 %v3068
        %v3251 = vunpack.c.l.b16 %v3069
        %v3252 = vunpack.c.l.b16 %v3070
        %v3253 = vunpack.c.l.b16 %v3071
        %v3254 = vunpack.c.l.b16 %v3072
        %v3255 = vunpack.c.l.b16 %v3073
        %v3256 = vunpack.c.l.b16 %v3074
        %v3257 = vunpack.c.l.b16 %v3075
        %v3258 = vunpack.c.l.b16 %v3076
        %v3259 = vunpack.c.l.b16 %v3077
        %v3260 = vpack.c.b16 %v3249, %v3248
        %v3261 = vpack.c.b16 %v3251, %v3250
        %v3262 = vpack.c.b16 %v3253, %v3252
        %v3263 = vpack.c.b16 %v3255, %v3254
        %v3264 = vpack.c.b16 %v3257, %v3256
        %v3265 = vpack.c.b16 %v3259, %v3258
        %v3273 = vsel %vm1013, %v3232, 0
        %v3276 = vsel %vm1013, %v3233, 0
        %v3279 = vsel %vm1013, %v3234, 0
        %v3282 = vsel %vm1013, %v3235, 0
        %3284 = vmatprep.subr.bf16.mxu0 0
        %3285 = vmatpush1.bf16.msra.mxu0 %v3260
        %3286 = vmatprep.subr.bf16.mxu0 0
        %3287 = vmatpush1.bf16.msra.mxu0 %v3261
        %3288 = vmatprep.subr.bf16.mxu0 0
        %3289 = vmatpush1.bf16.msra.mxu0 %v3262
        %3290 = vmatprep.subr.bf16.mxu0 0
        %3291 = vmatpush1.bf16.msra.mxu0 %v3263
        %3292 = vmatprep.subr.bf16.mxu0 0
        %3293 = vmatpush1.bf16.msra.mxu0 %v3264
        %3294 = vmatprep.subr.bf16.mxu0 0
        %3295 = vmatpush1.bf16.msra.mxu0 %v3265
        %3296 = vmatprep.subr.bf16.mxu0 0
        %3297 = vmatpush1.bf16.msra.mxu0 0
        %3298 = vmatprep.subr.bf16.mxu0 0
        %3299 = vmatpush1.bf16.msra.mxu0 0
        %3300 = vmatprep.subr.bf16.mxu0 0
        %3301 = vmatpush1.bf16.msra.mxu0 0
        %3302 = vmatprep.subr.bf16.mxu0 0
        %3303 = vmatpush1.bf16.msra.mxu0 0
        %3304 = vmatprep.subr.bf16.mxu0 0
        %3305 = vmatpush1.bf16.msra.mxu0 0
        %3306 = vmatprep.subr.bf16.mxu0 0
        %3307 = vmatpush1.bf16.msra.mxu0 0
        %3308 = vmatprep.subr.bf16.mxu0 0
        %3309 = vmatpush1.bf16.msra.mxu0 0
        %3310 = vmatprep.subr.bf16.mxu0 0
        %3311 = vmatpush1.bf16.msra.mxu0 0
        %3312 = vmatprep.subr.bf16.mxu0 0
        %3313 = vmatpush1.bf16.msra.mxu0 0
        %3314 = vmatprep.subr.bf16.mxu0 0
        %3315 = vmatpush1.bf16.msra.mxu0 0
        %3316 = vmatprep.mubr.bf16.mxu0 0
        %3317 = vmatmul.mubr.bf16.gmra.mrb[0].mxu0 %v3273
        %v3318 = vpop.f32.mrb[0].mxu0
        %v3319 = vadd.f32 %v3194, %v3318
        %v3320 = vpop.f32.mrb[0].mxu0
        %v3321 = vpop.f32.mrb[0].mxu0
        %v3322 = vadd.f32 %v3197, %v3321
        %v3323 = vpop.f32.mrb[0].mxu0
        %3324 = vmatprep.mubr.bf16.mxu0 0
        %3325 = vmatmul.mubr.bf16.gmra.mrb[0].mxu0 %v3276
        %v3326 = vpop.f32.mrb[0].mxu0
        %v3327 = vadd.f32 %v3202, %v3326
        %v3328 = vpop.f32.mrb[0].mxu0
        %v3329 = vpop.f32.mrb[0].mxu0
        %v3330 = vadd.f32 %v3205, %v3329
        %v3331 = vpop.f32.mrb[0].mxu0
        %3332 = vmatprep.mubr.bf16.mxu0 0
        %3333 = vmatmul.mubr.bf16.gmra.mrb[0].mxu0 %v3279
        %v3334 = vpop.f32.mrb[0].mxu0
        %v3335 = vadd.f32 %v3210, %v3334
        %v3336 = vpop.f32.mrb[0].mxu0
        %v3337 = vpop.f32.mrb[0].mxu0
        %v3338 = vadd.f32 %v3213, %v3337
        %v3339 = vpop.f32.mrb[0].mxu0
        %3340 = vmatprep.mubr.bf16.mxu0 0
        %3341 = vmatmul.mubr.bf16.gmra.mrb[0].mxu0 %v3282
        %v3342 = vpop.f32.mrb[0].mxu0
        %v3343 = vadd.f32 %v3218, %v3342
        %v3344 = vpop.f32.mrb[0].mxu0
        %v3345 = vpop.f32.mrb[0].mxu0
        %v3346 = vadd.f32 %v3221, %v3345
        %v3347 = vpop.f32.mrb[0].mxu0
        %3348 = vdwg.mxu0
        %v3349 = vld [vmem:[#allocation2 + $0x4] sm:$0xf]
        %v3350 = vld [vmem:[#allocation2 + $0x8] sm:$0x1]
        %v3351 = vld [vmem:[#allocation2 + $0x10] sm:$0xf]
        %v3352 = vld [vmem:[#allocation2 + $0x14] sm:$0x1]
        %v3353 = vld [vmem:[#allocation2 + $0x1c] sm:$0xf]
        %v3354 = vld [vmem:[#allocation2 + $0x20] sm:$0x1]
        %v3355 = vld [vmem:[#allocation2 + $0x28] sm:$0xf]
        %v3356 = vld [vmem:[#allocation2 + $0x2c] sm:$0x1]
        %v3357 = vld [vmem:[#allocation2 + $0x34] sm:$0xf]
        %v3358 = vld [vmem:[#allocation2 + $0x38] sm:$0x1]
        %v3359 = vld [vmem:[#allocation2 + $0x40] sm:$0xf]
        %v3360 = vld [vmem:[#allocation2 + $0x44] sm:$0x1]
        %v3361 = vld [vmem:[#allocation2 + $0x4c] sm:$0xf]
        %v3362 = vld [vmem:[#allocation2 + $0x50] sm:$0x1]
        %v3363 = vld [vmem:[#allocation2 + $0x58] sm:$0xf]
        %v3364 = vld [vmem:[#allocation2 + $0x5c] sm:$0x1]
        %v3366 = vshrl.u32 %v3349, 16
        %v3368 = vrot.slane %v3366, 4
        %v3369 = vshll.u32 %v3349, 16
        %v3371 = vrot.slane %v3369, 5
        %v3372 = vor.u32 %v3368, %v3371
        %v3373 = vrot.slane %v3372, 4
        %v3375 = vshll.u32 %v3350, 16
        %v3377 = vrot.slane %v3375, 5
        %v3378 = vsel %vm1234, %v3373, %v3377
        %v3380 = vshrl.u32 %v3351, 16
        %v3382 = vrot.slane %v3380, 4
        %v3383 = vshll.u32 %v3351, 16
        %v3385 = vrot.slane %v3383, 5
        %v3386 = vor.u32 %v3382, %v3385
        %v3387 = vrot.slane %v3386, 4
        %v3389 = vshll.u32 %v3352, 16
        %v3391 = vrot.slane %v3389, 5
        %v3392 = vsel %vm1234, %v3387, %v3391
        %v3394 = vshrl.u32 %v3353, 16
        %v3396 = vrot.slane %v3394, 4
        %v3397 = vshll.u32 %v3353, 16
        %v3399 = vrot.slane %v3397, 5
        %v3400 = vor.u32 %v3396, %v3399
        %v3401 = vrot.slane %v3400, 4
        %v3403 = vshll.u32 %v3354, 16
        %v3405 = vrot.slane %v3403, 5
        %v3406 = vsel %vm1234, %v3401, %v3405
        %v3408 = vshrl.u32 %v3355, 16
        %v3410 = vrot.slane %v3408, 4
        %v3411 = vshll.u32 %v3355, 16
        %v3413 = vrot.slane %v3411, 5
        %v3414 = vor.u32 %v3410, %v3413
        %v3415 = vrot.slane %v3414, 4
        %v3417 = vshll.u32 %v3356, 16
        %v3419 = vrot.slane %v3417, 5
        %v3420 = vsel %vm1234, %v3415, %v3419
        %v3422 = vshrl.u32 %v3357, 16
        %v3424 = vrot.slane %v3422, 4
        %v3425 = vshll.u32 %v3357, 16
        %v3427 = vrot.slane %v3425, 5
        %v3428 = vor.u32 %v3424, %v3427
        %v3429 = vrot.slane %v3428, 4
        %v3431 = vshll.u32 %v3358, 16
        %v3433 = vrot.slane %v3431, 5
        %v3434 = vsel %vm1234, %v3429, %v3433
        %v3436 = vshrl.u32 %v3359, 16
        %v3438 = vrot.slane %v3436, 4
        %v3439 = vshll.u32 %v3359, 16
        %v3441 = vrot.slane %v3439, 5
        %v3442 = vor.u32 %v3438, %v3441
        %v3443 = vrot.slane %v3442, 4
        %v3445 = vshll.u32 %v3360, 16
        %v3447 = vrot.slane %v3445, 5
        %v3448 = vsel %vm1234, %v3443, %v3447
        %v3450 = vshrl.u32 %v3361, 16
        %v3452 = vrot.slane %v3450, 4
        %v3453 = vshll.u32 %v3361, 16
        %v3455 = vrot.slane %v3453, 5
        %v3456 = vor.u32 %v3452, %v3455
        %v3457 = vrot.slane %v3456, 4
        %v3459 = vshll.u32 %v3362, 16
        %v3461 = vrot.slane %v3459, 5
        %v3462 = vsel %vm1234, %v3457, %v3461
        %v3464 = vshrl.u32 %v3363, 16
        %v3466 = vrot.slane %v3464, 4
        %v3467 = vshll.u32 %v3363, 16
        %v3469 = vrot.slane %v3467, 5
        %v3470 = vor.u32 %v3466, %v3469
        %v3471 = vrot.slane %v3470, 4
        %v3473 = vshll.u32 %v3364, 16
        %v3475 = vrot.slane %v3473, 5
        %v3476 = vsel %vm1234, %v3471, %v3475
        %s3477 = scalar_lea.vmem %s5, 96
        %v3478 = vld [vmem:[%s3477] sm:$0xf]
        %v3479 = vld [vmem:[%s3477 + $0x4] sm:$0xf]
        %v3480 = vld [vmem:[%s3477 + $0x8] sm:$0xf]
        %v3481 = vld [vmem:[%s3477 + $0xc] sm:$0xf]
        %v3482 = vld [vmem:[%s3477 + $0x10] sm:$0xf]
        %v3483 = vld [vmem:[%s3477 + $0x14] sm:$0xf]
        %v3484 = vld [vmem:[%s3477 + $0x18] sm:$0xf]
        %v3485 = vld [vmem:[%s3477 + $0x1c] sm:$0xf]
        %v3486 = vld [vmem:[%s3477 + $0x20] sm:$0xf]
        %v3487 = vld [vmem:[%s3477 + $0x24] sm:$0xf]
        %v3488 = vld [vmem:[%s3477 + $0x28] sm:$0xf]
        %v3489 = vld [vmem:[%s3477 + $0x2c] sm:$0xf]
        %v3490 = vunpack.c.l.b16 %v3378
        %v3491 = vunpack.c.l.b16 %v3392
        %v3492 = vunpack.c.l.b16 %v3406
        %v3493 = vunpack.c.l.b16 %v3420
        %v3494 = vunpack.c.l.b16 %v3434
        %v3495 = vunpack.c.l.b16 %v3448
        %v3496 = vunpack.c.l.b16 %v3462
        %v3497 = vunpack.c.l.b16 %v3476
        %v3498 = vpack.c.b16 %v3491, %v3490
        %v3499 = vpack.c.b16 %v3493, %v3492
        %v3500 = vpack.c.b16 %v3495, %v3494
        %v3501 = vpack.c.b16 %v3497, %v3496
        %v3514 = vunpack.c.l.b16 %v3478
        %v3515 = vunpack.c.l.b16 %v3479
        %v3516 = vunpack.c.l.b16 %v3480
        %v3517 = vunpack.c.l.b16 %v3481
        %v3518 = vunpack.c.l.b16 %v3482
        %v3519 = vunpack.c.l.b16 %v3483
        %v3520 = vunpack.c.l.b16 %v3484
        %v3521 = vunpack.c.l.b16 %v3485
        %v3522 = vunpack.c.l.b16 %v3486
        %v3523 = vunpack.c.l.b16 %v3487
        %v3524 = vunpack.c.l.b16 %v3488
        %v3525 = vunpack.c.l.b16 %v3489
        %v3526 = vpack.c.b16 %v3515, %v3514
        %v3527 = vpack.c.b16 %v3517, %v3516
        %v3528 = vpack.c.b16 %v3519, %v3518
        %v3529 = vpack.c.b16 %v3521, %v3520
        %v3530 = vpack.c.b16 %v3523, %v3522
        %v3531 = vpack.c.b16 %v3525, %v3524
        %v3539 = vsel %vm1013, %v3498, 0
        %v3542 = vsel %vm1013, %v3499, 0
        %v3545 = vsel %vm1013, %v3500, 0
        %v3548 = vsel %vm1013, %v3501, 0
        %3550 = vmatprep.subr.bf16.mxu0 0
        %3551 = vmatpush1.bf16.msra.mxu0 %v3526
        %3552 = vmatprep.subr.bf16.mxu0 0
        %3553 = vmatpush1.bf16.msra.mxu0 %v3527
        %3554 = vmatprep.subr.bf16.mxu0 0
        %3555 = vmatpush1.bf16.msra.mxu0 %v3528
        %3556 = vmatprep.subr.bf16.mxu0 0
        %3557 = vmatpush1.bf16.msra.mxu0 %v3529
        %3558 = vmatprep.subr.bf16.mxu0 0
        %3559 = vmatpush1.bf16.msra.mxu0 %v3530
        %3560 = vmatprep.subr.bf16.mxu0 0
        %3561 = vmatpush1.bf16.msra.mxu0 %v3531
        %3562 = vmatprep.subr.bf16.mxu0 0
        %3563 = vmatpush1.bf16.msra.mxu0 0
        %3564 = vmatprep.subr.bf16.mxu0 0
        %3565 = vmatpush1.bf16.msra.mxu0 0
        %3566 = vmatprep.subr.bf16.mxu0 0
        %3567 = vmatpush1.bf16.msra.mxu0 0
        %3568 = vmatprep.subr.bf16.mxu0 0
        %3569 = vmatpush1.bf16.msra.mxu0 0
        %3570 = vmatprep.subr.bf16.mxu0 0
        %3571 = vmatpush1.bf16.msra.mxu0 0
        %3572 = vmatprep.subr.bf16.mxu0 0
        %3573 = vmatpush1.bf16.msra.mxu0 0
        %3574 = vmatprep.subr.bf16.mxu0 0
        %3575 = vmatpush1.bf16.msra.mxu0 0
        %3576 = vmatprep.subr.bf16.mxu0 0
        %3577 = vmatpush1.bf16.msra.mxu0 0
        %3578 = vmatprep.subr.bf16.mxu0 0
        %3579 = vmatpush1.bf16.msra.mxu0 0
        %3580 = vmatprep.subr.bf16.mxu0 0
        %3581 = vmatpush1.bf16.msra.mxu0 0
        %3582 = vmatprep.mubr.bf16.mxu0 0
        %3583 = vmatmul.mubr.bf16.gmra.mrb[0].mxu0 %v3539
        %v3584 = vpop.f32.mrb[0].mxu0
        %v3585 = vadd.f32 0.0, %v3584
        %v3586 = vpop.f32.mrb[0].mxu0
        %v3587 = vpop.f32.mrb[0].mxu0
        %v3588 = vadd.f32 0.0, %v3587
        %v3589 = vpop.f32.mrb[0].mxu0
        %3590 = vmatprep.mubr.bf16.mxu0 0
        %3591 = vmatmul.mubr.bf16.gmra.mrb[0].mxu0 %v3542
        %v3592 = vpop.f32.mrb[0].mxu0
        %v3593 = vadd.f32 0.0, %v3592
        %v3594 = vpop.f32.mrb[0].mxu0
        %v3595 = vpop.f32.mrb[0].mxu0
        %v3596 = vadd.f32 0.0, %v3595
        %v3597 = vpop.f32.mrb[0].mxu0
        %3598 = vmatprep.mubr.bf16.mxu0 0
        %3599 = vmatmul.mubr.bf16.gmra.mrb[0].mxu0 %v3545
        %v3600 = vpop.f32.mrb[0].mxu0
        %v3601 = vadd.f32 0.0, %v3600
        %v3602 = vpop.f32.mrb[0].mxu0
        %v3603 = vpop.f32.mrb[0].mxu0
        %v3604 = vadd.f32 0.0, %v3603
        %v3605 = vpop.f32.mrb[0].mxu0
        %3606 = vmatprep.mubr.bf16.mxu0 0
        %3607 = vmatmul.mubr.bf16.gmra.mrb[0].mxu0 %v3548
        %v3608 = vpop.f32.mrb[0].mxu0
        %v3609 = vadd.f32 0.0, %v3608
        %v3610 = vpop.f32.mrb[0].mxu0
        %v3611 = vpop.f32.mrb[0].mxu0
        %v3612 = vadd.f32 0.0, %v3611
        %v3613 = vpop.f32.mrb[0].mxu0
        %3614 = vdwg.mxu0
        %v3615 = vadd.f32 %v3319, %v3585
        %v3616 = vadd.f32 %v3322, %v3588
        %v3617 = vadd.f32 %v3327, %v3593
        %v3618 = vadd.f32 %v3330, %v3596
        %v3619 = vadd.f32 %v3335, %v3601
        %v3620 = vadd.f32 %v3338, %v3604
        %v3621 = vadd.f32 %v3343, %v3609
        %v3622 = vadd.f32 %v3346, %v3612
        %v3623 = vld [vmem:[%s800] sm:$0x8]
        %v3624 = vld [vmem:[%s800 + $0x4] sm:$0xf]
        %v3625 = vld [vmem:[%s800 + $0xc] sm:$0x8]
        %v3626 = vld [vmem:[%s800 + $0x10] sm:$0xf]
        %v3627 = vld [vmem:[%s800 + $0x18] sm:$0x8]
        %v3628 = vld [vmem:[%s800 + $0x1c] sm:$0xf]
        %v3629 = vld [vmem:[%s800 + $0x24] sm:$0x8]
        %v3630 = vld [vmem:[%s800 + $0x28] sm:$0xf]
        %v3631 = vld [vmem:[%s800 + $0x30] sm:$0x8]
        %v3632 = vld [vmem:[%s800 + $0x34] sm:$0xf]
        %v3633 = vld [vmem:[%s800 + $0x3c] sm:$0x8]
        %v3634 = vld [vmem:[%s800 + $0x40] sm:$0xf]
        %v3635 = vld [vmem:[%s800 + $0x48] sm:$0x8]
        %v3636 = vld [vmem:[%s800 + $0x4c] sm:$0xf]
        %v3637 = vld [vmem:[%s800 + $0x54] sm:$0x8]
        %v3638 = vld [vmem:[%s800 + $0x58] sm:$0xf]
        %v3640 = vshrl.u32 %v3623, 16
        %v3642 = vrot.slane %v3640, 7
        %v3643 = vrot.slane %v3642, 4
        %v3645 = vshrl.u32 %v3624, 16
        %v3647 = vrot.slane %v3645, 7
        %v3648 = vshll.u32 %v3624, 16
        %v3650 = vor.u32 %v3647, %v3648
        %v3651 = vsel %vm827, %v3643, %v3650
        %v3653 = vshrl.u32 %v3625, 16
        %v3655 = vrot.slane %v3653, 7
        %v3656 = vrot.slane %v3655, 4
        %v3658 = vshrl.u32 %v3626, 16
        %v3660 = vrot.slane %v3658, 7
        %v3661 = vshll.u32 %v3626, 16
        %v3663 = vor.u32 %v3660, %v3661
        %v3664 = vsel %vm827, %v3656, %v3663
        %v3666 = vshrl.u32 %v3627, 16
        %v3668 = vrot.slane %v3666, 7
        %v3669 = vrot.slane %v3668, 4
        %v3671 = vshrl.u32 %v3628, 16
        %v3673 = vrot.slane %v3671, 7
        %v3674 = vshll.u32 %v3628, 16
        %v3676 = vor.u32 %v3673, %v3674
        %v3677 = vsel %vm827, %v3669, %v3676
        %v3679 = vshrl.u32 %v3629, 16
        %v3681 = vrot.slane %v3679, 7
        %v3682 = vrot.slane %v3681, 4
        %v3684 = vshrl.u32 %v3630, 16
        %v3686 = vrot.slane %v3684, 7
        %v3687 = vshll.u32 %v3630, 16
        %v3689 = vor.u32 %v3686, %v3687
        %v3690 = vsel %vm827, %v3682, %v3689
        %v3692 = vshrl.u32 %v3631, 16
        %v3694 = vrot.slane %v3692, 7
        %v3695 = vrot.slane %v3694, 4
        %v3697 = vshrl.u32 %v3632, 16
        %v3699 = vrot.slane %v3697, 7
        %v3700 = vshll.u32 %v3632, 16
        %v3702 = vor.u32 %v3699, %v3700
        %v3703 = vsel %vm827, %v3695, %v3702
        %v3705 = vshrl.u32 %v3633, 16
        %v3707 = vrot.slane %v3705, 7
        %v3708 = vrot.slane %v3707, 4
        %v3710 = vshrl.u32 %v3634, 16
        %v3712 = vrot.slane %v3710, 7
        %v3713 = vshll.u32 %v3634, 16
        %v3715 = vor.u32 %v3712, %v3713
        %v3716 = vsel %vm827, %v3708, %v3715
        %v3718 = vshrl.u32 %v3635, 16
        %v3720 = vrot.slane %v3718, 7
        %v3721 = vrot.slane %v3720, 4
        %v3723 = vshrl.u32 %v3636, 16
        %v3725 = vrot.slane %v3723, 7
        %v3726 = vshll.u32 %v3636, 16
        %v3728 = vor.u32 %v3725, %v3726
        %v3729 = vsel %vm827, %v3721, %v3728
        %v3731 = vshrl.u32 %v3637, 16
        %v3733 = vrot.slane %v3731, 7
        %v3734 = vrot.slane %v3733, 4
        %v3736 = vshrl.u32 %v3638, 16
        %v3738 = vrot.slane %v3736, 7
        %v3739 = vshll.u32 %v3638, 16
        %v3741 = vor.u32 %v3738, %v3739
        %v3742 = vsel %vm827, %v3734, %v3741
        %s3743 = scalar_lea.vmem %s5, 144
        %v3744 = vld [vmem:[%s3743] sm:$0xf]
        %v3745 = vld [vmem:[%s3743 + $0x4] sm:$0xf]
        %v3746 = vld [vmem:[%s3743 + $0x8] sm:$0xf]
        %v3747 = vld [vmem:[%s3743 + $0xc] sm:$0xf]
        %v3748 = vld [vmem:[%s3743 + $0x10] sm:$0xf]
        %v3749 = vld [vmem:[%s3743 + $0x14] sm:$0xf]
        %v3750 = vld [vmem:[%s3743 + $0x18] sm:$0xf]
        %v3751 = vld [vmem:[%s3743 + $0x1c] sm:$0xf]
        %v3752 = vld [vmem:[%s3743 + $0x20] sm:$0xf]
        %v3753 = vld [vmem:[%s3743 + $0x24] sm:$0xf]
        %v3754 = vld [vmem:[%s3743 + $0x28] sm:$0xf]
        %v3755 = vld [vmem:[%s3743 + $0x2c] sm:$0xf]
        %v3756 = vunpack.c.l.b16 %v3651
        %v3757 = vunpack.c.l.b16 %v3664
        %v3758 = vunpack.c.l.b16 %v3677
        %v3759 = vunpack.c.l.b16 %v3690
        %v3760 = vunpack.c.l.b16 %v3703
        %v3761 = vunpack.c.l.b16 %v3716
        %v3762 = vunpack.c.l.b16 %v3729
        %v3763 = vunpack.c.l.b16 %v3742
        %v3764 = vpack.c.b16 %v3757, %v3756
        %v3765 = vpack.c.b16 %v3759, %v3758
        %v3766 = vpack.c.b16 %v3761, %v3760
        %v3767 = vpack.c.b16 %v3763, %v3762
        %v3780 = vunpack.c.l.b16 %v3744
        %v3781 = vunpack.c.l.b16 %v3745
        %v3782 = vunpack.c.l.b16 %v3746
        %v3783 = vunpack.c.l.b16 %v3747
        %v3784 = vunpack.c.l.b16 %v3748
        %v3785 = vunpack.c.l.b16 %v3749
        %v3786 = vunpack.c.l.b16 %v3750
        %v3787 = vunpack.c.l.b16 %v3751
        %v3788 = vunpack.c.l.b16 %v3752
        %v3789 = vunpack.c.l.b16 %v3753
        %v3790 = vunpack.c.l.b16 %v3754
        %v3791 = vunpack.c.l.b16 %v3755
        %v3792 = vpack.c.b16 %v3781, %v3780
        %v3793 = vpack.c.b16 %v3783, %v3782
        %v3794 = vpack.c.b16 %v3785, %v3784
        %v3795 = vpack.c.b16 %v3787, %v3786
        %v3796 = vpack.c.b16 %v3789, %v3788
        %v3797 = vpack.c.b16 %v3791, %v3790
        %v3805 = vsel %vm1013, %v3764, 0
        %v3808 = vsel %vm1013, %v3765, 0
        %v3811 = vsel %vm1013, %v3766, 0
        %v3814 = vsel %vm1013, %v3767, 0
        %3816 = vmatprep.subr.bf16.mxu0 0
        %3817 = vmatpush1.bf16.msra.mxu0 %v3792
        %3818 = vmatprep.subr.bf16.mxu0 0
        %3819 = vmatpush1.bf16.msra.mxu0 %v3793
        %3820 = vmatprep.subr.bf16.mxu0 0
        %3821 = vmatpush1.bf16.msra.mxu0 %v3794
        %3822 = vmatprep.subr.bf16.mxu0 0
        %3823 = vmatpush1.bf16.msra.mxu0 %v3795
        %3824 = vmatprep.subr.bf16.mxu0 0
        %3825 = vmatpush1.bf16.msra.mxu0 %v3796
        %3826 = vmatprep.subr.bf16.mxu0 0
        %3827 = vmatpush1.bf16.msra.mxu0 %v3797
        %3828 = vmatprep.subr.bf16.mxu0 0
        %3829 = vmatpush1.bf16.msra.mxu0 0
        %3830 = vmatprep.subr.bf16.mxu0 0
        %3831 = vmatpush1.bf16.msra.mxu0 0
        %3832 = vmatprep.subr.bf16.mxu0 0
        %3833 = vmatpush1.bf16.msra.mxu0 0
        %3834 = vmatprep.subr.bf16.mxu0 0
        %3835 = vmatpush1.bf16.msra.mxu0 0
        %3836 = vmatprep.subr.bf16.mxu0 0
        %3837 = vmatpush1.bf16.msra.mxu0 0
        %3838 = vmatprep.subr.bf16.mxu0 0
        %3839 = vmatpush1.bf16.msra.mxu0 0
        %3840 = vmatprep.subr.bf16.mxu0 0
        %3841 = vmatpush1.bf16.msra.mxu0 0
        %3842 = vmatprep.subr.bf16.mxu0 0
        %3843 = vmatpush1.bf16.msra.mxu0 0
        %3844 = vmatprep.subr.bf16.mxu0 0
        %3845 = vmatpush1.bf16.msra.mxu0 0
        %3846 = vmatprep.subr.bf16.mxu0 0
        %3847 = vmatpush1.bf16.msra.mxu0 0
        %3848 = vmatprep.mubr.bf16.mxu0 0
        %3849 = vmatmul.mubr.bf16.gmra.mrb[0].mxu0 %v3805
        %v3850 = vpop.f32.mrb[0].mxu0
        %v3851 = vadd.f32 0.0, %v3850
        %v3852 = vpop.f32.mrb[0].mxu0
        %v3853 = vpop.f32.mrb[0].mxu0
        %v3854 = vadd.f32 0.0, %v3853
        %v3855 = vpop.f32.mrb[0].mxu0
        %3856 = vmatprep.mubr.bf16.mxu0 0
        %3857 = vmatmul.mubr.bf16.gmra.mrb[0].mxu0 %v3808
        %v3858 = vpop.f32.mrb[0].mxu0
        %v3859 = vadd.f32 0.0, %v3858
        %v3860 = vpop.f32.mrb[0].mxu0
        %v3861 = vpop.f32.mrb[0].mxu0
        %v3862 = vadd.f32 0.0, %v3861
        %v3863 = vpop.f32.mrb[0].mxu0
        %3864 = vmatprep.mubr.bf16.mxu0 0
        %3865 = vmatmul.mubr.bf16.gmra.mrb[0].mxu0 %v3811
        %v3866 = vpop.f32.mrb[0].mxu0
        %v3867 = vadd.f32 0.0, %v3866
        %v3868 = vpop.f32.mrb[0].mxu0
        %v3869 = vpop.f32.mrb[0].mxu0
        %v3870 = vadd.f32 0.0, %v3869
        %v3871 = vpop.f32.mrb[0].mxu0
        %3872 = vmatprep.mubr.bf16.mxu0 0
        %3873 = vmatmul.mubr.bf16.gmra.mrb[0].mxu0 %v3814
        %v3874 = vpop.f32.mrb[0].mxu0
        %v3875 = vadd.f32 0.0, %v3874
        %v3876 = vpop.f32.mrb[0].mxu0
        %v3877 = vpop.f32.mrb[0].mxu0
        %v3878 = vadd.f32 0.0, %v3877
        %v3879 = vpop.f32.mrb[0].mxu0
        %3880 = vdwg.mxu0
        %v3881 = vadd.f32 %v3615, %v3851
        %v3882 = vadd.f32 %v3616, %v3854
        %v3883 = vadd.f32 %v3617, %v3859
        %v3884 = vadd.f32 %v3618, %v3862
        %v3885 = vadd.f32 %v3619, %v3867
        %v3886 = vadd.f32 %v3620, %v3870
        %v3887 = vadd.f32 %v3621, %v3875
        %v3888 = vadd.f32 %v3622, %v3878
        %s3889 = scalar_lea.vmem %s5, 192
        %v3890 = vld [vmem:[%s3889] sm:$0xf]
        %v3891 = vld [vmem:[%s3889 + $0x4] sm:$0xf]
        %v3892 = vld [vmem:[%s3889 + $0x8] sm:$0xf]
        %v3893 = vld [vmem:[%s3889 + $0xc] sm:$0xf]
        %v3894 = vld [vmem:[%s3889 + $0x10] sm:$0xf]
        %v3895 = vld [vmem:[%s3889 + $0x14] sm:$0xf]
        %v3896 = vld [vmem:[%s3889 + $0x18] sm:$0xf]
        %v3897 = vld [vmem:[%s3889 + $0x1c] sm:$0xf]
        %v3898 = vld [vmem:[%s3889 + $0x20] sm:$0xf]
        %v3899 = vld [vmem:[%s3889 + $0x24] sm:$0xf]
        %v3900 = vld [vmem:[%s3889 + $0x28] sm:$0xf]
        %v3901 = vld [vmem:[%s3889 + $0x2c] sm:$0xf]
        %v3910 = vunpack.c.l.b16 %v3624
        %v3911 = vunpack.c.l.b16 %v3626
        %v3912 = vunpack.c.l.b16 %v3628
        %v3913 = vunpack.c.l.b16 %v3630
        %v3914 = vunpack.c.l.b16 %v3632
        %v3915 = vunpack.c.l.b16 %v3634
        %v3916 = vunpack.c.l.b16 %v3636
        %v3917 = vunpack.c.l.b16 %v3638
        %v3918 = vpack.c.b16 %v3911, %v3910
        %v3919 = vpack.c.b16 %v3913, %v3912
        %v3920 = vpack.c.b16 %v3915, %v3914
        %v3921 = vpack.c.b16 %v3917, %v3916
        %v3934 = vunpack.c.l.b16 %v3890
        %v3935 = vunpack.c.l.b16 %v3891
        %v3936 = vunpack.c.l.b16 %v3892
        %v3937 = vunpack.c.l.b16 %v3893
        %v3938 = vunpack.c.l.b16 %v3894
        %v3939 = vunpack.c.l.b16 %v3895
        %v3940 = vunpack.c.l.b16 %v3896
        %v3941 = vunpack.c.l.b16 %v3897
        %v3942 = vunpack.c.l.b16 %v3898
        %v3943 = vunpack.c.l.b16 %v3899
        %v3944 = vunpack.c.l.b16 %v3900
        %v3945 = vunpack.c.l.b16 %v3901
        %v3946 = vpack.c.b16 %v3935, %v3934
        %v3947 = vpack.c.b16 %v3937, %v3936
        %v3948 = vpack.c.b16 %v3939, %v3938
        %v3949 = vpack.c.b16 %v3941, %v3940
        %v3950 = vpack.c.b16 %v3943, %v3942
        %v3951 = vpack.c.b16 %v3945, %v3944
        %v3959 = vsel %vm1013, %v3918, 0
        %v3962 = vsel %vm1013, %v3919, 0
        %v3965 = vsel %vm1013, %v3920, 0
        %v3968 = vsel %vm1013, %v3921, 0
        %3970 = vmatprep.subr.bf16.mxu0 0
        %3971 = vmatpush1.bf16.msra.mxu0 %v3946
        %3972 = vmatprep.subr.bf16.mxu0 0
        %3973 = vmatpush1.bf16.msra.mxu0 %v3947
        %3974 = vmatprep.subr.bf16.mxu0 0
        %3975 = vmatpush1.bf16.msra.mxu0 %v3948
        %3976 = vmatprep.subr.bf16.mxu0 0
        %3977 = vmatpush1.bf16.msra.mxu0 %v3949
        %3978 = vmatprep.subr.bf16.mxu0 0
        %3979 = vmatpush1.bf16.msra.mxu0 %v3950
        %3980 = vmatprep.subr.bf16.mxu0 0
        %3981 = vmatpush1.bf16.msra.mxu0 %v3951
        %3982 = vmatprep.subr.bf16.mxu0 0
        %3983 = vmatpush1.bf16.msra.mxu0 0
        %3984 = vmatprep.subr.bf16.mxu0 0
        %3985 = vmatpush1.bf16.msra.mxu0 0
        %3986 = vmatprep.subr.bf16.mxu0 0
        %3987 = vmatpush1.bf16.msra.mxu0 0
        %3988 = vmatprep.subr.bf16.mxu0 0
        %3989 = vmatpush1.bf16.msra.mxu0 0
        %3990 = vmatprep.subr.bf16.mxu0 0
        %3991 = vmatpush1.bf16.msra.mxu0 0
        %3992 = vmatprep.subr.bf16.mxu0 0
        %3993 = vmatpush1.bf16.msra.mxu0 0
        %3994 = vmatprep.subr.bf16.mxu0 0
        %3995 = vmatpush1.bf16.msra.mxu0 0
        %3996 = vmatprep.subr.bf16.mxu0 0
        %3997 = vmatpush1.bf16.msra.mxu0 0
        %3998 = vmatprep.subr.bf16.mxu0 0
        %3999 = vmatpush1.bf16.msra.mxu0 0
        %4000 = vmatprep.subr.bf16.mxu0 0
        %4001 = vmatpush1.bf16.msra.mxu0 0
        %4002 = vmatprep.mubr.bf16.mxu0 0
        %4003 = vmatmul.mubr.bf16.gmra.mrb[0].mxu0 %v3959
        %v4004 = vpop.f32.mrb[0].mxu0
        %v4005 = vadd.f32 0.0, %v4004
        %v4006 = vpop.f32.mrb[0].mxu0
        %v4007 = vpop.f32.mrb[0].mxu0
        %v4008 = vadd.f32 0.0, %v4007
        %v4009 = vpop.f32.mrb[0].mxu0
        %4010 = vmatprep.mubr.bf16.mxu0 0
        %4011 = vmatmul.mubr.bf16.gmra.mrb[0].mxu0 %v3962
        %v4012 = vpop.f32.mrb[0].mxu0
        %v4013 = vadd.f32 0.0, %v4012
        %v4014 = vpop.f32.mrb[0].mxu0
        %v4015 = vpop.f32.mrb[0].mxu0
        %v4016 = vadd.f32 0.0, %v4015
        %v4017 = vpop.f32.mrb[0].mxu0
        %4018 = vmatprep.mubr.bf16.mxu0 0
        %4019 = vmatmul.mubr.bf16.gmra.mrb[0].mxu0 %v3965
        %v4020 = vpop.f32.mrb[0].mxu0
        %v4021 = vadd.f32 0.0, %v4020
        %v4022 = vpop.f32.mrb[0].mxu0
        %v4023 = vpop.f32.mrb[0].mxu0
        %v4024 = vadd.f32 0.0, %v4023
        %v4025 = vpop.f32.mrb[0].mxu0
        %4026 = vmatprep.mubr.bf16.mxu0 0
        %4027 = vmatmul.mubr.bf16.gmra.mrb[0].mxu0 %v3968
        %v4028 = vpop.f32.mrb[0].mxu0
        %v4029 = vadd.f32 0.0, %v4028
        %v4030 = vpop.f32.mrb[0].mxu0
        %v4031 = vpop.f32.mrb[0].mxu0
        %v4032 = vadd.f32 0.0, %v4031
        %v4033 = vpop.f32.mrb[0].mxu0
        %4034 = vdwg.mxu0
        %v4035 = vadd.f32 %v3881, %v4005
        %v4036 = vadd.f32 %v3882, %v4008
        %v4037 = vadd.f32 %v3883, %v4013
        %v4038 = vadd.f32 %v3884, %v4016
        %v4039 = vadd.f32 %v3885, %v4021
        %v4040 = vadd.f32 %v3886, %v4024
        %v4041 = vadd.f32 %v3887, %v4029
        %v4042 = vadd.f32 %v3888, %v4032
        %v4043 = vld [vmem:[%s800 + $0x4] sm:$0xf]
        %v4044 = vld [vmem:[%s800 + $0x8] sm:$0x1]
        %v4045 = vld [vmem:[%s800 + $0x10] sm:$0xf]
        %v4046 = vld [vmem:[%s800 + $0x14] sm:$0x1]
        %v4047 = vld [vmem:[%s800 + $0x1c] sm:$0xf]
        %v4048 = vld [vmem:[%s800 + $0x20] sm:$0x1]
        %v4049 = vld [vmem:[%s800 + $0x28] sm:$0xf]
        %v4050 = vld [vmem:[%s800 + $0x2c] sm:$0x1]
        %v4051 = vld [vmem:[%s800 + $0x34] sm:$0xf]
        %v4052 = vld [vmem:[%s800 + $0x38] sm:$0x1]
        %v4053 = vld [vmem:[%s800 + $0x40] sm:$0xf]
        %v4054 = vld [vmem:[%s800 + $0x44] sm:$0x1]
        %v4055 = vld [vmem:[%s800 + $0x4c] sm:$0xf]
        %v4056 = vld [vmem:[%s800 + $0x50] sm:$0x1]
        %v4057 = vld [vmem:[%s800 + $0x58] sm:$0xf]
        %v4058 = vld [vmem:[%s800 + $0x5c] sm:$0x1]
        %v4060 = vshrl.u32 %v4043, 16
        %v4062 = vrot.slane %v4060, 4
        %v4063 = vshll.u32 %v4043, 16
        %v4065 = vrot.slane %v4063, 5
        %v4066 = vor.u32 %v4062, %v4065
        %v4067 = vrot.slane %v4066, 4
        %v4069 = vshll.u32 %v4044, 16
        %v4071 = vrot.slane %v4069, 5
        %v4072 = vsel %vm1234, %v4067, %v4071
        %v4074 = vshrl.u32 %v4045, 16
        %v4076 = vrot.slane %v4074, 4
        %v4077 = vshll.u32 %v4045, 16
        %v4079 = vrot.slane %v4077, 5
        %v4080 = vor.u32 %v4076, %v4079
        %v4081 = vrot.slane %v4080, 4
        %v4083 = vshll.u32 %v4046, 16
        %v4085 = vrot.slane %v4083, 5
        %v4086 = vsel %vm1234, %v4081, %v4085
        %v4088 = vshrl.u32 %v4047, 16
        %v4090 = vrot.slane %v4088, 4
        %v4091 = vshll.u32 %v4047, 16
        %v4093 = vrot.slane %v4091, 5
        %v4094 = vor.u32 %v4090, %v4093
        %v4095 = vrot.slane %v4094, 4
        %v4097 = vshll.u32 %v4048, 16
        %v4099 = vrot.slane %v4097, 5
        %v4100 = vsel %vm1234, %v4095, %v4099
        %v4102 = vshrl.u32 %v4049, 16
        %v4104 = vrot.slane %v4102, 4
        %v4105 = vshll.u32 %v4049, 16
        %v4107 = vrot.slane %v4105, 5
        %v4108 = vor.u32 %v4104, %v4107
        %v4109 = vrot.slane %v4108, 4
        %v4111 = vshll.u32 %v4050, 16
        %v4113 = vrot.slane %v4111, 5
        %v4114 = vsel %vm1234, %v4109, %v4113
        %v4116 = vshrl.u32 %v4051, 16
        %v4118 = vrot.slane %v4116, 4
        %v4119 = vshll.u32 %v4051, 16
        %v4121 = vrot.slane %v4119, 5
        %v4122 = vor.u32 %v4118, %v4121
        %v4123 = vrot.slane %v4122, 4
        %v4125 = vshll.u32 %v4052, 16
        %v4127 = vrot.slane %v4125, 5
        %v4128 = vsel %vm1234, %v4123, %v4127
        %v4130 = vshrl.u32 %v4053, 16
        %v4132 = vrot.slane %v4130, 4
        %v4133 = vshll.u32 %v4053, 16
        %v4135 = vrot.slane %v4133, 5
        %v4136 = vor.u32 %v4132, %v4135
        %v4137 = vrot.slane %v4136, 4
        %v4139 = vshll.u32 %v4054, 16
        %v4141 = vrot.slane %v4139, 5
        %v4142 = vsel %vm1234, %v4137, %v4141
        %v4144 = vshrl.u32 %v4055, 16
        %v4146 = vrot.slane %v4144, 4
        %v4147 = vshll.u32 %v4055, 16
        %v4149 = vrot.slane %v4147, 5
        %v4150 = vor.u32 %v4146, %v4149
        %v4151 = vrot.slane %v4150, 4
        %v4153 = vshll.u32 %v4056, 16
        %v4155 = vrot.slane %v4153, 5
        %v4156 = vsel %vm1234, %v4151, %v4155
        %v4158 = vshrl.u32 %v4057, 16
        %v4160 = vrot.slane %v4158, 4
        %v4161 = vshll.u32 %v4057, 16
        %v4163 = vrot.slane %v4161, 5
        %v4164 = vor.u32 %v4160, %v4163
        %v4165 = vrot.slane %v4164, 4
        %v4167 = vshll.u32 %v4058, 16
        %v4169 = vrot.slane %v4167, 5
        %v4170 = vsel %vm1234, %v4165, %v4169
        %s4171 = scalar_lea.vmem %s5, 240
        %v4172 = vld [vmem:[%s4171] sm:$0xf]
        %v4173 = vld [vmem:[%s4171 + $0x4] sm:$0xf]
        %v4174 = vld [vmem:[%s4171 + $0x8] sm:$0xf]
        %v4175 = vld [vmem:[%s4171 + $0xc] sm:$0xf]
        %v4176 = vld [vmem:[%s4171 + $0x10] sm:$0xf]
        %v4177 = vld [vmem:[%s4171 + $0x14] sm:$0xf]
        %v4178 = vld [vmem:[%s4171 + $0x18] sm:$0xf]
        %v4179 = vld [vmem:[%s4171 + $0x1c] sm:$0xf]
        %v4180 = vld [vmem:[%s4171 + $0x20] sm:$0xf]
        %v4181 = vld [vmem:[%s4171 + $0x24] sm:$0xf]
        %v4182 = vld [vmem:[%s4171 + $0x28] sm:$0xf]
        %v4183 = vld [vmem:[%s4171 + $0x2c] sm:$0xf]
        %v4184 = vunpack.c.l.b16 %v4072
        %v4185 = vunpack.c.l.b16 %v4086
        %v4186 = vunpack.c.l.b16 %v4100
        %v4187 = vunpack.c.l.b16 %v4114
        %v4188 = vunpack.c.l.b16 %v4128
        %v4189 = vunpack.c.l.b16 %v4142
        %v4190 = vunpack.c.l.b16 %v4156
        %v4191 = vunpack.c.l.b16 %v4170
        %v4192 = vpack.c.b16 %v4185, %v4184
        %v4193 = vpack.c.b16 %v4187, %v4186
        %v4194 = vpack.c.b16 %v4189, %v4188
        %v4195 = vpack.c.b16 %v4191, %v4190
        %v4208 = vunpack.c.l.b16 %v4172
        %v4209 = vunpack.c.l.b16 %v4173
        %v4210 = vunpack.c.l.b16 %v4174
        %v4211 = vunpack.c.l.b16 %v4175
        %v4212 = vunpack.c.l.b16 %v4176
        %v4213 = vunpack.c.l.b16 %v4177
        %v4214 = vunpack.c.l.b16 %v4178
        %v4215 = vunpack.c.l.b16 %v4179
        %v4216 = vunpack.c.l.b16 %v4180
        %v4217 = vunpack.c.l.b16 %v4181
        %v4218 = vunpack.c.l.b16 %v4182
        %v4219 = vunpack.c.l.b16 %v4183
        %v4220 = vpack.c.b16 %v4209, %v4208
        %v4221 = vpack.c.b16 %v4211, %v4210
        %v4222 = vpack.c.b16 %v4213, %v4212
        %v4223 = vpack.c.b16 %v4215, %v4214
        %v4224 = vpack.c.b16 %v4217, %v4216
        %v4225 = vpack.c.b16 %v4219, %v4218
        %v4233 = vsel %vm1013, %v4192, 0
        %v4236 = vsel %vm1013, %v4193, 0
        %v4239 = vsel %vm1013, %v4194, 0
        %v4242 = vsel %vm1013, %v4195, 0
        %4244 = vmatprep.subr.bf16.mxu0 0
        %4245 = vmatpush1.bf16.msra.mxu0 %v4220
        %4246 = vmatprep.subr.bf16.mxu0 0
        %4247 = vmatpush1.bf16.msra.mxu0 %v4221
        %4248 = vmatprep.subr.bf16.mxu0 0
        %4249 = vmatpush1.bf16.msra.mxu0 %v4222
        %4250 = vmatprep.subr.bf16.mxu0 0
        %4251 = vmatpush1.bf16.msra.mxu0 %v4223
        %4252 = vmatprep.subr.bf16.mxu0 0
        %4253 = vmatpush1.bf16.msra.mxu0 %v4224
        %4254 = vmatprep.subr.bf16.mxu0 0
        %4255 = vmatpush1.bf16.msra.mxu0 %v4225
        %4256 = vmatprep.subr.bf16.mxu0 0
        %4257 = vmatpush1.bf16.msra.mxu0 0
        %4258 = vmatprep.subr.bf16.mxu0 0
        %4259 = vmatpush1.bf16.msra.mxu0 0
        %4260 = vmatprep.subr.bf16.mxu0 0
        %4261 = vmatpush1.bf16.msra.mxu0 0
        %4262 = vmatprep.subr.bf16.mxu0 0
        %4263 = vmatpush1.bf16.msra.mxu0 0
        %4264 = vmatprep.subr.bf16.mxu0 0
        %4265 = vmatpush1.bf16.msra.mxu0 0
        %4266 = vmatprep.subr.bf16.mxu0 0
        %4267 = vmatpush1.bf16.msra.mxu0 0
        %4268 = vmatprep.subr.bf16.mxu0 0
        %4269 = vmatpush1.bf16.msra.mxu0 0
        %4270 = vmatprep.subr.bf16.mxu0 0
        %4271 = vmatpush1.bf16.msra.mxu0 0
        %4272 = vmatprep.subr.bf16.mxu0 0
        %4273 = vmatpush1.bf16.msra.mxu0 0
        %4274 = vmatprep.subr.bf16.mxu0 0
        %4275 = vmatpush1.bf16.msra.mxu0 0
        %4276 = vmatprep.mubr.bf16.mxu0 0
        %4277 = vmatmul.mubr.bf16.gmra.mrb[0].mxu0 %v4233
        %v4278 = vpop.f32.mrb[0].mxu0
        %v4279 = vadd.f32 0.0, %v4278
        %v4280 = vpop.f32.mrb[0].mxu0
        %v4281 = vpop.f32.mrb[0].mxu0
        %v4282 = vadd.f32 0.0, %v4281
        %v4283 = vpop.f32.mrb[0].mxu0
        %4284 = vmatprep.mubr.bf16.mxu0 0
        %4285 = vmatmul.mubr.bf16.gmra.mrb[0].mxu0 %v4236
        %v4286 = vpop.f32.mrb[0].mxu0
        %v4287 = vadd.f32 0.0, %v4286
        %v4288 = vpop.f32.mrb[0].mxu0
        %v4289 = vpop.f32.mrb[0].mxu0
        %v4290 = vadd.f32 0.0, %v4289
        %v4291 = vpop.f32.mrb[0].mxu0
        %4292 = vmatprep.mubr.bf16.mxu0 0
        %4293 = vmatmul.mubr.bf16.gmra.mrb[0].mxu0 %v4239
        %v4294 = vpop.f32.mrb[0].mxu0
        %v4295 = vadd.f32 0.0, %v4294
        %v4296 = vpop.f32.mrb[0].mxu0
        %v4297 = vpop.f32.mrb[0].mxu0
        %v4298 = vadd.f32 0.0, %v4297
        %v4299 = vpop.f32.mrb[0].mxu0
        %4300 = vmatprep.mubr.bf16.mxu0 0
        %4301 = vmatmul.mubr.bf16.gmra.mrb[0].mxu0 %v4242
        %v4302 = vpop.f32.mrb[0].mxu0
        %v4303 = vadd.f32 0.0, %v4302
        %v4304 = vpop.f32.mrb[0].mxu0
        %v4305 = vpop.f32.mrb[0].mxu0
        %v4306 = vadd.f32 0.0, %v4305
        %v4307 = vpop.f32.mrb[0].mxu0
        %4308 = vdwg.mxu0
        %v4309 = vadd.f32 %v4035, %v4279
        %v4310 = vadd.f32 %v4036, %v4282
        %v4311 = vadd.f32 %v4037, %v4287
        %v4312 = vadd.f32 %v4038, %v4290
        %v4313 = vadd.f32 %v4039, %v4295
        %v4314 = vadd.f32 %v4040, %v4298
        %v4315 = vadd.f32 %v4041, %v4303
        %v4316 = vadd.f32 %v4042, %v4306
        %v4317 = vld [vmem:[%s2187] sm:$0x8]
        %v4318 = vld [vmem:[%s2187 + $0x4] sm:$0xf]
        %v4319 = vld [vmem:[%s2187 + $0xc] sm:$0x8]
        %v4320 = vld [vmem:[%s2187 + $0x10] sm:$0xf]
        %v4321 = vld [vmem:[%s2187 + $0x18] sm:$0x8]
        %v4322 = vld [vmem:[%s2187 + $0x1c] sm:$0xf]
        %v4323 = vld [vmem:[%s2187 + $0x24] sm:$0x8]
        %v4324 = vld [vmem:[%s2187 + $0x28] sm:$0xf]
        %v4325 = vld [vmem:[%s2187 + $0x30] sm:$0x8]
        %v4326 = vld [vmem:[%s2187 + $0x34] sm:$0xf]
        %v4327 = vld [vmem:[%s2187 + $0x3c] sm:$0x8]
        %v4328 = vld [vmem:[%s2187 + $0x40] sm:$0xf]
        %v4329 = vld [vmem:[%s2187 + $0x48] sm:$0x8]
        %v4330 = vld [vmem:[%s2187 + $0x4c] sm:$0xf]
        %v4331 = vld [vmem:[%s2187 + $0x54] sm:$0x8]
        %v4332 = vld [vmem:[%s2187 + $0x58] sm:$0xf]
        %v4334 = vshrl.u32 %v4317, 16
        %v4336 = vrot.slane %v4334, 7
        %v4337 = vrot.slane %v4336, 4
        %v4339 = vshrl.u32 %v4318, 16
        %v4341 = vrot.slane %v4339, 7
        %v4342 = vshll.u32 %v4318, 16
        %v4344 = vor.u32 %v4341, %v4342
        %v4345 = vsel %vm827, %v4337, %v4344
        %v4347 = vshrl.u32 %v4319, 16
        %v4349 = vrot.slane %v4347, 7
        %v4350 = vrot.slane %v4349, 4
        %v4352 = vshrl.u32 %v4320, 16
        %v4354 = vrot.slane %v4352, 7
        %v4355 = vshll.u32 %v4320, 16
        %v4357 = vor.u32 %v4354, %v4355
        %v4358 = vsel %vm827, %v4350, %v4357
        %v4360 = vshrl.u32 %v4321, 16
        %v4362 = vrot.slane %v4360, 7
        %v4363 = vrot.slane %v4362, 4
        %v4365 = vshrl.u32 %v4322, 16
        %v4367 = vrot.slane %v4365, 7
        %v4368 = vshll.u32 %v4322, 16
        %v4370 = vor.u32 %v4367, %v4368
        %v4371 = vsel %vm827, %v4363, %v4370
        %v4373 = vshrl.u32 %v4323, 16
        %v4375 = vrot.slane %v4373, 7
        %v4376 = vrot.slane %v4375, 4
        %v4378 = vshrl.u32 %v4324, 16
        %v4380 = vrot.slane %v4378, 7
        %v4381 = vshll.u32 %v4324, 16
        %v4383 = vor.u32 %v4380, %v4381
        %v4384 = vsel %vm827, %v4376, %v4383
        %v4386 = vshrl.u32 %v4325, 16
        %v4388 = vrot.slane %v4386, 7
        %v4389 = vrot.slane %v4388, 4
        %v4391 = vshrl.u32 %v4326, 16
        %v4393 = vrot.slane %v4391, 7
        %v4394 = vshll.u32 %v4326, 16
        %v4396 = vor.u32 %v4393, %v4394
        %v4397 = vsel %vm827, %v4389, %v4396
        %v4399 = vshrl.u32 %v4327, 16
        %v4401 = vrot.slane %v4399, 7
        %v4402 = vrot.slane %v4401, 4
        %v4404 = vshrl.u32 %v4328, 16
        %v4406 = vrot.slane %v4404, 7
        %v4407 = vshll.u32 %v4328, 16
        %v4409 = vor.u32 %v4406, %v4407
        %v4410 = vsel %vm827, %v4402, %v4409
        %v4412 = vshrl.u32 %v4329, 16
        %v4414 = vrot.slane %v4412, 7
        %v4415 = vrot.slane %v4414, 4
        %v4417 = vshrl.u32 %v4330, 16
        %v4419 = vrot.slane %v4417, 7
        %v4420 = vshll.u32 %v4330, 16
        %v4422 = vor.u32 %v4419, %v4420
        %v4423 = vsel %vm827, %v4415, %v4422
        %v4425 = vshrl.u32 %v4331, 16
        %v4427 = vrot.slane %v4425, 7
        %v4428 = vrot.slane %v4427, 4
        %v4430 = vshrl.u32 %v4332, 16
        %v4432 = vrot.slane %v4430, 7
        %v4433 = vshll.u32 %v4332, 16
        %v4435 = vor.u32 %v4432, %v4433
        %v4436 = vsel %vm827, %v4428, %v4435
        %s4437 = scalar_lea.vmem %s5, 288
        %v4438 = vld [vmem:[%s4437] sm:$0xf]
        %v4439 = vld [vmem:[%s4437 + $0x4] sm:$0xf]
        %v4440 = vld [vmem:[%s4437 + $0x8] sm:$0xf]
        %v4441 = vld [vmem:[%s4437 + $0xc] sm:$0xf]
        %v4442 = vld [vmem:[%s4437 + $0x10] sm:$0xf]
        %v4443 = vld [vmem:[%s4437 + $0x14] sm:$0xf]
        %v4444 = vld [vmem:[%s4437 + $0x18] sm:$0xf]
        %v4445 = vld [vmem:[%s4437 + $0x1c] sm:$0xf]
        %v4446 = vld [vmem:[%s4437 + $0x20] sm:$0xf]
        %v4447 = vld [vmem:[%s4437 + $0x24] sm:$0xf]
        %v4448 = vld [vmem:[%s4437 + $0x28] sm:$0xf]
        %v4449 = vld [vmem:[%s4437 + $0x2c] sm:$0xf]
        %v4450 = vunpack.c.l.b16 %v4345
        %v4451 = vunpack.c.l.b16 %v4358
        %v4452 = vunpack.c.l.b16 %v4371
        %v4453 = vunpack.c.l.b16 %v4384
        %v4454 = vunpack.c.l.b16 %v4397
        %v4455 = vunpack.c.l.b16 %v4410
        %v4456 = vunpack.c.l.b16 %v4423
        %v4457 = vunpack.c.l.b16 %v4436
        %v4458 = vpack.c.b16 %v4451, %v4450
        %v4459 = vpack.c.b16 %v4453, %v4452
        %v4460 = vpack.c.b16 %v4455, %v4454
        %v4461 = vpack.c.b16 %v4457, %v4456
        %v4474 = vunpack.c.l.b16 %v4438
        %v4475 = vunpack.c.l.b16 %v4439
        %v4476 = vunpack.c.l.b16 %v4440
        %v4477 = vunpack.c.l.b16 %v4441
        %v4478 = vunpack.c.l.b16 %v4442
        %v4479 = vunpack.c.l.b16 %v4443
        %v4480 = vunpack.c.l.b16 %v4444
        %v4481 = vunpack.c.l.b16 %v4445
        %v4482 = vunpack.c.l.b16 %v4446
        %v4483 = vunpack.c.l.b16 %v4447
        %v4484 = vunpack.c.l.b16 %v4448
        %v4485 = vunpack.c.l.b16 %v4449
        %v4486 = vpack.c.b16 %v4475, %v4474
        %v4487 = vpack.c.b16 %v4477, %v4476
        %v4488 = vpack.c.b16 %v4479, %v4478
        %v4489 = vpack.c.b16 %v4481, %v4480
        %v4490 = vpack.c.b16 %v4483, %v4482
        %v4491 = vpack.c.b16 %v4485, %v4484
        %v4499 = vsel %vm1013, %v4458, 0
        %v4502 = vsel %vm1013, %v4459, 0
        %v4505 = vsel %vm1013, %v4460, 0
        %v4508 = vsel %vm1013, %v4461, 0
        %4510 = vmatprep.subr.bf16.mxu0 0
        %4511 = vmatpush1.bf16.msra.mxu0 %v4486
        %4512 = vmatprep.subr.bf16.mxu0 0
        %4513 = vmatpush1.bf16.msra.mxu0 %v4487
        %4514 = vmatprep.subr.bf16.mxu0 0
        %4515 = vmatpush1.bf16.msra.mxu0 %v4488
        %4516 = vmatprep.subr.bf16.mxu0 0
        %4517 = vmatpush1.bf16.msra.mxu0 %v4489
        %4518 = vmatprep.subr.bf16.mxu0 0
        %4519 = vmatpush1.bf16.msra.mxu0 %v4490
        %4520 = vmatprep.subr.bf16.mxu0 0
        %4521 = vmatpush1.bf16.msra.mxu0 %v4491
        %4522 = vmatprep.subr.bf16.mxu0 0
        %4523 = vmatpush1.bf16.msra.mxu0 0
        %4524 = vmatprep.subr.bf16.mxu0 0
        %4525 = vmatpush1.bf16.msra.mxu0 0
        %4526 = vmatprep.subr.bf16.mxu0 0
        %4527 = vmatpush1.bf16.msra.mxu0 0
        %4528 = vmatprep.subr.bf16.mxu0 0
        %4529 = vmatpush1.bf16.msra.mxu0 0
        %4530 = vmatprep.subr.bf16.mxu0 0
        %4531 = vmatpush1.bf16.msra.mxu0 0
        %4532 = vmatprep.subr.bf16.mxu0 0
        %4533 = vmatpush1.bf16.msra.mxu0 0
        %4534 = vmatprep.subr.bf16.mxu0 0
        %4535 = vmatpush1.bf16.msra.mxu0 0
        %4536 = vmatprep.subr.bf16.mxu0 0
        %4537 = vmatpush1.bf16.msra.mxu0 0
        %4538 = vmatprep.subr.bf16.mxu0 0
        %4539 = vmatpush1.bf16.msra.mxu0 0
        %4540 = vmatprep.subr.bf16.mxu0 0
        %4541 = vmatpush1.bf16.msra.mxu0 0
        %4542 = vmatprep.mubr.bf16.mxu0 0
        %4543 = vmatmul.mubr.bf16.gmra.mrb[0].mxu0 %v4499
        %v4544 = vpop.f32.mrb[0].mxu0
        %v4545 = vadd.f32 0.0, %v4544
        %v4546 = vpop.f32.mrb[0].mxu0
        %v4547 = vpop.f32.mrb[0].mxu0
        %v4548 = vadd.f32 0.0, %v4547
        %v4549 = vpop.f32.mrb[0].mxu0
        %4550 = vmatprep.mubr.bf16.mxu0 0
        %4551 = vmatmul.mubr.bf16.gmra.mrb[0].mxu0 %v4502
        %v4552 = vpop.f32.mrb[0].mxu0
        %v4553 = vadd.f32 0.0, %v4552
        %v4554 = vpop.f32.mrb[0].mxu0
        %v4555 = vpop.f32.mrb[0].mxu0
        %v4556 = vadd.f32 0.0, %v4555
        %v4557 = vpop.f32.mrb[0].mxu0
        %4558 = vmatprep.mubr.bf16.mxu0 0
        %4559 = vmatmul.mubr.bf16.gmra.mrb[0].mxu0 %v4505
        %v4560 = vpop.f32.mrb[0].mxu0
        %v4561 = vadd.f32 0.0, %v4560
        %v4562 = vpop.f32.mrb[0].mxu0
        %v4563 = vpop.f32.mrb[0].mxu0
        %v4564 = vadd.f32 0.0, %v4563
        %v4565 = vpop.f32.mrb[0].mxu0
        %4566 = vmatprep.mubr.bf16.mxu0 0
        %4567 = vmatmul.mubr.bf16.gmra.mrb[0].mxu0 %v4508
        %v4568 = vpop.f32.mrb[0].mxu0
        %v4569 = vadd.f32 0.0, %v4568
        %v4570 = vpop.f32.mrb[0].mxu0
        %v4571 = vpop.f32.mrb[0].mxu0
        %v4572 = vadd.f32 0.0, %v4571
        %v4573 = vpop.f32.mrb[0].mxu0
        %4574 = vdwg.mxu0
        %v4575 = vadd.f32 %v4309, %v4545
        %v4576 = vadd.f32 %v4310, %v4548
        %v4577 = vadd.f32 %v4311, %v4553
        %v4578 = vadd.f32 %v4312, %v4556
        %v4579 = vadd.f32 %v4313, %v4561
        %v4580 = vadd.f32 %v4314, %v4564
        %v4581 = vadd.f32 %v4315, %v4569
        %v4582 = vadd.f32 %v4316, %v4572
        %s4583 = scalar_lea.vmem %s5, 336
        %v4584 = vld [vmem:[%s4583] sm:$0xf]
        %v4585 = vld [vmem:[%s4583 + $0x4] sm:$0xf]
        %v4586 = vld [vmem:[%s4583 + $0x8] sm:$0xf]
        %v4587 = vld [vmem:[%s4583 + $0xc] sm:$0xf]
        %v4588 = vld [vmem:[%s4583 + $0x10] sm:$0xf]
        %v4589 = vld [vmem:[%s4583 + $0x14] sm:$0xf]
        %v4590 = vld [vmem:[%s4583 + $0x18] sm:$0xf]
        %v4591 = vld [vmem:[%s4583 + $0x1c] sm:$0xf]
        %v4592 = vld [vmem:[%s4583 + $0x20] sm:$0xf]
        %v4593 = vld [vmem:[%s4583 + $0x24] sm:$0xf]
        %v4594 = vld [vmem:[%s4583 + $0x28] sm:$0xf]
        %v4595 = vld [vmem:[%s4583 + $0x2c] sm:$0xf]
        %v4604 = vunpack.c.l.b16 %v4318
        %v4605 = vunpack.c.l.b16 %v4320
        %v4606 = vunpack.c.l.b16 %v4322
        %v4607 = vunpack.c.l.b16 %v4324
        %v4608 = vunpack.c.l.b16 %v4326
        %v4609 = vunpack.c.l.b16 %v4328
        %v4610 = vunpack.c.l.b16 %v4330
        %v4611 = vunpack.c.l.b16 %v4332
        %v4612 = vpack.c.b16 %v4605, %v4604
        %v4613 = vpack.c.b16 %v4607, %v4606
        %v4614 = vpack.c.b16 %v4609, %v4608
        %v4615 = vpack.c.b16 %v4611, %v4610
        %v4628 = vunpack.c.l.b16 %v4584
        %v4629 = vunpack.c.l.b16 %v4585
        %v4630 = vunpack.c.l.b16 %v4586
        %v4631 = vunpack.c.l.b16 %v4587
        %v4632 = vunpack.c.l.b16 %v4588
        %v4633 = vunpack.c.l.b16 %v4589
        %v4634 = vunpack.c.l.b16 %v4590
        %v4635 = vunpack.c.l.b16 %v4591
        %v4636 = vunpack.c.l.b16 %v4592
        %v4637 = vunpack.c.l.b16 %v4593
        %v4638 = vunpack.c.l.b16 %v4594
        %v4639 = vunpack.c.l.b16 %v4595
        %v4640 = vpack.c.b16 %v4629, %v4628
        %v4641 = vpack.c.b16 %v4631, %v4630
        %v4642 = vpack.c.b16 %v4633, %v4632
        %v4643 = vpack.c.b16 %v4635, %v4634
        %v4644 = vpack.c.b16 %v4637, %v4636
        %v4645 = vpack.c.b16 %v4639, %v4638
        %v4653 = vsel %vm1013, %v4612, 0
        %v4656 = vsel %vm1013, %v4613, 0
        %v4659 = vsel %vm1013, %v4614, 0
        %v4662 = vsel %vm1013, %v4615, 0
        %4664 = vmatprep.subr.bf16.mxu0 0
        %4665 = vmatpush1.bf16.msra.mxu0 %v4640
        %4666 = vmatprep.subr.bf16.mxu0 0
        %4667 = vmatpush1.bf16.msra.mxu0 %v4641
        %4668 = vmatprep.subr.bf16.mxu0 0
        %4669 = vmatpush1.bf16.msra.mxu0 %v4642
        %4670 = vmatprep.subr.bf16.mxu0 0
        %4671 = vmatpush1.bf16.msra.mxu0 %v4643
        %4672 = vmatprep.subr.bf16.mxu0 0
        %4673 = vmatpush1.bf16.msra.mxu0 %v4644
        %4674 = vmatprep.subr.bf16.mxu0 0
        %4675 = vmatpush1.bf16.msra.mxu0 %v4645
        %4676 = vmatprep.subr.bf16.mxu0 0
        %4677 = vmatpush1.bf16.msra.mxu0 0
        %4678 = vmatprep.subr.bf16.mxu0 0
        %4679 = vmatpush1.bf16.msra.mxu0 0
        %4680 = vmatprep.subr.bf16.mxu0 0
        %4681 = vmatpush1.bf16.msra.mxu0 0
        %4682 = vmatprep.subr.bf16.mxu0 0
        %4683 = vmatpush1.bf16.msra.mxu0 0
        %4684 = vmatprep.subr.bf16.mxu0 0
        %4685 = vmatpush1.bf16.msra.mxu0 0
        %4686 = vmatprep.subr.bf16.mxu0 0
        %4687 = vmatpush1.bf16.msra.mxu0 0
        %4688 = vmatprep.subr.bf16.mxu0 0
        %4689 = vmatpush1.bf16.msra.mxu0 0
        %4690 = vmatprep.subr.bf16.mxu0 0
        %4691 = vmatpush1.bf16.msra.mxu0 0
        %4692 = vmatprep.subr.bf16.mxu0 0
        %4693 = vmatpush1.bf16.msra.mxu0 0
        %4694 = vmatprep.subr.bf16.mxu0 0
        %4695 = vmatpush1.bf16.msra.mxu0 0
        %4696 = vmatprep.mubr.bf16.mxu0 0
        %4697 = vmatmul.mubr.bf16.gmra.mrb[0].mxu0 %v4653
        %v4698 = vpop.f32.mrb[0].mxu0
        %v4699 = vadd.f32 0.0, %v4698
        %v4700 = vpop.f32.mrb[0].mxu0
        %v4701 = vpop.f32.mrb[0].mxu0
        %v4702 = vadd.f32 0.0, %v4701
        %v4703 = vpop.f32.mrb[0].mxu0
        %4704 = vmatprep.mubr.bf16.mxu0 0
        %4705 = vmatmul.mubr.bf16.gmra.mrb[0].mxu0 %v4656
        %v4706 = vpop.f32.mrb[0].mxu0
        %v4707 = vadd.f32 0.0, %v4706
        %v4708 = vpop.f32.mrb[0].mxu0
        %v4709 = vpop.f32.mrb[0].mxu0
        %v4710 = vadd.f32 0.0, %v4709
        %v4711 = vpop.f32.mrb[0].mxu0
        %4712 = vmatprep.mubr.bf16.mxu0 0
        %4713 = vmatmul.mubr.bf16.gmra.mrb[0].mxu0 %v4659
        %v4714 = vpop.f32.mrb[0].mxu0
        %v4715 = vadd.f32 0.0, %v4714
        %v4716 = vpop.f32.mrb[0].mxu0
        %v4717 = vpop.f32.mrb[0].mxu0
        %v4718 = vadd.f32 0.0, %v4717
        %v4719 = vpop.f32.mrb[0].mxu0
        %4720 = vmatprep.mubr.bf16.mxu0 0
        %4721 = vmatmul.mubr.bf16.gmra.mrb[0].mxu0 %v4662
        %v4722 = vpop.f32.mrb[0].mxu0
        %v4723 = vadd.f32 0.0, %v4722
        %v4724 = vpop.f32.mrb[0].mxu0
        %v4725 = vpop.f32.mrb[0].mxu0
        %v4726 = vadd.f32 0.0, %v4725
        %v4727 = vpop.f32.mrb[0].mxu0
        %4728 = vdwg.mxu0
        %v4729 = vadd.f32 %v4575, %v4699
        %v4730 = vadd.f32 %v4576, %v4702
        %v4731 = vadd.f32 %v4577, %v4707
        %v4732 = vadd.f32 %v4578, %v4710
        %v4733 = vadd.f32 %v4579, %v4715
        %v4734 = vadd.f32 %v4580, %v4718
        %v4735 = vadd.f32 %v4581, %v4723
        %v4736 = vadd.f32 %v4582, %v4726
        %v4737 = vld [vmem:[%s2187 + $0x4] sm:$0xf]
        %v4738 = vld [vmem:[%s2187 + $0x8] sm:$0x1]
        %v4739 = vld [vmem:[%s2187 + $0x10] sm:$0xf]
        %v4740 = vld [vmem:[%s2187 + $0x14] sm:$0x1]
        %v4741 = vld [vmem:[%s2187 + $0x1c] sm:$0xf]
        %v4742 = vld [vmem:[%s2187 + $0x20] sm:$0x1]
        %v4743 = vld [vmem:[%s2187 + $0x28] sm:$0xf]
        %v4744 = vld [vmem:[%s2187 + $0x2c] sm:$0x1]
        %v4745 = vld [vmem:[%s2187 + $0x34] sm:$0xf]
        %v4746 = vld [vmem:[%s2187 + $0x38] sm:$0x1]
        %v4747 = vld [vmem:[%s2187 + $0x40] sm:$0xf]
        %v4748 = vld [vmem:[%s2187 + $0x44] sm:$0x1]
        %v4749 = vld [vmem:[%s2187 + $0x4c] sm:$0xf]
        %v4750 = vld [vmem:[%s2187 + $0x50] sm:$0x1]
        %v4751 = vld [vmem:[%s2187 + $0x58] sm:$0xf]
        %v4752 = vld [vmem:[%s2187 + $0x5c] sm:$0x1]
        %v4754 = vshrl.u32 %v4737, 16
        %v4756 = vrot.slane %v4754, 4
        %v4757 = vshll.u32 %v4737, 16
        %v4759 = vrot.slane %v4757, 5
        %v4760 = vor.u32 %v4756, %v4759
        %v4761 = vrot.slane %v4760, 4
        %v4763 = vshll.u32 %v4738, 16
        %v4765 = vrot.slane %v4763, 5
        %v4766 = vsel %vm1234, %v4761, %v4765
        %v4768 = vshrl.u32 %v4739, 16
        %v4770 = vrot.slane %v4768, 4
        %v4771 = vshll.u32 %v4739, 16
        %v4773 = vrot.slane %v4771, 5
        %v4774 = vor.u32 %v4770, %v4773
        %v4775 = vrot.slane %v4774, 4
        %v4777 = vshll.u32 %v4740, 16
        %v4779 = vrot.slane %v4777, 5
        %v4780 = vsel %vm1234, %v4775, %v4779
        %v4782 = vshrl.u32 %v4741, 16
        %v4784 = vrot.slane %v4782, 4
        %v4785 = vshll.u32 %v4741, 16
        %v4787 = vrot.slane %v4785, 5
        %v4788 = vor.u32 %v4784, %v4787
        %v4789 = vrot.slane %v4788, 4
        %v4791 = vshll.u32 %v4742, 16
        %v4793 = vrot.slane %v4791, 5
        %v4794 = vsel %vm1234, %v4789, %v4793
        %v4796 = vshrl.u32 %v4743, 16
        %v4798 = vrot.slane %v4796, 4
        %v4799 = vshll.u32 %v4743, 16
        %v4801 = vrot.slane %v4799, 5
        %v4802 = vor.u32 %v4798, %v4801
        %v4803 = vrot.slane %v4802, 4
        %v4805 = vshll.u32 %v4744, 16
        %v4807 = vrot.slane %v4805, 5
        %v4808 = vsel %vm1234, %v4803, %v4807
        %v4810 = vshrl.u32 %v4745, 16
        %v4812 = vrot.slane %v4810, 4
        %v4813 = vshll.u32 %v4745, 16
        %v4815 = vrot.slane %v4813, 5
        %v4816 = vor.u32 %v4812, %v4815
        %v4817 = vrot.slane %v4816, 4
        %v4819 = vshll.u32 %v4746, 16
        %v4821 = vrot.slane %v4819, 5
        %v4822 = vsel %vm1234, %v4817, %v4821
        %v4824 = vshrl.u32 %v4747, 16
        %v4826 = vrot.slane %v4824, 4
        %v4827 = vshll.u32 %v4747, 16
        %v4829 = vrot.slane %v4827, 5
        %v4830 = vor.u32 %v4826, %v4829
        %v4831 = vrot.slane %v4830, 4
        %v4833 = vshll.u32 %v4748, 16
        %v4835 = vrot.slane %v4833, 5
        %v4836 = vsel %vm1234, %v4831, %v4835
        %v4838 = vshrl.u32 %v4749, 16
        %v4840 = vrot.slane %v4838, 4
        %v4841 = vshll.u32 %v4749, 16
        %v4843 = vrot.slane %v4841, 5
        %v4844 = vor.u32 %v4840, %v4843
        %v4845 = vrot.slane %v4844, 4
        %v4847 = vshll.u32 %v4750, 16
        %v4849 = vrot.slane %v4847, 5
        %v4850 = vsel %vm1234, %v4845, %v4849
        %v4852 = vshrl.u32 %v4751, 16
        %v4854 = vrot.slane %v4852, 4
        %v4855 = vshll.u32 %v4751, 16
        %v4857 = vrot.slane %v4855, 5
        %v4858 = vor.u32 %v4854, %v4857
        %v4859 = vrot.slane %v4858, 4
        %v4861 = vshll.u32 %v4752, 16
        %v4863 = vrot.slane %v4861, 5
        %v4864 = vsel %vm1234, %v4859, %v4863
        %s4865 = scalar_lea.vmem %s5, 384
        %v4866 = vld [vmem:[%s4865] sm:$0xf]
        %v4867 = vld [vmem:[%s4865 + $0x4] sm:$0xf]
        %v4868 = vld [vmem:[%s4865 + $0x8] sm:$0xf]
        %v4869 = vld [vmem:[%s4865 + $0xc] sm:$0xf]
        %v4870 = vld [vmem:[%s4865 + $0x10] sm:$0xf]
        %v4871 = vld [vmem:[%s4865 + $0x14] sm:$0xf]
        %v4872 = vld [vmem:[%s4865 + $0x18] sm:$0xf]
        %v4873 = vld [vmem:[%s4865 + $0x1c] sm:$0xf]
        %v4874 = vld [vmem:[%s4865 + $0x20] sm:$0xf]
        %v4875 = vld [vmem:[%s4865 + $0x24] sm:$0xf]
        %v4876 = vld [vmem:[%s4865 + $0x28] sm:$0xf]
        %v4877 = vld [vmem:[%s4865 + $0x2c] sm:$0xf]
        %v4878 = vunpack.c.l.b16 %v4766
        %v4879 = vunpack.c.l.b16 %v4780
        %v4880 = vunpack.c.l.b16 %v4794
        %v4881 = vunpack.c.l.b16 %v4808
        %v4882 = vunpack.c.l.b16 %v4822
        %v4883 = vunpack.c.l.b16 %v4836
        %v4884 = vunpack.c.l.b16 %v4850
        %v4885 = vunpack.c.l.b16 %v4864
        %v4886 = vpack.c.b16 %v4879, %v4878
        %v4887 = vpack.c.b16 %v4881, %v4880
        %v4888 = vpack.c.b16 %v4883, %v4882
        %v4889 = vpack.c.b16 %v4885, %v4884
        %v4902 = vunpack.c.l.b16 %v4866
        %v4903 = vunpack.c.l.b16 %v4867
        %v4904 = vunpack.c.l.b16 %v4868
        %v4905 = vunpack.c.l.b16 %v4869
        %v4906 = vunpack.c.l.b16 %v4870
        %v4907 = vunpack.c.l.b16 %v4871
        %v4908 = vunpack.c.l.b16 %v4872
        %v4909 = vunpack.c.l.b16 %v4873
        %v4910 = vunpack.c.l.b16 %v4874
        %v4911 = vunpack.c.l.b16 %v4875
        %v4912 = vunpack.c.l.b16 %v4876
        %v4913 = vunpack.c.l.b16 %v4877
        %v4914 = vpack.c.b16 %v4903, %v4902
        %v4915 = vpack.c.b16 %v4905, %v4904
        %v4916 = vpack.c.b16 %v4907, %v4906
        %v4917 = vpack.c.b16 %v4909, %v4908
        %v4918 = vpack.c.b16 %v4911, %v4910
        %v4919 = vpack.c.b16 %v4913, %v4912
        %v4927 = vsel %vm1013, %v4886, 0
        %v4930 = vsel %vm1013, %v4887, 0
        %v4933 = vsel %vm1013, %v4888, 0
        %v4936 = vsel %vm1013, %v4889, 0
        %4938 = vmatprep.subr.bf16.mxu0 0
        %4939 = vmatpush1.bf16.msra.mxu0 %v4914
        %4940 = vmatprep.subr.bf16.mxu0 0
        %4941 = vmatpush1.bf16.msra.mxu0 %v4915
        %4942 = vmatprep.subr.bf16.mxu0 0
        %4943 = vmatpush1.bf16.msra.mxu0 %v4916
        %4944 = vmatprep.subr.bf16.mxu0 0
        %4945 = vmatpush1.bf16.msra.mxu0 %v4917
        %4946 = vmatprep.subr.bf16.mxu0 0
        %4947 = vmatpush1.bf16.msra.mxu0 %v4918
        %4948 = vmatprep.subr.bf16.mxu0 0
        %4949 = vmatpush1.bf16.msra.mxu0 %v4919
        %4950 = vmatprep.subr.bf16.mxu0 0
        %4951 = vmatpush1.bf16.msra.mxu0 0
        %4952 = vmatprep.subr.bf16.mxu0 0
        %4953 = vmatpush1.bf16.msra.mxu0 0
        %4954 = vmatprep.subr.bf16.mxu0 0
        %4955 = vmatpush1.bf16.msra.mxu0 0
        %4956 = vmatprep.subr.bf16.mxu0 0
        %4957 = vmatpush1.bf16.msra.mxu0 0
        %4958 = vmatprep.subr.bf16.mxu0 0
        %4959 = vmatpush1.bf16.msra.mxu0 0
        %4960 = vmatprep.subr.bf16.mxu0 0
        %4961 = vmatpush1.bf16.msra.mxu0 0
        %4962 = vmatprep.subr.bf16.mxu0 0
        %4963 = vmatpush1.bf16.msra.mxu0 0
        %4964 = vmatprep.subr.bf16.mxu0 0
        %4965 = vmatpush1.bf16.msra.mxu0 0
        %4966 = vmatprep.subr.bf16.mxu0 0
        %4967 = vmatpush1.bf16.msra.mxu0 0
        %4968 = vmatprep.subr.bf16.mxu0 0
        %4969 = vmatpush1.bf16.msra.mxu0 0
        %4970 = vmatprep.mubr.bf16.mxu0 0
        %4971 = vmatmul.mubr.bf16.gmra.mrb[0].mxu0 %v4927
        %v4972 = vpop.f32.mrb[0].mxu0
        %v4973 = vadd.f32 0.0, %v4972
        %v4974 = vpop.f32.mrb[0].mxu0
        %v4975 = vpop.f32.mrb[0].mxu0
        %v4976 = vadd.f32 0.0, %v4975
        %v4977 = vpop.f32.mrb[0].mxu0
        %4978 = vmatprep.mubr.bf16.mxu0 0
        %4979 = vmatmul.mubr.bf16.gmra.mrb[0].mxu0 %v4930
        %v4980 = vpop.f32.mrb[0].mxu0
        %v4981 = vadd.f32 0.0, %v4980
        %v4982 = vpop.f32.mrb[0].mxu0
        %v4983 = vpop.f32.mrb[0].mxu0
        %v4984 = vadd.f32 0.0, %v4983
        %v4985 = vpop.f32.mrb[0].mxu0
        %4986 = vmatprep.mubr.bf16.mxu0 0
        %4987 = vmatmul.mubr.bf16.gmra.mrb[0].mxu0 %v4933
        %v4988 = vpop.f32.mrb[0].mxu0
        %v4989 = vadd.f32 0.0, %v4988
        %v4990 = vpop.f32.mrb[0].mxu0
        %v4991 = vpop.f32.mrb[0].mxu0
        %v4992 = vadd.f32 0.0, %v4991
        %v4993 = vpop.f32.mrb[0].mxu0
        %4994 = vmatprep.mubr.bf16.mxu0 0
        %4995 = vmatmul.mubr.bf16.gmra.mrb[0].mxu0 %v4936
        %v4996 = vpop.f32.mrb[0].mxu0
        %v4997 = vadd.f32 0.0, %v4996
        %v4998 = vpop.f32.mrb[0].mxu0
        %v4999 = vpop.f32.mrb[0].mxu0
        %v5000 = vadd.f32 0.0, %v4999
        %v5001 = vpop.f32.mrb[0].mxu0
        %5002 = vdwg.mxu0
        %v5003 = vadd.f32 %v4729, %v4973
        %v5004 = vadd.f32 %v4730, %v4976
        %v5005 = vadd.f32 %v4731, %v4981
        %v5006 = vadd.f32 %v4732, %v4984
        %v5007 = vadd.f32 %v4733, %v4989
        %v5008 = vadd.f32 %v4734, %v4992
        %v5009 = vadd.f32 %v4735, %v4997
        %v5010 = vadd.f32 %v4736, %v5000
        %v5011 = vld [vmem:[%s6] sm:$0x1]
        %v5013 = vlaneseq
        %v5014 = vshrl.u32 %v5013, 7
        %v5015 = vsub.s32 0, %v5014
        %v5016 = vrot.slane %v5011, %v5015
        %v5018 = vadd.f32 %v5003, %v5016
        %v5019 = vadd.f32 %v5004, %v5016
        %v5020 = vadd.f32 %v5005, %v5016
        %v5021 = vadd.f32 %v5006, %v5016
        %v5022 = vadd.f32 %v5007, %v5016
        %v5023 = vadd.f32 %v5008, %v5016
        %v5024 = vadd.f32 %v5009, %v5016
        %v5025 = vadd.f32 %v5010, %v5016
        %v5026 = vmax.f32 %v5018, 0.0
        %v5027 = vmax.f32 %v5019, 0.0
        %v5028 = vmax.f32 %v5020, 0.0
        %v5029 = vmax.f32 %v5021, 0.0
        %v5030 = vmax.f32 %v5022, 0.0
        %v5031 = vmax.f32 %v5023, 0.0
        %v5032 = vmax.f32 %v5024, 0.0
        %v5033 = vmax.f32 %v5025, 0.0
        %v5034 = vpack.c.bf16 %v5027, %v5026
        %v5035 = vpack.c.bf16 %v5029, %v5028
        %v5036 = vpack.c.bf16 %v5031, %v5030
        %v5037 = vpack.c.bf16 %v5033, %v5032
        %v5038 = vld [vmem:[%s7] sm:$0xff]
        %v5039 = vld [vmem:[%s7 + $0x8] sm:$0xf]
        %v5040 = vld [vmem:[%s7 + $0xc] sm:$0xff]
        %v5041 = vld [vmem:[%s7 + $0x14] sm:$0xf]
        %v5042 = vld [vmem:[%s7 + $0x18] sm:$0xff]
        %v5043 = vld [vmem:[%s7 + $0x20] sm:$0xf]
        %v5044 = vld [vmem:[%s7 + $0x24] sm:$0xff]
        %v5045 = vld [vmem:[%s7 + $0x2c] sm:$0xf]
        %v5046 = vld [vmem:[%s7 + $0x30] sm:$0xff]
        %v5047 = vld [vmem:[%s7 + $0x38] sm:$0xf]
        %v5048 = vld [vmem:[%s7 + $0x3c] sm:$0xff]
        %v5049 = vld [vmem:[%s7 + $0x44] sm:$0xf]
        %v5050 = vld [vmem:[%s7 + $0x48] sm:$0xff]
        %v5051 = vld [vmem:[%s7 + $0x50] sm:$0xf]
        %v5052 = vld [vmem:[%s7 + $0x54] sm:$0xff]
        %v5053 = vld [vmem:[%s7 + $0x5c] sm:$0xf]
        %v5054 = vld [vmem:[%s7 + $0x60] sm:$0xff]
        %v5055 = vld [vmem:[%s7 + $0x68] sm:$0xf]
        %v5056 = vld [vmem:[%s7 + $0x6c] sm:$0xff]
        %v5057 = vld [vmem:[%s7 + $0x74] sm:$0xf]
        %v5058 = vld [vmem:[%s7 + $0x78] sm:$0xff]
        %v5059 = vld [vmem:[%s7 + $0x80] sm:$0xf]
        %v5060 = vld [vmem:[%s7 + $0x84] sm:$0xff]
        %v5061 = vld [vmem:[%s7 + $0x8c] sm:$0xf]
        %v5062 = vld [vmem:[%s8] sm:$0xff]
        %v5063 = vld [vmem:[%s8 + $0x8] sm:$0xf]
        %v5064 = vld [vmem:[%s8 + $0xc] sm:$0xff]
        %v5065 = vld [vmem:[%s8 + $0x14] sm:$0xf]
        %v5066 = vld [vmem:[%s8 + $0x18] sm:$0xff]
        %v5067 = vld [vmem:[%s8 + $0x20] sm:$0xf]
        %v5068 = vld [vmem:[%s8 + $0x24] sm:$0xff]
        %v5069 = vld [vmem:[%s8 + $0x2c] sm:$0xf]
        %v5070 = vld [vmem:[%s8 + $0x30] sm:$0xff]
        %v5071 = vld [vmem:[%s8 + $0x38] sm:$0xf]
        %v5072 = vld [vmem:[%s8 + $0x3c] sm:$0xff]
        %v5073 = vld [vmem:[%s8 + $0x44] sm:$0xf]
        %v5074 = vld [vmem:[%s8 + $0x48] sm:$0xff]
        %v5075 = vld [vmem:[%s8 + $0x50] sm:$0xf]
        %v5076 = vld [vmem:[%s8 + $0x54] sm:$0xff]
        %v5077 = vld [vmem:[%s8 + $0x5c] sm:$0xf]
        %v5078 = vld [vmem:[%s8 + $0x60] sm:$0xff]
        %v5079 = vld [vmem:[%s8 + $0x68] sm:$0xf]
        %v5080 = vld [vmem:[%s8 + $0x6c] sm:$0xff]
        %v5081 = vld [vmem:[%s8 + $0x74] sm:$0xf]
        %v5102 = vunpack.c.l.b16 %v5062
        %v5103 = vunpack.c.h.b16 %v5062
        %v5104 = vunpack.c.l.b16 %v5063
        %v5105 = vunpack.c.l.b16 %v5064
        %v5106 = vunpack.c.h.b16 %v5064
        %v5107 = vunpack.c.l.b16 %v5065
        %v5108 = vunpack.c.l.b16 %v5066
        %v5109 = vunpack.c.h.b16 %v5066
        %v5110 = vunpack.c.l.b16 %v5067
        %v5111 = vunpack.c.l.b16 %v5068
        %v5112 = vunpack.c.h.b16 %v5068
        %v5113 = vunpack.c.l.b16 %v5069
        %v5114 = vunpack.c.l.b16 %v5070
        %v5115 = vunpack.c.h.b16 %v5070
        %v5116 = vunpack.c.l.b16 %v5071
        %v5117 = vunpack.c.l.b16 %v5072
        %v5118 = vunpack.c.h.b16 %v5072
        %v5119 = vunpack.c.l.b16 %v5073
        %v5120 = vunpack.c.l.b16 %v5074
        %v5121 = vunpack.c.h.b16 %v5074
        %v5122 = vunpack.c.l.b16 %v5075
        %v5123 = vunpack.c.l.b16 %v5076
        %v5124 = vunpack.c.h.b16 %v5076
        %v5125 = vunpack.c.l.b16 %v5077
        %v5126 = vunpack.c.l.b16 %v5078
        %v5127 = vunpack.c.h.b16 %v5078
        %v5128 = vunpack.c.l.b16 %v5079
        %v5129 = vunpack.c.l.b16 %v5080
        %v5130 = vunpack.c.h.b16 %v5080
        %v5131 = vunpack.c.l.b16 %v5081
        %v5132 = vpack.c.b16 %v5105, %v5102
        %v5133 = vpack.c.b16 %v5106, %v5103
        %v5134 = vpack.c.b16 %v5107, %v5104
        %v5135 = vpack.c.b16 %v5111, %v5108
        %v5136 = vpack.c.b16 %v5112, %v5109
        %v5137 = vpack.c.b16 %v5113, %v5110
        %v5138 = vpack.c.b16 %v5117, %v5114
        %v5139 = vpack.c.b16 %v5118, %v5115
        %v5140 = vpack.c.b16 %v5119, %v5116
        %v5141 = vpack.c.b16 %v5123, %v5120
        %v5142 = vpack.c.b16 %v5124, %v5121
        %v5143 = vpack.c.b16 %v5125, %v5122
        %v5144 = vpack.c.b16 %v5129, %v5126
        %v5145 = vpack.c.b16 %v5130, %v5127
        %v5146 = vpack.c.b16 %v5131, %v5128
        %vm5162 = vcmask 654336
        %v5164 = vsel %vm5162, %v2905, 0
        %v5167 = vsel %vm5162, %v2906, 0
        %v5170 = vsel %vm5162, %v2907, 0
        %v5173 = vsel %vm5162, %v2908, 0
        %5175 = vmatprep.subr.bf16.mxu0 %v5133
        %5176 = vmatpush1.bf16.msra.mxu0 %v5132
        %5177 = vmatprep.subr.bf16.mxu0 %v5136
        %5178 = vmatpush1.bf16.msra.mxu0 %v5135
        %5179 = vmatprep.subr.bf16.mxu0 %v5139
        %5180 = vmatpush1.bf16.msra.mxu0 %v5138
        %5181 = vmatprep.subr.bf16.mxu0 %v5142
        %5182 = vmatpush1.bf16.msra.mxu0 %v5141
        %5183 = vmatprep.subr.bf16.mxu0 %v5145
        %5184 = vmatpush1.bf16.msra.mxu0 %v5144
        %5185 = vmatprep.subr.bf16.mxu0 0
        %5186 = vmatpush1.bf16.msra.mxu0 0
        %5187 = vmatprep.subr.bf16.mxu0 0
        %5188 = vmatpush1.bf16.msra.mxu0 0
        %5189 = vmatprep.subr.bf16.mxu0 0
        %5190 = vmatpush1.bf16.msra.mxu0 0
        %5191 = vmatprep.subr.bf16.mxu0 0
        %5192 = vmatpush1.bf16.msra.mxu0 0
        %5193 = vmatprep.subr.bf16.mxu0 0
        %5194 = vmatpush1.bf16.msra.mxu0 0
        %5195 = vmatprep.subr.bf16.mxu0 0
        %5196 = vmatpush1.bf16.msra.mxu0 0
        %5197 = vmatprep.subr.bf16.mxu0 0
        %5198 = vmatpush1.bf16.msra.mxu0 0
        %5199 = vmatprep.subr.bf16.mxu0 0
        %5200 = vmatpush1.bf16.msra.mxu0 0
        %5201 = vmatprep.subr.bf16.mxu0 0
        %5202 = vmatpush1.bf16.msra.mxu0 0
        %5203 = vmatprep.subr.bf16.mxu0 0
        %5204 = vmatpush1.bf16.msra.mxu0 0
        %5205 = vmatprep.subr.bf16.mxu0 0
        %5206 = vmatpush1.bf16.msra.mxu0 0
        %5207 = vmatprep.mubr.bf16.mxu0 0
        %5208 = vmatmul.mubr.bf16.gmra.mrb[0].mxu0 %v5164
        %v5209 = vpop.f32.mrb[0].mxu0
        %v5210 = vadd.f32 0.0, %v5209
        %v5211 = vpop.f32.mrb[0].mxu0
        %v5212 = vadd.f32 0.0, %v5211
        %v5213 = vpop.f32.mrb[0].mxu0
        %v5214 = vadd.f32 0.0, %v5213
        %v5215 = vpop.f32.mrb[0].mxu0
        %v5216 = vadd.f32 0.0, %v5215
        %5217 = vmatprep.mubr.bf16.mxu0 0
        %5218 = vmatmul.mubr.bf16.gmra.mrb[0].mxu0 %v5167
        %v5219 = vpop.f32.mrb[0].mxu0
        %v5220 = vadd.f32 0.0, %v5219
        %v5221 = vpop.f32.mrb[0].mxu0
        %v5222 = vadd.f32 0.0, %v5221
        %v5223 = vpop.f32.mrb[0].mxu0
        %v5224 = vadd.f32 0.0, %v5223
        %v5225 = vpop.f32.mrb[0].mxu0
        %v5226 = vadd.f32 0.0, %v5225
        %5227 = vmatprep.mubr.bf16.mxu0 0
        %5228 = vmatmul.mubr.bf16.gmra.mrb[0].mxu0 %v5170
        %v5229 = vpop.f32.mrb[0].mxu0
        %v5230 = vadd.f32 0.0, %v5229
        %v5231 = vpop.f32.mrb[0].mxu0
        %v5232 = vadd.f32 0.0, %v5231
        %v5233 = vpop.f32.mrb[0].mxu0
        %v5234 = vadd.f32 0.0, %v5233
        %v5235 = vpop.f32.mrb[0].mxu0
        %v5236 = vadd.f32 0.0, %v5235
        %5237 = vmatprep.mubr.bf16.mxu0 0
        %5238 = vmatmul.mubr.bf16.gmra.mrb[0].mxu0 %v5173
        %v5239 = vpop.f32.mrb[0].mxu0
        %v5240 = vadd.f32 0.0, %v5239
        %v5241 = vpop.f32.mrb[0].mxu0
        %v5242 = vadd.f32 0.0, %v5241
        %v5243 = vpop.f32.mrb[0].mxu0
        %v5244 = vadd.f32 0.0, %v5243
        %v5245 = vpop.f32.mrb[0].mxu0
        %v5246 = vadd.f32 0.0, %v5245
        %5247 = vdwg.mxu0
        %5248 = vmatprep.subr.bf16.mxu0 0
        %5249 = vmatpush1.bf16.msra.mxu0 %v5134
        %5250 = vmatprep.subr.bf16.mxu0 0
        %5251 = vmatpush1.bf16.msra.mxu0 %v5137
        %5252 = vmatprep.subr.bf16.mxu0 0
        %5253 = vmatpush1.bf16.msra.mxu0 %v5140
        %5254 = vmatprep.subr.bf16.mxu0 0
        %5255 = vmatpush1.bf16.msra.mxu0 %v5143
        %5256 = vmatprep.subr.bf16.mxu0 0
        %5257 = vmatpush1.bf16.msra.mxu0 %v5146
        %5258 = vmatprep.subr.bf16.mxu0 0
        %5259 = vmatpush1.bf16.msra.mxu0 0
        %5260 = vmatprep.subr.bf16.mxu0 0
        %5261 = vmatpush1.bf16.msra.mxu0 0
        %5262 = vmatprep.subr.bf16.mxu0 0
        %5263 = vmatpush1.bf16.msra.mxu0 0
        %5264 = vmatprep.subr.bf16.mxu0 0
        %5265 = vmatpush1.bf16.msra.mxu0 0
        %5266 = vmatprep.subr.bf16.mxu0 0
        %5267 = vmatpush1.bf16.msra.mxu0 0
        %5268 = vmatprep.subr.bf16.mxu0 0
        %5269 = vmatpush1.bf16.msra.mxu0 0
        %5270 = vmatprep.subr.bf16.mxu0 0
        %5271 = vmatpush1.bf16.msra.mxu0 0
        %5272 = vmatprep.subr.bf16.mxu0 0
        %5273 = vmatpush1.bf16.msra.mxu0 0
        %5274 = vmatprep.subr.bf16.mxu0 0
        %5275 = vmatpush1.bf16.msra.mxu0 0
        %5276 = vmatprep.subr.bf16.mxu0 0
        %5277 = vmatpush1.bf16.msra.mxu0 0
        %5278 = vmatprep.subr.bf16.mxu0 0
        %5279 = vmatpush1.bf16.msra.mxu0 0
        %5280 = vmatprep.mubr.bf16.mxu0 0
        %5281 = vmatmul.mubr.bf16.gmra.mrb[0].mxu0 %v5164
        %v5282 = vpop.f32.mrb[0].mxu0
        %v5283 = vadd.f32 0.0, %v5282
        %v5284 = vpop.f32.mrb[0].mxu0
        %v5285 = vpop.f32.mrb[0].mxu0
        %v5286 = vadd.f32 0.0, %v5285
        %v5287 = vpop.f32.mrb[0].mxu0
        %5288 = vmatprep.mubr.bf16.mxu0 0
        %5289 = vmatmul.mubr.bf16.gmra.mrb[0].mxu0 %v5167
        %v5290 = vpop.f32.mrb[0].mxu0
        %v5291 = vadd.f32 0.0, %v5290
        %v5292 = vpop.f32.mrb[0].mxu0
        %v5293 = vpop.f32.mrb[0].mxu0
        %v5294 = vadd.f32 0.0, %v5293
        %v5295 = vpop.f32.mrb[0].mxu0
        %5296 = vmatprep.mubr.bf16.mxu0 0
        %5297 = vmatmul.mubr.bf16.gmra.mrb[0].mxu0 %v5170
        %v5298 = vpop.f32.mrb[0].mxu0
        %v5299 = vadd.f32 0.0, %v5298
        %v5300 = vpop.f32.mrb[0].mxu0
        %v5301 = vpop.f32.mrb[0].mxu0
        %v5302 = vadd.f32 0.0, %v5301
        %v5303 = vpop.f32.mrb[0].mxu0
        %5304 = vmatprep.mubr.bf16.mxu0 0
        %5305 = vmatmul.mubr.bf16.gmra.mrb[0].mxu0 %v5173
        %v5306 = vpop.f32.mrb[0].mxu0
        %v5307 = vadd.f32 0.0, %v5306
        %v5308 = vpop.f32.mrb[0].mxu0
        %v5309 = vpop.f32.mrb[0].mxu0
        %v5310 = vadd.f32 0.0, %v5309
        %v5311 = vpop.f32.mrb[0].mxu0
        %5312 = vdwg.mxu0
        %v5337 = vunpack.c.l.b16 %v5038
        %v5338 = vunpack.c.h.b16 %v5038
        %v5339 = vunpack.c.l.b16 %v5039
        %v5340 = vunpack.c.l.b16 %v5040
        %v5341 = vunpack.c.h.b16 %v5040
        %v5342 = vunpack.c.l.b16 %v5041
        %v5343 = vunpack.c.l.b16 %v5042
        %v5344 = vunpack.c.h.b16 %v5042
        %v5345 = vunpack.c.l.b16 %v5043
        %v5346 = vunpack.c.l.b16 %v5044
        %v5347 = vunpack.c.h.b16 %v5044
        %v5348 = vunpack.c.l.b16 %v5045
        %v5349 = vunpack.c.l.b16 %v5046
        %v5350 = vunpack.c.h.b16 %v5046
        %v5351 = vunpack.c.l.b16 %v5047
        %v5352 = vunpack.c.l.b16 %v5048
        %v5353 = vunpack.c.h.b16 %v5048
        %v5354 = vunpack.c.l.b16 %v5049
        %v5355 = vunpack.c.l.b16 %v5050
        %v5356 = vunpack.c.h.b16 %v5050
        %v5357 = vunpack.c.l.b16 %v5051
        %v5358 = vunpack.c.l.b16 %v5052
        %v5359 = vunpack.c.h.b16 %v5052
        %v5360 = vunpack.c.l.b16 %v5053
        %v5361 = vunpack.c.l.b16 %v5054
        %v5362 = vunpack.c.h.b16 %v5054
        %v5363 = vunpack.c.l.b16 %v5055
        %v5364 = vunpack.c.l.b16 %v5056
        %v5365 = vunpack.c.h.b16 %v5056
        %v5366 = vunpack.c.l.b16 %v5057
        %v5367 = vunpack.c.l.b16 %v5058
        %v5368 = vunpack.c.h.b16 %v5058
        %v5369 = vunpack.c.l.b16 %v5059
        %v5370 = vunpack.c.l.b16 %v5060
        %v5371 = vunpack.c.h.b16 %v5060
        %v5372 = vunpack.c.l.b16 %v5061
        %v5373 = vpack.c.b16 %v5340, %v5337
        %v5374 = vpack.c.b16 %v5341, %v5338
        %v5375 = vpack.c.b16 %v5342, %v5339
        %v5376 = vpack.c.b16 %v5346, %v5343
        %v5377 = vpack.c.b16 %v5347, %v5344
        %v5378 = vpack.c.b16 %v5348, %v5345
        %v5379 = vpack.c.b16 %v5352, %v5349
        %v5380 = vpack.c.b16 %v5353, %v5350
        %v5381 = vpack.c.b16 %v5354, %v5351
        %v5382 = vpack.c.b16 %v5358, %v5355
        %v5383 = vpack.c.b16 %v5359, %v5356
        %v5384 = vpack.c.b16 %v5360, %v5357
        %v5385 = vpack.c.b16 %v5364, %v5361
        %v5386 = vpack.c.b16 %v5365, %v5362
        %v5387 = vpack.c.b16 %v5366, %v5363
        %v5388 = vpack.c.b16 %v5370, %v5367
        %v5389 = vpack.c.b16 %v5371, %v5368
        %v5390 = vpack.c.b16 %v5372, %v5369
        %v5410 = vsel %vm1013, %v768, 0
        %v5413 = vsel %vm1013, %v769, 0
        %v5416 = vsel %vm1013, %v770, 0
        %v5419 = vsel %vm1013, %v771, 0
        %5421 = vmatprep.subr.bf16.mxu0 %v5374
        %5422 = vmatpush1.bf16.msra.mxu0 %v5373
        %5423 = vmatprep.subr.bf16.mxu0 %v5377
        %5424 = vmatpush1.bf16.msra.mxu0 %v5376
        %5425 = vmatprep.subr.bf16.mxu0 %v5380
        %5426 = vmatpush1.bf16.msra.mxu0 %v5379
        %5427 = vmatprep.subr.bf16.mxu0 %v5383
        %5428 = vmatpush1.bf16.msra.mxu0 %v5382
        %5429 = vmatprep.subr.bf16.mxu0 %v5386
        %5430 = vmatpush1.bf16.msra.mxu0 %v5385
        %5431 = vmatprep.subr.bf16.mxu0 %v5389
        %5432 = vmatpush1.bf16.msra.mxu0 %v5388
        %5433 = vmatprep.subr.bf16.mxu0 0
        %5434 = vmatpush1.bf16.msra.mxu0 0
        %5435 = vmatprep.subr.bf16.mxu0 0
        %5436 = vmatpush1.bf16.msra.mxu0 0
        %5437 = vmatprep.subr.bf16.mxu0 0
        %5438 = vmatpush1.bf16.msra.mxu0 0
        %5439 = vmatprep.subr.bf16.mxu0 0
        %5440 = vmatpush1.bf16.msra.mxu0 0
        %5441 = vmatprep.subr.bf16.mxu0 0
        %5442 = vmatpush1.bf16.msra.mxu0 0
        %5443 = vmatprep.subr.bf16.mxu0 0
        %5444 = vmatpush1.bf16.msra.mxu0 0
        %5445 = vmatprep.subr.bf16.mxu0 0
        %5446 = vmatpush1.bf16.msra.mxu0 0
        %5447 = vmatprep.subr.bf16.mxu0 0
        %5448 = vmatpush1.bf16.msra.mxu0 0
        %5449 = vmatprep.subr.bf16.mxu0 0
        %5450 = vmatpush1.bf16.msra.mxu0 0
        %5451 = vmatprep.subr.bf16.mxu0 0
        %5452 = vmatpush1.bf16.msra.mxu0 0
        %5453 = vmatprep.mubr.bf16.mxu0 0
        %5454 = vmatmul.mubr.bf16.gmra.mrb[0].mxu0 %v5410
        %v5455 = vpop.f32.mrb[0].mxu0
        %v5456 = vadd.f32 %v5210, %v5455
        %v5457 = vpop.f32.mrb[0].mxu0
        %v5458 = vadd.f32 %v5212, %v5457
        %v5459 = vpop.f32.mrb[0].mxu0
        %v5460 = vadd.f32 %v5214, %v5459
        %v5461 = vpop.f32.mrb[0].mxu0
        %v5462 = vadd.f32 %v5216, %v5461
        %5463 = vmatprep.mubr.bf16.mxu0 0
        %5464 = vmatmul.mubr.bf16.gmra.mrb[0].mxu0 %v5413
        %v5465 = vpop.f32.mrb[0].mxu0
        %v5466 = vadd.f32 %v5220, %v5465
        %v5467 = vpop.f32.mrb[0].mxu0
        %v5468 = vadd.f32 %v5222, %v5467
        %v5469 = vpop.f32.mrb[0].mxu0
        %v5470 = vadd.f32 %v5224, %v5469
        %v5471 = vpop.f32.mrb[0].mxu0
        %v5472 = vadd.f32 %v5226, %v5471
        %5473 = vmatprep.mubr.bf16.mxu0 0
        %5474 = vmatmul.mubr.bf16.gmra.mrb[0].mxu0 %v5416
        %v5475 = vpop.f32.mrb[0].mxu0
        %v5476 = vadd.f32 %v5230, %v5475
        %v5477 = vpop.f32.mrb[0].mxu0
        %v5478 = vadd.f32 %v5232, %v5477
        %v5479 = vpop.f32.mrb[0].mxu0
        %v5480 = vadd.f32 %v5234, %v5479
        %v5481 = vpop.f32.mrb[0].mxu0
        %v5482 = vadd.f32 %v5236, %v5481
        %5483 = vmatprep.mubr.bf16.mxu0 0
        %5484 = vmatmul.mubr.bf16.gmra.mrb[0].mxu0 %v5419
        %v5485 = vpop.f32.mrb[0].mxu0
        %v5486 = vadd.f32 %v5240, %v5485
        %v5487 = vpop.f32.mrb[0].mxu0
        %v5488 = vadd.f32 %v5242, %v5487
        %v5489 = vpop.f32.mrb[0].mxu0
        %v5490 = vadd.f32 %v5244, %v5489
        %v5491 = vpop.f32.mrb[0].mxu0
        %v5492 = vadd.f32 %v5246, %v5491
        %5493 = vdwg.mxu0
        %5494 = vmatprep.subr.bf16.mxu0 0
        %5495 = vmatpush1.bf16.msra.mxu0 %v5375
        %5496 = vmatprep.subr.bf16.mxu0 0
        %5497 = vmatpush1.bf16.msra.mxu0 %v5378
        %5498 = vmatprep.subr.bf16.mxu0 0
        %5499 = vmatpush1.bf16.msra.mxu0 %v5381
        %5500 = vmatprep.subr.bf16.mxu0 0
        %5501 = vmatpush1.bf16.msra.mxu0 %v5384
        %5502 = vmatprep.subr.bf16.mxu0 0
        %5503 = vmatpush1.bf16.msra.mxu0 %v5387
        %5504 = vmatprep.subr.bf16.mxu0 0
        %5505 = vmatpush1.bf16.msra.mxu0 %v5390
        %5506 = vmatprep.subr.bf16.mxu0 0
        %5507 = vmatpush1.bf16.msra.mxu0 0
        %5508 = vmatprep.subr.bf16.mxu0 0
        %5509 = vmatpush1.bf16.msra.mxu0 0
        %5510 = vmatprep.subr.bf16.mxu0 0
        %5511 = vmatpush1.bf16.msra.mxu0 0
        %5512 = vmatprep.subr.bf16.mxu0 0
        %5513 = vmatpush1.bf16.msra.mxu0 0
        %5514 = vmatprep.subr.bf16.mxu0 0
        %5515 = vmatpush1.bf16.msra.mxu0 0
        %5516 = vmatprep.subr.bf16.mxu0 0
        %5517 = vmatpush1.bf16.msra.mxu0 0
        %5518 = vmatprep.subr.bf16.mxu0 0
        %5519 = vmatpush1.bf16.msra.mxu0 0
        %5520 = vmatprep.subr.bf16.mxu0 0
        %5521 = vmatpush1.bf16.msra.mxu0 0
        %5522 = vmatprep.subr.bf16.mxu0 0
        %5523 = vmatpush1.bf16.msra.mxu0 0
        %5524 = vmatprep.subr.bf16.mxu0 0
        %5525 = vmatpush1.bf16.msra.mxu0 0
        %5526 = vmatprep.mubr.bf16.mxu0 0
        %5527 = vmatmul.mubr.bf16.gmra.mrb[0].mxu0 %v5410
        %v5528 = vpop.f32.mrb[0].mxu0
        %v5529 = vadd.f32 %v5283, %v5528
        %v5530 = vpop.f32.mrb[0].mxu0
        %v5531 = vpop.f32.mrb[0].mxu0
        %v5532 = vadd.f32 %v5286, %v5531
        %v5533 = vpop.f32.mrb[0].mxu0
        %5534 = vmatprep.mubr.bf16.mxu0 0
        %5535 = vmatmul.mubr.bf16.gmra.mrb[0].mxu0 %v5413
        %v5536 = vpop.f32.mrb[0].mxu0
        %v5537 = vadd.f32 %v5291, %v5536
        %v5538 = vpop.f32.mrb[0].mxu0
        %v5539 = vpop.f32.mrb[0].mxu0
        %v5540 = vadd.f32 %v5294, %v5539
        %v5541 = vpop.f32.mrb[0].mxu0
        %5542 = vmatprep.mubr.bf16.mxu0 0
        %5543 = vmatmul.mubr.bf16.gmra.mrb[0].mxu0 %v5416
        %v5544 = vpop.f32.mrb[0].mxu0
        %v5545 = vadd.f32 %v5299, %v5544
        %v5546 = vpop.f32.mrb[0].mxu0
        %v5547 = vpop.f32.mrb[0].mxu0
        %v5548 = vadd.f32 %v5302, %v5547
        %v5549 = vpop.f32.mrb[0].mxu0
        %5550 = vmatprep.mubr.bf16.mxu0 0
        %5551 = vmatmul.mubr.bf16.gmra.mrb[0].mxu0 %v5419
        %v5552 = vpop.f32.mrb[0].mxu0
        %v5553 = vadd.f32 %v5307, %v5552
        %v5554 = vpop.f32.mrb[0].mxu0
        %v5555 = vpop.f32.mrb[0].mxu0
        %v5556 = vadd.f32 %v5310, %v5555
        %v5557 = vpop.f32.mrb[0].mxu0
        %5558 = vdwg.mxu0
        %v5559 = vld [vmem:[%s9] sm:$0xff]
        %v5560 = vld [vmem:[%s9 + $0x8] sm:$0xf]
        %v5561 = vld [vmem:[%s9 + $0xc] sm:$0xff]
        %v5562 = vld [vmem:[%s9 + $0x14] sm:$0xf]
        %v5563 = vld [vmem:[%s9 + $0x18] sm:$0xff]
        %v5564 = vld [vmem:[%s9 + $0x20] sm:$0xf]
        %v5565 = vld [vmem:[%s9 + $0x24] sm:$0xff]
        %v5566 = vld [vmem:[%s9 + $0x2c] sm:$0xf]
        %v5567 = vld [vmem:[%s9 + $0x30] sm:$0xff]
        %v5568 = vld [vmem:[%s9 + $0x38] sm:$0xf]
        %v5569 = vld [vmem:[%s9 + $0x3c] sm:$0xff]
        %v5570 = vld [vmem:[%s9 + $0x44] sm:$0xf]
        %v5571 = vld [vmem:[%s9 + $0x48] sm:$0xff]
        %v5572 = vld [vmem:[%s9 + $0x50] sm:$0xf]
        %v5573 = vld [vmem:[%s9 + $0x54] sm:$0xff]
        %v5574 = vld [vmem:[%s9 + $0x5c] sm:$0xf]
        %v5591 = vunpack.c.l.b16 %v5559
        %v5592 = vunpack.c.h.b16 %v5559
        %v5593 = vunpack.c.l.b16 %v5560
        %v5594 = vunpack.c.l.b16 %v5561
        %v5595 = vunpack.c.h.b16 %v5561
        %v5596 = vunpack.c.l.b16 %v5562
        %v5597 = vunpack.c.l.b16 %v5563
        %v5598 = vunpack.c.h.b16 %v5563
        %v5599 = vunpack.c.l.b16 %v5564
        %v5600 = vunpack.c.l.b16 %v5565
        %v5601 = vunpack.c.h.b16 %v5565
        %v5602 = vunpack.c.l.b16 %v5566
        %v5603 = vunpack.c.l.b16 %v5567
        %v5604 = vunpack.c.h.b16 %v5567
        %v5605 = vunpack.c.l.b16 %v5568
        %v5606 = vunpack.c.l.b16 %v5569
        %v5607 = vunpack.c.h.b16 %v5569
        %v5608 = vunpack.c.l.b16 %v5570
        %v5609 = vunpack.c.l.b16 %v5571
        %v5610 = vunpack.c.h.b16 %v5571
        %v5611 = vunpack.c.l.b16 %v5572
        %v5612 = vunpack.c.l.b16 %v5573
        %v5613 = vunpack.c.h.b16 %v5573
        %v5614 = vunpack.c.l.b16 %v5574
        %v5615 = vpack.c.b16 %v5594, %v5591
        %v5616 = vpack.c.b16 %v5595, %v5592
        %v5617 = vpack.c.b16 %v5596, %v5593
        %v5618 = vpack.c.b16 %v5600, %v5597
        %v5619 = vpack.c.b16 %v5601, %v5598
        %v5620 = vpack.c.b16 %v5602, %v5599
        %v5621 = vpack.c.b16 %v5606, %v5603
        %v5622 = vpack.c.b16 %v5607, %v5604
        %v5623 = vpack.c.b16 %v5608, %v5605
        %v5624 = vpack.c.b16 %v5612, %v5609
        %v5625 = vpack.c.b16 %v5613, %v5610
        %v5626 = vpack.c.b16 %v5614, %v5611
        %v5640 = vsel %vm617, %v5034, 0
        %v5643 = vsel %vm617, %v5035, 0
        %v5646 = vsel %vm617, %v5036, 0
        %v5649 = vsel %vm617, %v5037, 0
        %5651 = vmatprep.subr.bf16.mxu0 %v5616
        %5652 = vmatpush1.bf16.msra.mxu0 %v5615
        %5653 = vmatprep.subr.bf16.mxu0 %v5619
        %5654 = vmatpush1.bf16.msra.mxu0 %v5618
        %5655 = vmatprep.subr.bf16.mxu0 %v5622
        %5656 = vmatpush1.bf16.msra.mxu0 %v5621
        %5657 = vmatprep.subr.bf16.mxu0 %v5625
        %5658 = vmatpush1.bf16.msra.mxu0 %v5624
        %5659 = vmatprep.subr.bf16.mxu0 0
        %5660 = vmatpush1.bf16.msra.mxu0 0
        %5661 = vmatprep.subr.bf16.mxu0 0
        %5662 = vmatpush1.bf16.msra.mxu0 0
        %5663 = vmatprep.subr.bf16.mxu0 0
        %5664 = vmatpush1.bf16.msra.mxu0 0
        %5665 = vmatprep.subr.bf16.mxu0 0
        %5666 = vmatpush1.bf16.msra.mxu0 0
        %5667 = vmatprep.subr.bf16.mxu0 0
        %5668 = vmatpush1.bf16.msra.mxu0 0
        %5669 = vmatprep.subr.bf16.mxu0 0
        %5670 = vmatpush1.bf16.msra.mxu0 0
        %5671 = vmatprep.subr.bf16.mxu0 0
        %5672 = vmatpush1.bf16.msra.mxu0 0
        %5673 = vmatprep.subr.bf16.mxu0 0
        %5674 = vmatpush1.bf16.msra.mxu0 0
        %5675 = vmatprep.subr.bf16.mxu0 0
        %5676 = vmatpush1.bf16.msra.mxu0 0
        %5677 = vmatprep.subr.bf16.mxu0 0
        %5678 = vmatpush1.bf16.msra.mxu0 0
        %5679 = vmatprep.subr.bf16.mxu0 0
        %5680 = vmatpush1.bf16.msra.mxu0 0
        %5681 = vmatprep.subr.bf16.mxu0 0
        %5682 = vmatpush1.bf16.msra.mxu0 0
        %5683 = vmatprep.mubr.bf16.mxu0 0
        %5684 = vmatmul.mubr.bf16.gmra.mrb[0].mxu0 %v5640
        %v5685 = vpop.f32.mrb[0].mxu0
        %v5686 = vadd.f32 0.0, %v5685
        %v5687 = vpop.f32.mrb[0].mxu0
        %v5688 = vadd.f32 0.0, %v5687
        %v5689 = vpop.f32.mrb[0].mxu0
        %v5690 = vadd.f32 0.0, %v5689
        %v5691 = vpop.f32.mrb[0].mxu0
        %v5692 = vadd.f32 0.0, %v5691
        %5693 = vmatprep.mubr.bf16.mxu0 0
        %5694 = vmatmul.mubr.bf16.gmra.mrb[0].mxu0 %v5643
        %v5695 = vpop.f32.mrb[0].mxu0
        %v5696 = vadd.f32 0.0, %v5695
        %v5697 = vpop.f32.mrb[0].mxu0
        %v5698 = vadd.f32 0.0, %v5697
        %v5699 = vpop.f32.mrb[0].mxu0
        %v5700 = vadd.f32 0.0, %v5699
        %v5701 = vpop.f32.mrb[0].mxu0
        %v5702 = vadd.f32 0.0, %v5701
        %5703 = vmatprep.mubr.bf16.mxu0 0
        %5704 = vmatmul.mubr.bf16.gmra.mrb[0].mxu0 %v5646
        %v5705 = vpop.f32.mrb[0].mxu0
        %v5706 = vadd.f32 0.0, %v5705
        %v5707 = vpop.f32.mrb[0].mxu0
        %v5708 = vadd.f32 0.0, %v5707
        %v5709 = vpop.f32.mrb[0].mxu0
        %v5710 = vadd.f32 0.0, %v5709
        %v5711 = vpop.f32.mrb[0].mxu0
        %v5712 = vadd.f32 0.0, %v5711
        %5713 = vmatprep.mubr.bf16.mxu0 0
        %5714 = vmatmul.mubr.bf16.gmra.mrb[0].mxu0 %v5649
        %v5715 = vpop.f32.mrb[0].mxu0
        %v5716 = vadd.f32 0.0, %v5715
        %v5717 = vpop.f32.mrb[0].mxu0
        %v5718 = vadd.f32 0.0, %v5717
        %v5719 = vpop.f32.mrb[0].mxu0
        %v5720 = vadd.f32 0.0, %v5719
        %v5721 = vpop.f32.mrb[0].mxu0
        %v5722 = vadd.f32 0.0, %v5721
        %5723 = vdwg.mxu0
        %5724 = vmatprep.subr.bf16.mxu0 0
        %5725 = vmatpush1.bf16.msra.mxu0 %v5617
        %5726 = vmatprep.subr.bf16.mxu0 0
        %5727 = vmatpush1.bf16.msra.mxu0 %v5620
        %5728 = vmatprep.subr.bf16.mxu0 0
        %5729 = vmatpush1.bf16.msra.mxu0 %v5623
        %5730 = vmatprep.subr.bf16.mxu0 0
        %5731 = vmatpush1.bf16.msra.mxu0 %v5626
        %5732 = vmatprep.subr.bf16.mxu0 0
        %5733 = vmatpush1.bf16.msra.mxu0 0
        %5734 = vmatprep.subr.bf16.mxu0 0
        %5735 = vmatpush1.bf16.msra.mxu0 0
        %5736 = vmatprep.subr.bf16.mxu0 0
        %5737 = vmatpush1.bf16.msra.mxu0 0
        %5738 = vmatprep.subr.bf16.mxu0 0
        %5739 = vmatpush1.bf16.msra.mxu0 0
        %5740 = vmatprep.subr.bf16.mxu0 0
        %5741 = vmatpush1.bf16.msra.mxu0 0
        %5742 = vmatprep.subr.bf16.mxu0 0
        %5743 = vmatpush1.bf16.msra.mxu0 0
        %5744 = vmatprep.subr.bf16.mxu0 0
        %5745 = vmatpush1.bf16.msra.mxu0 0
        %5746 = vmatprep.subr.bf16.mxu0 0
        %5747 = vmatpush1.bf16.msra.mxu0 0
        %5748 = vmatprep.subr.bf16.mxu0 0
        %5749 = vmatpush1.bf16.msra.mxu0 0
        %5750 = vmatprep.subr.bf16.mxu0 0
        %5751 = vmatpush1.bf16.msra.mxu0 0
        %5752 = vmatprep.subr.bf16.mxu0 0
        %5753 = vmatpush1.bf16.msra.mxu0 0
        %5754 = vmatprep.subr.bf16.mxu0 0
        %5755 = vmatpush1.bf16.msra.mxu0 0
        %5756 = vmatprep.mubr.bf16.mxu0 0
        %5757 = vmatmul.mubr.bf16.gmra.mrb[0].mxu0 %v5640
        %v5758 = vpop.f32.mrb[0].mxu0
        %v5759 = vadd.f32 0.0, %v5758
        %v5760 = vpop.f32.mrb[0].mxu0
        %v5761 = vpop.f32.mrb[0].mxu0
        %v5762 = vadd.f32 0.0, %v5761
        %v5763 = vpop.f32.mrb[0].mxu0
        %5764 = vmatprep.mubr.bf16.mxu0 0
        %5765 = vmatmul.mubr.bf16.gmra.mrb[0].mxu0 %v5643
        %v5766 = vpop.f32.mrb[0].mxu0
        %v5767 = vadd.f32 0.0, %v5766
        %v5768 = vpop.f32.mrb[0].mxu0
        %v5769 = vpop.f32.mrb[0].mxu0
        %v5770 = vadd.f32 0.0, %v5769
        %v5771 = vpop.f32.mrb[0].mxu0
        %5772 = vmatprep.mubr.bf16.mxu0 0
        %5773 = vmatmul.mubr.bf16.gmra.mrb[0].mxu0 %v5646
        %v5774 = vpop.f32.mrb[0].mxu0
        %v5775 = vadd.f32 0.0, %v5774
        %v5776 = vpop.f32.mrb[0].mxu0
        %v5777 = vpop.f32.mrb[0].mxu0
        %v5778 = vadd.f32 0.0, %v5777
        %v5779 = vpop.f32.mrb[0].mxu0
        %5780 = vmatprep.mubr.bf16.mxu0 0
        %5781 = vmatmul.mubr.bf16.gmra.mrb[0].mxu0 %v5649
        %v5782 = vpop.f32.mrb[0].mxu0
        %v5783 = vadd.f32 0.0, %v5782
        %v5784 = vpop.f32.mrb[0].mxu0
        %v5785 = vpop.f32.mrb[0].mxu0
        %v5786 = vadd.f32 0.0, %v5785
        %v5787 = vpop.f32.mrb[0].mxu0
        %5788 = vdwg.mxu0
        %v5789 = vadd.f32 %v5456, %v5686
        %v5790 = vadd.f32 %v5458, %v5688
        %v5791 = vadd.f32 %v5529, %v5759
        %v5792 = vadd.f32 %v5460, %v5690
        %v5793 = vadd.f32 %v5462, %v5692
        %v5794 = vadd.f32 %v5532, %v5762
        %v5795 = vadd.f32 %v5466, %v5696
        %v5796 = vadd.f32 %v5468, %v5698
        %v5797 = vadd.f32 %v5537, %v5767
        %v5798 = vadd.f32 %v5470, %v5700
        %v5799 = vadd.f32 %v5472, %v5702
        %v5800 = vadd.f32 %v5540, %v5770
        %v5801 = vadd.f32 %v5476, %v5706
        %v5802 = vadd.f32 %v5478, %v5708
        %v5803 = vadd.f32 %v5545, %v5775
        %v5804 = vadd.f32 %v5480, %v5710
        %v5805 = vadd.f32 %v5482, %v5712
        %v5806 = vadd.f32 %v5548, %v5778
        %v5807 = vadd.f32 %v5486, %v5716
        %v5808 = vadd.f32 %v5488, %v5718
        %v5809 = vadd.f32 %v5553, %v5783
        %v5810 = vadd.f32 %v5490, %v5720
        %v5811 = vadd.f32 %v5492, %v5722
        %v5812 = vadd.f32 %v5556, %v5786
        %v5813 = vld [vmem:[%s10] sm:$0x7]
        %v5815 = vlaneseq
        %v5816 = vshrl.u32 %v5815, 7
        %v5817 = vsub.s32 0, %v5816
        %v5818 = vrot.slane %v5813, %v5817
        %v5819 = vlaneseq
        %v5820 = vshrl.u32 %v5819, 7
        %v5821 = vsub.s32 1, %v5820
        %v5822 = vrot.slane %v5813, %v5821
        %v5823 = vlaneseq
        %v5824 = vshrl.u32 %v5823, 7
        %v5825 = vsub.s32 2, %v5824
        %v5826 = vrot.slane %v5813, %v5825
        %v5830 = vadd.f32 %v5789, %v5818
        %v5831 = vadd.f32 %v5790, %v5822
        %v5832 = vadd.f32 %v5791, %v5826
        %v5833 = vadd.f32 %v5792, %v5818
        %v5834 = vadd.f32 %v5793, %v5822
        %v5835 = vadd.f32 %v5794, %v5826
        %v5836 = vadd.f32 %v5795, %v5818
        %v5837 = vadd.f32 %v5796, %v5822
        %v5838 = vadd.f32 %v5797, %v5826
        %v5839 = vadd.f32 %v5798, %v5818
        %v5840 = vadd.f32 %v5799, %v5822
        %v5841 = vadd.f32 %v5800, %v5826
        %v5842 = vadd.f32 %v5801, %v5818
        %v5843 = vadd.f32 %v5802, %v5822
        %v5844 = vadd.f32 %v5803, %v5826
        %v5845 = vadd.f32 %v5804, %v5818
        %v5846 = vadd.f32 %v5805, %v5822
        %v5847 = vadd.f32 %v5806, %v5826
        %v5848 = vadd.f32 %v5807, %v5818
        %v5849 = vadd.f32 %v5808, %v5822
        %v5850 = vadd.f32 %v5809, %v5826
        %v5851 = vadd.f32 %v5810, %v5818
        %v5852 = vadd.f32 %v5811, %v5822
        %v5853 = vadd.f32 %v5812, %v5826
        %v5854 = vadd.f32 %v5830, %v386
        %v5855 = vadd.f32 %v5831, %v387
        %v5856 = vadd.f32 %v5832, %v388
        %v5857 = vadd.f32 %v5833, %v389
        %v5858 = vadd.f32 %v5834, %v390
        %v5859 = vadd.f32 %v5835, %v391
        %v5860 = vadd.f32 %v5836, %v392
        %v5861 = vadd.f32 %v5837, %v393
        %v5862 = vadd.f32 %v5838, %v394
        %v5863 = vadd.f32 %v5839, %v395
        %v5864 = vadd.f32 %v5840, %v396
        %v5865 = vadd.f32 %v5841, %v397
        %v5866 = vadd.f32 %v5842, %v398
        %v5867 = vadd.f32 %v5843, %v399
        %v5868 = vadd.f32 %v5844, %v400
        %v5869 = vadd.f32 %v5845, %v401
        %v5870 = vadd.f32 %v5846, %v402
        %v5871 = vadd.f32 %v5847, %v403
        %v5872 = vadd.f32 %v5848, %v404
        %v5873 = vadd.f32 %v5849, %v405
        %v5874 = vadd.f32 %v5850, %v406
        %v5875 = vadd.f32 %v5851, %v407
        %v5876 = vadd.f32 %v5852, %v408
        %v5877 = vadd.f32 %v5853, %v409
        %v5878 = vmax.f32 %v5854, 0.0
        %v5879 = vmax.f32 %v5855, 0.0
        %v5880 = vmax.f32 %v5856, 0.0
        %v5881 = vmax.f32 %v5857, 0.0
        %v5882 = vmax.f32 %v5858, 0.0
        %v5883 = vmax.f32 %v5859, 0.0
        %v5884 = vmax.f32 %v5860, 0.0
        %v5885 = vmax.f32 %v5861, 0.0
        %v5886 = vmax.f32 %v5862, 0.0
        %v5887 = vmax.f32 %v5863, 0.0
        %v5888 = vmax.f32 %v5864, 0.0
        %v5889 = vmax.f32 %v5865, 0.0
        %v5890 = vmax.f32 %v5866, 0.0
        %v5891 = vmax.f32 %v5867, 0.0
        %v5892 = vmax.f32 %v5868, 0.0
        %v5893 = vmax.f32 %v5869, 0.0
        %v5894 = vmax.f32 %v5870, 0.0
        %v5895 = vmax.f32 %v5871, 0.0
        %v5896 = vmax.f32 %v5872, 0.0
        %v5897 = vmax.f32 %v5873, 0.0
        %v5898 = vmax.f32 %v5874, 0.0
        %v5899 = vmax.f32 %v5875, 0.0
        %v5900 = vmax.f32 %v5876, 0.0
        %v5901 = vmax.f32 %v5877, 0.0
        %5902 = vst [vmem:[%s379] sm:$0xff] %v5878
        %5903 = vst [vmem:[%s379 + $0x8] sm:$0xff] %v5879
        %5904 = vst.msk [vmem:[%s379 + $0x10] sm:$0xff] %vm617, %v5880
        %5905 = vst [vmem:[%s379 + $0x18] sm:$0xff] %v5881
        %5906 = vst [vmem:[%s379 + $0x20] sm:$0xff] %v5882
        %5907 = vst.msk [vmem:[%s379 + $0x28] sm:$0xff] %vm617, %v5883
        %5908 = vst [vmem:[%s379 + $0x30] sm:$0xff] %v5884
        %5909 = vst [vmem:[%s379 + $0x38] sm:$0xff] %v5885
        %5910 = vst.msk [vmem:[%s379 + $0x40] sm:$0xff] %vm617, %v5886
        %5911 = vst [vmem:[%s379 + $0x48] sm:$0xff] %v5887
        %5912 = vst [vmem:[%s379 + $0x50] sm:$0xff] %v5888
        %5913 = vst.msk [vmem:[%s379 + $0x58] sm:$0xff] %vm617, %v5889
        %5914 = vst [vmem:[%s379 + $0x60] sm:$0xff] %v5890
        %5915 = vst [vmem:[%s379 + $0x68] sm:$0xff] %v5891
        %5916 = vst.msk [vmem:[%s379 + $0x70] sm:$0xff] %vm617, %v5892
        %5917 = vst [vmem:[%s379 + $0x78] sm:$0xff] %v5893
        %5918 = vst [vmem:[%s379 + $0x80] sm:$0xff] %v5894
        %5919 = vst.msk [vmem:[%s379 + $0x88] sm:$0xff] %vm617, %v5895
        %5920 = vst [vmem:[%s379 + $0x90] sm:$0xff] %v5896
        %5921 = vst [vmem:[%s379 + $0x98] sm:$0xff] %v5897
        %5922 = vst.msk [vmem:[%s379 + $0xa0] sm:$0xff] %vm617, %v5898
        %5923 = vst [vmem:[%s379 + $0xa8] sm:$0xff] %v5899
        %5924 = vst [vmem:[%s379 + $0xb0] sm:$0xff] %v5900
        %5925 = vst.msk [vmem:[%s379 + $0xb8] sm:$0xff] %vm617, %v5901
        %s5926 = sand.u32 %s269, 1
        %s5927 = scalar_lea.sflag [#allocation4], %s5926
        %s5928 = sand.u32 %s269, 1
        %s5929 = smul.addr %s5928, 192
        %s5930 = scalar_lea.vmem [#allocation3], %s5929
        // Predicated region
        $region65: #{block35_forward.1} parent=63 // pred_check
          %p5931 = pneg %p279
        $region66: #{block35_forward.1} parent=63 // pred_check_branch
          %5933 = sbr.rel (%p5931) target = $region68
        $region67: #{block35_forward.1} parent=63 // pred_region
          %s5935 = ssub.s32 3072, 3072
          %5936 = vsyncadd %s5927, %s5935
          %s5937 = smul.addr %s25, 24
          %s5938 = smul.addr %s5937, 128
          %s5939 = scalar_lea.hbm %s11, %s5938
          %s5940 = sshll.u32 %s5930, 4
          %s5941 = int_to_ptr.vmem [resolvable:$true] %s5940
          %5946 = dma.vmem_to_hbm [thread:$0]  %s5941, 3072, %s5939, %s5927, 384, 384, 24
        $region68: #{block35_forward.1} parent=63 // pred_fallthru
          _
      $region64: #{block35_forward.1} parent=5 // pred_fallthru
        _
      %p5947 = scmp.le.s32.totalorder 2, %s20
      // Predicated region
      $region69: #{block35_forward.1} parent=5 // pred_check
        %p5948 = pneg %p5947
      $region70: #{block35_forward.1} parent=5 // pred_check_branch
        %5950 = sbr.rel (%p5948) target = $region72
      $region71: #{block35_forward.1} parent=5 // pred_region
        %s5951 = ssub.s32 %s20, 2
        // Predicated region
        $region73: #{block35_forward.1} parent=71 // pred_check
          %p5952 = pneg %p285
        $region74: #{block35_forward.1} parent=71 // pred_check_branch
          %5954 = sbr.rel (%p5952) target = $region76
        $region75: #{block35_forward.1} parent=71 // pred_region
          %s5955 = sand.u32 %s270, 1
          %s5956 = scalar_lea.sflag [#allocation4], %s5955
          %s5957 = sand.u32 %s270, 1
          %s5958 = smul.addr %s5957, 192
          %s5959 = scalar_lea.vmem [#allocation3], %s5958
          %5960 = dma.done %s5956, 3072
        $region76: #{block35_forward.1} parent=71 // pred_fallthru
          _
      $region72: #{block35_forward.1} parent=5 // pred_fallthru
        _
    $region6: #{block35_forward.1} parent=1 // loop_footer
      %s24 = sadd.s32 1, %s20
    $region7: #{block35_forward.1} parent=1 // loop_footer_branch
      %19 = sbr.rel target = $region3
    $region8: #{block35_forward.1} parent=1 // loop_exit
      _
    %5961 = vsyncpa [#allocation4], 1
    %s5962 = scalar_lea.sflag [#allocation4], 1
    %5963 = vsyncpa %s5962, 1

</llo_original>
